<compile_context>
chip_gen: v7x
topology: tpu7x:2x2x1
jax: 0.10.0
libtpu: 0.0.40
codegen_flags: <defaults>
</compile_context>

<pallas_src>
import functools

import jax
import jax.numpy as jnp
from jax.experimental import pallas as pl
from jax.experimental.pallas import tpu as pltpu


def _round_up(x, m):
    return (x + m - 1) // m * m


def _tpu_kind():
    try:
        dev = jax.devices()[0]
        if dev.platform == "tpu":
            return dev.device_kind.lower()
    except Exception:
        pass
    return ""


_KIND = _tpu_kind()
_IS_V7 = "v7" in _KIND
_BIG_VMEM = ("v5" in _KIND) or ("v6" in _KIND)          # 128 MiB VMEM chips
_VMEM_LIMIT = (96 if _BIG_VMEM else 48) * 1024 * 1024   # v7x: 64 MiB/TC


def _cparams(semantics):
    return pltpu.CompilerParams(dimension_semantics=semantics,
                                vmem_limit_bytes=_VMEM_LIMIT)


# ----------------------------- Pallas kernels -----------------------------

def _mm_bias_act_kernel(x_ref, w_ref, b_ref, o_ref, *, relu):
    # Single full-K MXU matmul: y = x @ w + bias (+ ReLU), f32 accumulation.
    y = jnp.dot(x_ref[...], w_ref[...],
                preferred_element_type=jnp.float32) + b_ref[...]
    if relu:
        y = jnp.maximum(y, 0.0)
    o_ref[...] = y.astype(o_ref.dtype)


def _mm_bias_res_relu_kernel(x_ref, w_ref, b_ref, r_ref, o_ref):
    # Last conv of a bottleneck: y = x @ w + bias + residual, then ReLU.
    y = (jnp.dot(x_ref[...], w_ref[...], preferred_element_type=jnp.float32)
         + b_ref[...] + r_ref[...].astype(jnp.float32))
    o_ref[...] = jnp.maximum(y, 0.0).astype(o_ref.dtype)


def _conv3x3_s1_kernel(x_ref, w_ref, b_ref, o_ref, *, wp):
    # Direct 3x3 stride-1 conv for one image.  x_ref holds the zero-padded
    # image flattened to ((H+3)*(W+2), C); tap (di, dj) is the same slab
    # shifted by di*(W+2)+dj rows, so the 9 taps are 9 shifted VMEM slices
    # accumulated into a single f32 accumulator (no HBM im2col).  The two
    # garbage columns per row are sliced off by the wrapper.
    m = o_ref.shape[1]
    acc = jnp.dot(x_ref[0, 0:m, :], w_ref[0],
                  preferred_element_type=jnp.float32)
    for t in range(1, 9):
        off = (t // 3) * wp + (t % 3)
        acc = acc + jnp.dot(x_ref[0, off:off + m, :], w_ref[t],
                            preferred_element_type=jnp.float32)
    y = jnp.maximum(acc + b_ref[...], 0.0)
    o_ref[0] = y.astype(o_ref.dtype)


def _maxpool_dense_kernel(x_ref, o_ref, *, wp):
    # Dense 3x3 max over the (-inf)-padded stem output of one image
    # (flattened rows); the stride-2 subsampling happens in the wrapper.
    m = o_ref.shape[1]
    r = x_ref[0, 0:m, :]
    for t in range(1, 9):
        off = (t // 3) * wp + (t % 3)
        r = jnp.maximum(r, x_ref[0, off:off + m, :])
    o_ref[0] = r


def _head_kernel(x_ref, w_ref, b_ref, o_ref, *, inv_hw):
    # x: (N, HW, C).  GAP + GMP over spatial (XLU axis reductions), then the
    # embedding Linear.  Matches the PyTorch spec: x = max_x + avg_x.
    x = x_ref[...].astype(jnp.float32)
    pooled = jnp.max(x, axis=1) + jnp.sum(x, axis=1) * inv_hw
    o_ref[...] = (jnp.dot(pooled.astype(jnp.bfloat16), w_ref[...],
                          preferred_element_type=jnp.float32) + b_ref[...])


# --------------------------- pallas_call wrappers --------------------------

def _pick_tiles(m, np_):
    tn = 512 if np_ % 512 == 0 else (256 if np_ % 256 == 0 else 128)
    if m >= 512 and _BIG_VMEM:
        tm = 512
    elif m >= 256:
        tm = 256
    else:
        tm = _round_up(max(m, 16), 16)     # bf16 native (16,128) tiling
    mp = _round_up(m, tm)
    if _IS_V7:
        # keep both TensorCores busy: guarantee >= 2 parallel output blocks
        while (mp // tm) * (np_ // tn) < 2 and tn > 128:
            tn //= 2
        if (mp // tm) * (np_ // tn) < 2 and mp >= 32:
            tm = mp // 2
    return tm, mp, tn


def _matmul_bias_act(cols, w, bias, *, relu, res=None, out_dtype=jnp.bfloat16):
    """(x @ w) + bias [+ res] [ReLU].  Full K in one block; f32 accumulate."""
    m, k = cols.shape
    n = w.shape[1]

    # N: parameters are built lane-padded, so normally no runtime pad.
    np_ = _round_up(n, 128)
    if np_ != n:
        w = jnp.pad(w, ((0, 0), (0, np_ - n)))
        bias = jnp.pad(bias, ((0, 0), (0, np_ - n)))
        if res is not None:
            res = jnp.pad(res, ((0, 0), (0, np_ - n)))

    tm, mp, tn = _pick_tiles(m, np_)
    if mp != m:
        cols = jnp.pad(cols, ((0, mp - m), (0, 0)))
        if res is not None:
            res = jnp.pad(res, ((0, mp - m), (0, 0)))

    grid = (mp // tm, np_ // tn)
    in_specs = [
        pl.BlockSpec((tm, k), lambda i, j: (i, 0)),    # full-K block (K<=4608)
        pl.BlockSpec((k, tn), lambda i, j: (0, j)),
        pl.BlockSpec((1, tn), lambda i, j: (0, j)),
    ]
    if res is None:
        kernel = functools.partial(_mm_bias_act_kernel, relu=relu)
        args = (cols, w, bias)
    else:
        kernel = _mm_bias_res_relu_kernel
        in_specs = in_specs + [pl.BlockSpec((tm, tn), lambda i, j: (i, j))]
        args = (cols, w, bias, res)

    out = pl.pallas_call(
        kernel,
        out_shape=jax.ShapeDtypeStruct((mp, np_), out_dtype),
        grid=grid,
        in_specs=in_specs,
        out_specs=pl.BlockSpec((tm, tn), lambda i, j: (i, j)),
        compiler_params=_cparams(("parallel", "parallel")),
    )(*args)

    if mp != m:
        out = out[:m]
    if np_ != n:
        out = out[:, :n]
    return out


def _im2col(x, kh, kw, stride, pad):
    # Only used for the 7x7 stem and the 3 stride-2 3x3 convs.
    n, h, w, c = x.shape
    if pad:
        x = jnp.pad(x, ((0, 0), (pad, pad), (pad, pad), (0, 0)))
    hp, wp = h + 2 * pad, w + 2 * pad
    ho = (hp - kh) // stride + 1
    wo = (wp - kw) // stride + 1
    taps = []
    for i in range(kh):
        for j in range(kw):
            taps.append(x[:, i:i + stride * (ho - 1) + 1:stride,
                          j:j + stride * (wo - 1) + 1:stride, :])
    patches = jnp.stack(taps, axis=3)  # (N, Ho, Wo, kh*kw, C)
    return patches.reshape(n * ho * wo, kh * kw * c), ho, wo


def _to_cols(x, kh, kw, stride, pad):
    n = x.shape[0]
    if kh == 1 and kw == 1 and pad == 0:
        if stride > 1:
            # TODO(synk): fold the stride into the kernel's index_map instead.
            x = x[:, ::stride, ::stride, :]
        _, h, w, c = x.shape
        return x.reshape(n * h * w, c), n, h, w
    cols, ho, wo = _im2col(x, kh, kw, stride, pad)
    return cols, n, ho, wo


def conv_bn(x, w, bias, *, kh, kw, stride, pad, relu):
    cols, n, ho, wo = _to_cols(x, kh, kw, stride, pad)
    y = _matmul_bias_act(cols, w, bias, relu=relu)
    return y.reshape(n, ho, wo, w.shape[1])


def conv_bn_add_relu(x, w, bias, res, *, kh, kw, stride, pad):
    cols, n, ho, wo = _to_cols(x, kh, kw, stride, pad)
    cout = w.shape[1]
    y = _matmul_bias_act(cols, w, bias, relu=True,
                         res=res.reshape(n * ho * wo, cout))
    return y.reshape(n, ho, wo, cout)


def conv3x3_bn_relu_s1(x, w2d, bias):
    """Direct 3x3 / stride 1 / pad 1 conv + BN(bias) + ReLU, no im2col."""
    n, h, wdt, c = x.shape
    cout = w2d.shape[1]
    w3 = w2d.reshape(9, c, cout)
    wp = wdt + 2
    # zero-pad: 1 row top, 2 bottom (tap overrun guard), 1 col left/right
    xp = jnp.pad(x, ((0, 0), (1, 2), (1, 1), (0, 0)))
    l = (h + 3) * wp
    xf = xp.reshape(n, l, c)
    m = h * wp

    tn = 256 if cout % 256 == 0 else cout
    grid = (cout // tn, n)  # batch innermost -> weight block stays resident
    out = pl.pallas_call(
        functools.partial(_conv3x3_s1_kernel, wp=wp),
        out_shape=jax.ShapeDtypeStruct((n, m, cout), jnp.bfloat16),
        grid=grid,
        in_specs=[pl.BlockSpec((1, l, c), lambda j, i: (i, 0, 0)),
                  pl.BlockSpec((9, c, tn), lambda j, i: (0, 0, j)),
                  pl.BlockSpec((1, tn), lambda j, i: (0, j))],
        out_specs=pl.BlockSpec((1, m, tn), lambda j, i: (i, 0, j)),
        compiler_params=_cparams(("parallel", "parallel")),
    )(xf, w3, bias)
    out = out.reshape(n, h, wp, cout)
    return out[:, :, :wdt, :]


def maxpool_3x3_s2_p1(x):
    # MaxPool2d(kernel_size=3, stride=2, padding=1); padding acts as -inf.
    n, h, w, c = x.shape
    wp = w + 2
    xp = jnp.pad(x, ((0, 0), (1, 2), (1, 1), (0, 0)),
                 constant_values=-jnp.inf)
    l = (h + 3) * wp
    xf = xp.reshape(n, l, c)
    m = h * wp
    dense = pl.pallas_call(
        functools.partial(_maxpool_dense_kernel, wp=wp),
        out_shape=jax.ShapeDtypeStruct((n, m, c), x.dtype),
        grid=(n,),
        in_specs=[pl.BlockSpec((1, l, c), lambda i: (i, 0, 0))],
        out_specs=pl.BlockSpec((1, m, c), lambda i: (i, 0, 0)),
        compiler_params=_cparams(("parallel",)),
    )(xf)
    dense = dense.reshape(n, h, wp, c)
    return dense[:, 0:h:2, 0:w:2, :]


@jax.jit
def gap_gmp_embedding(x, ew, eb):
    # x: (N, H, W, C) bf16; fused AdaptiveAvgPool2d(1)+AdaptiveMaxPool2d(1)+Linear.
    n, h, w, c = x.shape
    hw = h * w
    xr = x.reshape(n, hw, c)
    e = ew.shape[1]
    return pl.pallas_call(
        functools.partial(_head_kernel, inv_hw=1.0 / hw),
        out_shape=jax.ShapeDtypeStruct((n, e), jnp.float32),
        grid=(1,),
        in_specs=[pl.BlockSpec((n, hw, c), lambda i: (0, 0, 0)),
                  pl.BlockSpec((c, e), lambda i: (0, 0)),
                  pl.BlockSpec((1, e), lambda i: (0, 0))],
        out_specs=pl.BlockSpec((n, e), lambda i: (0, 0)),
        compiler_params=_cparams(("arbitrary",)),
    )(xr, ew, eb)


# ------------------------------- parameters --------------------------------

class KeyGen:
    def __init__(self, seed=0):
        self.key = jax.random.PRNGKey(seed)
        self.i = 0

    def next(self):
        self.i += 1
        return jax.random.fold_in(self.key, self.i)


def conv_bn_params(kg, kh, kw, cin, cin_pad, cout):
    """Conv weight stored as (kh*kw*cin_pad, cout_pad) matching the tap-major
    patch layout; BatchNorm (eval mode) scale folded into the weight, bias kept
    for the kernel epilogue.  Lane padding (128) with zero rows/cols so padded
    channels stay exactly zero through the network."""
    cout_pad = _round_up(cout, 128)
    fan_in = kh * kw * cin
    w = jax.random.normal(kg.next(), (kh * kw, cin_pad, cout_pad),
                          jnp.float32) * jnp.sqrt(2.0 / fan_in)
    in_mask = (jnp.arange(cin_pad) < cin).astype(jnp.float32)[None, :, None]
    out_mask = (jnp.arange(cout_pad) < cout).astype(jnp.float32)[None, None, :]
    w = w * in_mask * out_mask
    scale = 1.0 + 0.1 * jax.random.normal(kg.next(), (cout_pad,), jnp.float32)
    bias = 0.1 * jax.random.normal(kg.next(), (cout_pad,), jnp.float32)
    w = (w * scale[None, None, :]).reshape(kh * kw * cin_pad, cout_pad)  # fold BN scale
    bias = (bias * out_mask[0, 0]).reshape(1, cout_pad)
    return (w.astype(jnp.bfloat16), bias)


def make_resnet101_params(kg, embedding_size=64, attention_heads=4):
    # TODO(synk): pretrained ImageNet weights are not loadable here; synthetic
    # deterministic init is used instead (real checkpoints would fold
    # gamma/sqrt(var+eps) into W and beta - mean*gamma/sqrt(var+eps) into bias).
    expansion = 4
    params = {"conv1": conv_bn_params(kg, 7, 7, 3, 3, 64)}  # stem out 64 -> padded 128
    in_logical, in_pad = 64, 128
    layers = []
    for planes, blocks, stride in [(64, 3, 1), (128, 4, 2), (256, 23, 2), (512, 3, 2)]:
        out_c = planes * expansion
        planes_pad = _round_up(planes, 128)
        out_pad = _round_up(out_c, 128)
        blocks_p = []
        for bi in range(blocks):
            s = stride if bi == 0 else 1
            bp = {
                "conv1": conv_bn_params(kg, 1, 1, in_logical, in_pad, planes),
                "conv2": conv_bn_params(kg, 3, 3, planes, planes_pad, planes),
                "conv3": conv_bn_params(kg, 1, 1, planes, planes_pad, out_c),
            }
            ds = None
            if bi == 0 and (s != 1 or in_logical != out_c):
                ds = conv_bn_params(kg, 1, 1, in_logical, in_pad, out_c)
            blocks_p.append((s, bp, ds))
            in_logical, in_pad = out_c, out_pad
        layers.append(blocks_p)
    params["layers"] = layers
    num_ftrs = 512 * expansion
    emb_out = embedding_size * attention_heads
    # kaiming_normal_(mode='fan_out') on Linear(num_ftrs, emb_out), bias = 0
    ew = jax.random.normal(kg.next(), (num_ftrs, emb_out),
                           jnp.float32) * jnp.sqrt(2.0 / emb_out)
    eb = jnp.zeros((1, emb_out), jnp.float32)
    params["embedding"] = (ew.astype(jnp.bfloat16), eb)
    return params


# -------------------------------- forward ----------------------------------

@jax.jit
def stem_forward(x_nchw, w, bias):
    x = jnp.transpose(x_nchw, (0, 2, 3, 1)).astype(jnp.bfloat16)  # NCHW -> NHWC bf16
    x = conv_bn(x, w, bias, kh=7, kw=7, stride=2, pad=3, relu=True)
    return maxpool_3x3_s2_p1(x)


# TODO(synk): fuse the whole bottleneck into one pallas_call (emit_pipeline)
# to keep the intermediate activations resident in VMEM at small batch sizes.
@functools.partial(jax.jit, static_argnames=("stride", "has_ds"))
def bottleneck_forward(x, c1, c2, c3, ds, *, stride, has_ds):
    out = conv_bn(x, *c1, kh=1, kw=1, stride=1, pad=0, relu=True)
    if stride == 1:
        out = conv3x3_bn_relu_s1(out, *c2)          # direct conv, no im2col
    else:
        out = conv_bn(out, *c2, kh=3, kw=3, stride=stride, pad=1, relu=True)
    if has_ds:
        identity = conv_bn(x, *ds, kh=1, kw=1, stride=stride, pad=0, relu=False)
    else:
        identity = x
    return conv_bn_add_relu(out, *c3, identity, kh=1, kw=1, stride=1, pad=0)


def resnet101_forward(params, x_nchw):
    x = stem_forward(x_nchw, *params["conv1"])
    for layer in params["layers"]:
        for stride, bp, ds in layer:
            x = bottleneck_forward(x, bp["conv1"], bp["conv2"], bp["conv3"], ds,
                                   stride=stride, has_ds=ds is not None)
    # gap + gmp (summed, per the spec) + flatten + embedding; attention /
    # classifier are nn.Identity.
    return gap_gmp_embedding(x, *params["embedding"])


if __name__ == "__main__":
    embedding_size = 64
    attention_heads = 4
    batch = 2

    x = jax.random.normal(jax.random.PRNGKey(0), (batch, 3, 64, 64), jnp.float32)
    params = make_resnet101_params(KeyGen(0), embedding_size=embedding_size,
                                   attention_heads=attention_heads)

    out = resnet101_forward(params, x)
    out = jax.block_until_ready(out)
    assert out.shape == (batch, embedding_size * attention_heads), out.shape
    assert bool(jnp.all(jnp.isfinite(out)))
    print("KERNEL_OK")
</pallas_src>

<mosaic_0001>
module attributes {stable_mosaic.version = 11 : i64} {
  func.func @_mm_bias_act_kernel(%arg0: i32, %arg1: i32, %arg2: memref<256x147xbf16, #tpu.memory_space<vmem>>, %arg3: memref<147x128xbf16, #tpu.memory_space<vmem>>, %arg4: memref<1x128xf32, #tpu.memory_space<vmem>>, %arg5: memref<256x128xbf16, #tpu.memory_space<vmem>>) attributes {dimension_semantics = [#tpu.dimension_semantics<parallel>, #tpu.dimension_semantics<parallel>], iteration_bounds = array<i64: 8, 1>, scalar_prefetch = 0 : i64, scratch_operands = 0 : i64, tpu.core_type = #tpu.core_type<tc>, window_params = [{transform_indices = @transform_0, window_bounds = array<i64: 256, 147>}, {transform_indices = @transform_1, window_bounds = array<i64: 147, 128>}, {transform_indices = @transform_2, window_bounds = array<i64: 1, 128>}, {transform_indices = @transform_3, window_bounds = array<i64: 256, 128>}]} {
    %c0 = arith.constant 0 : index
    %c0_0 = arith.constant 0 : index
    %0 = vector.load %arg2[%c0, %c0_0] : memref<256x147xbf16, #tpu.memory_space<vmem>>, vector<256x147xbf16>
    %c0_1 = arith.constant 0 : index
    %c0_2 = arith.constant 0 : index
    %1 = vector.load %arg3[%c0_1, %c0_2] : memref<147x128xbf16, #tpu.memory_space<vmem>>, vector<147x128xbf16>
    %cst = arith.constant dense<0.000000e+00> : vector<256x128xf32>
    %2 = tpu.matmul %0, %1, %cst {dimension_numbers = #tpu.dot_dimension_numbers<[1], [0], [0], [1], [0, 0, 1, 1], [], []>} : vector<256x147xbf16>, vector<147x128xbf16>, vector<256x128xf32> -> vector<256x128xf32>
    %c0_3 = arith.constant 0 : index
    %c0_4 = arith.constant 0 : index
    %3 = vector.load %arg4[%c0_3, %c0_4] : memref<1x128xf32, #tpu.memory_space<vmem>>, vector<1x128xf32>
    %4 = vector.broadcast %3 : vector<1x128xf32> to vector<256x128xf32>
    %5 = arith.addf %2, %4 : vector<256x128xf32>
    %cst_5 = arith.constant 0.000000e+00 : f32
    %6 = vector.broadcast %cst_5 : f32 to vector<256x128xf32>
    %7 = arith.maximumf %5, %6 : vector<256x128xf32>
    %8 = arith.truncf %7 : vector<256x128xf32> to vector<256x128xbf16>
    %c0_6 = arith.constant 0 : index
    %c0_7 = arith.constant 0 : index
    %9 = vector.load %arg5[%c0_6, %c0_7] : memref<256x128xbf16, #tpu.memory_space<vmem>>, vector<256x128xbf16>
    tpu.vector_store %arg5[%c0_6, %c0_7], %8 {strides = array<i32>} : memref<256x128xbf16, #tpu.memory_space<vmem>>, vector<256x128xbf16>,
    return
  }
  func.func @transform_0(%arg0: i32, %arg1: i32) -> (i32, i32) {
    %c0_i32 = arith.constant 0 : i32
    %c0_i32_0 = arith.constant 0 : i32
    return %arg0, %c0_i32 : i32, i32
  }
  func.func @transform_1(%arg0: i32, %arg1: i32) -> (i32, i32) {
    %c0_i32 = arith.constant 0 : i32
    %c0_i32_0 = arith.constant 0 : i32
    return %c0_i32, %arg1 : i32, i32
  }
  func.func @transform_2(%arg0: i32, %arg1: i32) -> (i32, i32) {
    %c0_i32 = arith.constant 0 : i32
    %c0_i32_0 = arith.constant 0 : i32
    return %c0_i32, %arg1 : i32, i32
  }
  func.func @transform_3(%arg0: i32, %arg1: i32) -> (i32, i32) {
    %c0_i32 = arith.constant 0 : i32
    return %arg0, %arg1 : i32, i32
  }
}

module attributes {stable_mosaic.version = 11 : i64} {
  func.func @_maxpool_dense_kernel(%arg0: i32, %arg1: memref<1x1190x128xbf16, #tpu.memory_space<vmem>>, %arg2: memref<1x1088x128xbf16, #tpu.memory_space<vmem>>) attributes {dimension_semantics = [#tpu.dimension_semantics<parallel>], iteration_bounds = array<i64: 2>, scalar_prefetch = 0 : i64, scratch_operands = 0 : i64, tpu.core_type = #tpu.core_type<tc>, window_params = [{transform_indices = @transform_0, window_bounds = array<i64: 1, 1190, 128>}, {transform_indices = @transform_1, window_bounds = array<i64: 1, 1088, 128>}]} {
    %c0 = arith.constant 0 : index
    %c0_0 = arith.constant 0 : index
    %c0_1 = arith.constant 0 : index
    %0 = vector.load %arg1[%c0, %c0_0, %c0_1] : memref<1x1190x128xbf16, #tpu.memory_space<vmem>>, vector<1x1088x128xbf16>
    %1 = vector.shape_cast %0 : vector<1x1088x128xbf16> to vector<1088x128xbf16>
    %c0_2 = arith.constant 0 : index
    %c1 = arith.constant 1 : index
    %c0_3 = arith.constant 0 : index
    %2 = vector.load %arg1[%c0_2, %c1, %c0_3] : memref<1x1190x128xbf16, #tpu.memory_space<vmem>>, vector<1x1088x128xbf16>
    %3 = vector.shape_cast %2 : vector<1x1088x128xbf16> to vector<1088x128xbf16>
    %4 = arith.maximumf %1, %3 : vector<1088x128xbf16>
    %c0_4 = arith.constant 0 : index
    %c2 = arith.constant 2 : index
    %c0_5 = arith.constant 0 : index
    %5 = vector.load %arg1[%c0_4, %c2, %c0_5] : memref<1x1190x128xbf16, #tpu.memory_space<vmem>>, vector<1x1088x128xbf16>
    %6 = vector.shape_cast %5 : vector<1x1088x128xbf16> to vector<1088x128xbf16>
    %7 = arith.maximumf %4, %6 : vector<1088x128xbf16>
    %c0_6 = arith.constant 0 : index
    %c34 = arith.constant 34 : index
    %c0_7 = arith.constant 0 : index
    %8 = vector.load %arg1[%c0_6, %c34, %c0_7] : memref<1x1190x128xbf16, #tpu.memory_space<vmem>>, vector<1x1088x128xbf16>
    %9 = vector.shape_cast %8 : vector<1x1088x128xbf16> to vector<1088x128xbf16>
    %10 = arith.maximumf %7, %9 : vector<1088x128xbf16>
    %c0_8 = arith.constant 0 : index
    %c35 = arith.constant 35 : index
    %c0_9 = arith.constant 0 : index
    %11 = vector.load %arg1[%c0_8, %c35, %c0_9] : memref<1x1190x128xbf16, #tpu.memory_space<vmem>>, vector<1x1088x128xbf16>
    %12 = vector.shape_cast %11 : vector<1x1088x128xbf16> to vector<1088x128xbf16>
    %13 = arith.maximumf %10, %12 : vector<1088x128xbf16>
    %c0_10 = arith.constant 0 : index
    %c36 = arith.constant 36 : index
    %c0_11 = arith.constant 0 : index
    %14 = vector.load %arg1[%c0_10, %c36, %c0_11] : memref<1x1190x128xbf16, #tpu.memory_space<vmem>>, vector<1x1088x128xbf16>
    %15 = vector.shape_cast %14 : vector<1x1088x128xbf16> to vector<1088x128xbf16>
    %16 = arith.maximumf %13, %15 : vector<1088x128xbf16>
    %c0_12 = arith.constant 0 : index
    %c68 = arith.constant 68 : index
    %c0_13 = arith.constant 0 : index
    %17 = vector.load %arg1[%c0_12, %c68, %c0_13] : memref<1x1190x128xbf16, #tpu.memory_space<vmem>>, vector<1x1088x128xbf16>
    %18 = vector.shape_cast %17 : vector<1x1088x128xbf16> to vector<1088x128xbf16>
    %19 = arith.maximumf %16, %18 : vector<1088x128xbf16>
    %c0_14 = arith.constant 0 : index
    %c69 = arith.constant 69 : index
    %c0_15 = arith.constant 0 : index
    %20 = vector.load %arg1[%c0_14, %c69, %c0_15] : memref<1x1190x128xbf16, #tpu.memory_space<vmem>>, vector<1x1088x128xbf16>
    %21 = vector.shape_cast %20 : vector<1x1088x128xbf16> to vector<1088x128xbf16>
    %22 = arith.maximumf %19, %21 : vector<1088x128xbf16>
    %c0_16 = arith.constant 0 : index
    %c70 = arith.constant 70 : index
    %c0_17 = arith.constant 0 : index
    %23 = vector.load %arg1[%c0_16, %c70, %c0_17] : memref<1x1190x128xbf16, #tpu.memory_space<vmem>>, vector<1x1088x128xbf16>
    %24 = vector.shape_cast %23 : vector<1x1088x128xbf16> to vector<1088x128xbf16>
    %25 = arith.maximumf %22, %24 : vector<1088x128xbf16>
    %c0_18 = arith.constant 0 : index
    %c0_19 = arith.constant 0 : index
    %c0_20 = arith.constant 0 : index
    %26 = vector.load %arg2[%c0_18, %c0_19, %c0_20] : memref<1x1088x128xbf16, #tpu.memory_space<vmem>>, vector<1x1088x128xbf16>
    %27 = vector.shape_cast %26 : vector<1x1088x128xbf16> to vector<1088x128xbf16>
    %28 = vector.shape_cast %25 : vector<1088x128xbf16> to vector<1x1088x128xbf16>
    tpu.vector_store %arg2[%c0_18, %c0_19, %c0_20], %28 {strides = array<i32>} : memref<1x1088x128xbf16, #tpu.memory_space<vmem>>, vector<1x1088x128xbf16>,
    return
  }
  func.func @transform_0(%arg0: i32) -> (i32, i32, i32) {
    %c0_i32 = arith.constant 0 : i32
    %c0_i32_0 = arith.constant 0 : i32
    %c0_i32_1 = arith.constant 0 : i32
    return %arg0, %c0_i32, %c0_i32_0 : i32, i32, i32
  }
  func.func @transform_1(%arg0: i32) -> (i32, i32, i32) {
    %c0_i32 = arith.constant 0 : i32
    %c0_i32_0 = arith.constant 0 : i32
    %c0_i32_1 = arith.constant 0 : i32
    return %arg0, %c0_i32, %c0_i32_0 : i32, i32, i32
  }
}

</mosaic_0001>

<llo_original>
// kernel: stem_forward.2
$region0: #{stem_forward.2}
  #allocation0 [shape = 'u32[]', space=smem, size = 0x4, offset = 0x4, fixed_abs, tag = 'smem constant byte address 0x4 - core index']
  #allocation1 [shape = 'u32[144,128]{1,0:T(1,128)}', space=vmem, size = 0x12000, scoped, tag = 'internal scratch']
  %s0 = inlined_call_operand.vmem [shape: bf16[2048,147], index: 0, kind: input, shape index: {}]
  %s1 = inlined_call_operand.vmem [shape: bf16[147,128], index: 1, kind: input, shape index: {}]
  %s2 = inlined_call_operand.vmem [shape: f32[1,128], index: 2, kind: input, shape index: {}]
  %s3 = inlined_call_operand.vmem [shape: bf16[2048,128], index: 3, kind: output, shape index: {}]
  %s4 = sld [smem:[#allocation0]]
  $region45: #{stem_forward.2} parent=0
    _
  %s6 = ssub.s32 1, %s4
  %s7 = scalar_select 0, %s6, %s4
  loop: start=0, step=1, limit=10
  $region2: #{stem_forward.2} parent=0 // loop_pre_header
    _
  $region3: #{stem_forward.2} parent=0 // loop_header
    %s9 = sphi 0, %s13
    %p10 = scmp.ge.s32.totalorder %s9, 10
    %s16 = sphi 0, %s28
    %s17 = sphi 0, %s24
    %s18 = sphi 0, %s16
    %s19 = sphi 0, %s17
    %s20 = sphi 0, %s18
    %s21 = sphi 0, %s19
    %s31 = sphi 0, %s33
    %s34 = sphi 0, %s31
    %s35 = sphi 0, %s34
    %s51 = sphi 0, %s35
    %s57 = sphi 0, %s59
    %s60 = sphi 0, %s57
    %s61 = sphi 0, %s60
    %s77 = sphi 0, %s61
    %s83 = sphi 0, %s85
    %s86 = sphi 0, %s83
    %s87 = sphi 0, %s86
    %s103 = sphi 0, %s87
    %s111 = sphi 0, %s113
    %s114 = sphi 0, %s111
    %s115 = sphi 0, %s114
    %s131 = sphi 0, %s115
  $region4: #{stem_forward.2} parent=0 // loop_header_branch
    %12 = sbr.rel (%p10) target = $region8
  $region5: #{stem_forward.2} parent=0 // loop_body
    %s14 = ssub.s32 %s9, 1
    %s15 = ssub.s32 %s9, 2
    %s22 = sadd.s32 1, %s17
    %p23 = scmp.ge.s32.totalorder %s22, 1
    %s24 = scalar_select %p23, 0, %s22
    %s25 = sadd.s32 1, %s16
    %s26 = scalar_select %p23, %s25, %s16
    %p27 = scmp.ge.s32.totalorder %s26, 8
    %s28 = scalar_select %p27, 0, %s26
    %s29 = ssub.s32 %s16, %s28
    %p30 = scmp.eq.s32.totalorder %s29, 0
    %s32 = sadd.s32 %s31, 1
    %s33 = scalar_select %p30, %s31, %s32
    %p36 = pneg %p30
    %p37 = scmp.eq.s32.totalorder %s9, 7
    %p38 = por %p36, %p37
    %p39 = scmp.ne.s32.totalorder %s31, %s34
    %p40 = scmp.eq.s32.totalorder %s9, 0
    %p41 = por %p39, %p40
    %p42 = scmp.ne.s32.totalorder %s31, %s34
    %p43 = scmp.eq.s32.totalorder %s14, 7
    %p44 = por %p42, %p43
    %p45 = scmp.ne.s32.totalorder %s34, %s35
    %p46 = scmp.eq.s32.totalorder %s14, 0
    %p47 = por %p45, %p46
    %p48 = scmp.ne.s32.totalorder %s34, %s35
    %p49 = scmp.eq.s32.totalorder %s15, 7
    %p50 = por %p48, %p49
    %p52 = scmp.ne.s32.totalorder %s35, %s51
    %p53 = scmp.eq.s32.totalorder %s15, 0
    %p54 = por %p52, %p53
    %s55 = ssub.s32 %s17, %s24
    %p56 = scmp.eq.s32.totalorder %s55, 0
    %s58 = sadd.s32 %s57, 1
    %s59 = scalar_select %p56, %s57, %s58
    %p62 = pneg %p56
    %p63 = scmp.eq.s32.totalorder %s9, 7
    %p64 = por %p62, %p63
    %p65 = scmp.ne.s32.totalorder %s57, %s60
    %p66 = scmp.eq.s32.totalorder %s9, 0
    %p67 = por %p65, %p66
    %p68 = scmp.ne.s32.totalorder %s57, %s60
    %p69 = scmp.eq.s32.totalorder %s14, 7
    %p70 = por %p68, %p69
    %p71 = scmp.ne.s32.totalorder %s60, %s61
    %p72 = scmp.eq.s32.totalorder %s14, 0
    %p73 = por %p71, %p72
    %p74 = scmp.ne.s32.totalorder %s60, %s61
    %p75 = scmp.eq.s32.totalorder %s15, 7
    %p76 = por %p74, %p75
    %p78 = scmp.ne.s32.totalorder %s61, %s77
    %p79 = scmp.eq.s32.totalorder %s15, 0
    %p80 = por %p78, %p79
    %s81 = ssub.s32 %s17, %s24
    %p82 = scmp.eq.s32.totalorder %s81, 0
    %s84 = sadd.s32 %s83, 1
    %s85 = scalar_select %p82, %s83, %s84
    %p88 = pneg %p82
    %p89 = scmp.eq.s32.totalorder %s9, 7
    %p90 = por %p88, %p89
    %p91 = scmp.ne.s32.totalorder %s83, %s86
    %p92 = scmp.eq.s32.totalorder %s9, 0
    %p93 = por %p91, %p92
    %p94 = scmp.ne.s32.totalorder %s83, %s86
    %p95 = scmp.eq.s32.totalorder %s14, 7
    %p96 = por %p94, %p95
    %p97 = scmp.ne.s32.totalorder %s86, %s87
    %p98 = scmp.eq.s32.totalorder %s14, 0
    %p99 = por %p97, %p98
    %p100 = scmp.ne.s32.totalorder %s86, %s87
    %p101 = scmp.eq.s32.totalorder %s15, 7
    %p102 = por %p100, %p101
    %p104 = scmp.ne.s32.totalorder %s87, %s103
    %p105 = scmp.eq.s32.totalorder %s15, 0
    %p106 = por %p104, %p105
    %s107 = ssub.s32 %s16, %s28
    %s108 = ssub.s32 %s17, %s24
    %s109 = sor.u32 %s107, %s108
    %p110 = scmp.eq.s32.totalorder %s109, 0
    %s112 = sadd.s32 %s111, 1
    %s113 = scalar_select %p110, %s111, %s112
    %p116 = pneg %p110
    %p117 = scmp.eq.s32.totalorder %s9, 7
    %p118 = por %p116, %p117
    %p119 = scmp.ne.s32.totalorder %s111, %s114
    %p120 = scmp.eq.s32.totalorder %s9, 0
    %p121 = por %p119, %p120
    %p122 = scmp.ne.s32.totalorder %s111, %s114
    %p123 = scmp.eq.s32.totalorder %s14, 7
    %p124 = por %p122, %p123
    %p125 = scmp.ne.s32.totalorder %s114, %s115
    %p126 = scmp.eq.s32.totalorder %s14, 0
    %p127 = por %p125, %p126
    %p128 = scmp.ne.s32.totalorder %s114, %s115
    %p129 = scmp.eq.s32.totalorder %s15, 7
    %p130 = por %p128, %p129
    %p132 = scmp.ne.s32.totalorder %s115, %s131
    %p133 = scmp.eq.s32.totalorder %s15, 0
    %p134 = por %p132, %p133
    %p135 = scmp.le.s32.totalorder 1, %s9
    %p136 = scmp.lt.s32.totalorder %s9, 9
    %p137 = pnand %p135, %p136
    %p138 = pneg %p137
    // Predicated region
    $region9: #{stem_forward.2} parent=5 // pred_check
      _
    $region10: #{stem_forward.2} parent=5 // pred_check_branch
      %140 = sbr.rel (%p137) target = $region12
    $region11: #{stem_forward.2} parent=5 // pred_region
      %s141 = ssub.s32 %s9, 1
      // Predicated region
      $region13: #{stem_forward.2} parent=11 // pred_check
        %p142 = pneg %p73
      $region14: #{stem_forward.2} parent=11 // pred_check_branch
        %144 = sbr.rel (%p142) target = $region16
      $region15: #{stem_forward.2} parent=11 // pred_region
        %p145 = scmp.lt.s32.totalorder %s19, 0
        %s146 = scalar_select %p145, %s19, 0
        %s147 = smul.addr %s146, 4
        %s148 = scalar_lea.vmem %s1, %s147
      $region16: #{stem_forward.2} parent=11 // pred_fallthru
        _
      // Predicated region
      $region17: #{stem_forward.2} parent=11 // pred_check
        %p149 = pneg %p99
      $region18: #{stem_forward.2} parent=11 // pred_check_branch
        %151 = sbr.rel (%p149) target = $region20
      $region19: #{stem_forward.2} parent=11 // pred_region
        %p152 = scmp.lt.s32.totalorder %s19, 0
        %s153 = scalar_select %p152, %s19, 0
        %s154 = scalar_lea.vmem %s2, %s153
      $region20: #{stem_forward.2} parent=11 // pred_fallthru
        _
    $region12: #{stem_forward.2} parent=5 // pred_fallthru
      _
    %p155 = scmp.lt.s32.totalorder %s9, 8
    // Predicated region
    $region21: #{stem_forward.2} parent=5 // pred_check
      %p156 = pneg %p155
    $region22: #{stem_forward.2} parent=5 // pred_check_branch
      %158 = sbr.rel (%p156) target = $region24
    $region23: #{stem_forward.2} parent=5 // pred_region
      // Predicated region
      $region25: #{stem_forward.2} parent=23 // pred_check
        %p159 = pneg %p41
      $region26: #{stem_forward.2} parent=23 // pred_check_branch
        %161 = sbr.rel (%p159) target = $region28
      $region27: #{stem_forward.2} parent=23 // pred_region
        %s162 = smul.u32 32, %s16
        %p163 = scmp.lt.s32.totalorder %s162, 255
        %s164 = scalar_select %p163, %s162, 255
        %s165 = smul.addr %s164, 2
        %s166 = smul.addr %s165, 4
        %s167 = scalar_lea.vmem %s0, %s166
        %s168 = smul.u32 32, %s16
      $region28: #{stem_forward.2} parent=23 // pred_fallthru
        _
    $region24: #{stem_forward.2} parent=5 // pred_fallthru
      _
    %p169 = scmp.le.s32.totalorder 1, %s9
    %p170 = scmp.lt.s32.totalorder %s9, 9
    %p171 = pnand %p169, %p170
    %p172 = pneg %p171
    // Predicated region
    $region29: #{stem_forward.2} parent=5 // pred_check
      _
    $region30: #{stem_forward.2} parent=5 // pred_check_branch
      %174 = sbr.rel (%p171) target = $region32
    $region31: #{stem_forward.2} parent=5 // pred_region
      %s175 = ssub.s32 %s9, 1
      %s176 = smul.u32 32, %s18
      %p177 = scmp.lt.s32.totalorder %s176, 255
      %s178 = scalar_select %p177, %s176, 255
      %s179 = smul.addr %s178, 2
      %s180 = smul.addr %s179, 4
      %s181 = scalar_lea.vmem %s0, %s180
      %p182 = pneg %p47
      %p183 = pneg %p44
      %p184 = scmp.lt.s32.totalorder %s19, 0
      %s185 = scalar_select %p184, %s19, 0
      %s186 = smul.addr %s185, 4
      %s187 = scalar_lea.vmem %s1, %s186
      %p188 = pneg %p73
      %p189 = pneg %p70
      %p190 = scmp.lt.s32.totalorder %s19, 0
      %s191 = scalar_select %p190, %s19, 0
      %s192 = scalar_lea.vmem %s2, %s191
      %p193 = pneg %p99
      %p194 = pneg %p96
      %p195 = pneg %p127
      %p196 = pneg %p124
      %s197 = smul.u32 32, %s18
      %p198 = scmp.lt.s32.totalorder %s197, 255
      %s199 = scalar_select %p198, %s197, 255
      %p200 = scmp.lt.s32.totalorder %s19, 0
      %s201 = scalar_select %p200, %s19, 0
      %s202 = sadd.s32 %s201, %s199
      %s203 = smul.addr %s202, 4
      %s204 = scalar_lea.vmem %s3, %s203
      %s205 = smul.u32 32, %s18
      %p206 = scmp.lt.s32.totalorder %s205, 255
      %s207 = scalar_select %p206, %s205, 255
      %s208 = smul.addr %s207, 2
      %s209 = smul.addr %s208, 4
      %s210 = scalar_lea.vmem %s0, %s209
      %s211 = smul.u32 32, %s18
      %p212 = scmp.lt.s32.totalorder %s19, 0
      %s213 = scalar_select %p212, %s19, 0
      %s214 = smul.addr %s213, 4
      %s215 = scalar_lea.vmem %s1, %s214
      %p216 = scmp.lt.s32.totalorder %s19, 0
      %s217 = scalar_select %p216, %s19, 0
      %s218 = scalar_lea.vmem %s2, %s217
      %s219 = smul.u32 32, %s18
      %p220 = scmp.lt.s32.totalorder %s219, 255
      %s221 = scalar_select %p220, %s219, 255
      %p222 = scmp.lt.s32.totalorder %s19, 0
      %s223 = scalar_select %p222, %s19, 0
      %s224 = sadd.s32 %s223, %s221
      %s225 = smul.addr %s224, 4
      %s226 = scalar_lea.vmem %s3, %s225
      %s227 = smul.u32 32, %s18
      %v229 = vld [vmem:[%s210] sm:$0xff]
      %v230 = vld [vmem:[%s210 + $0x8] sm:$0xff]
      %v231 = vld [vmem:[%s210 + $0x10] sm:$0xff]
      %v232 = vld [vmem:[%s210 + $0x18] sm:$0xff]
      %v233 = vld [vmem:[%s210 + $0x20] sm:$0xff]
      %v234 = vld [vmem:[%s210 + $0x28] sm:$0xff]
      %v235 = vld [vmem:[%s210 + $0x30] sm:$0xff]
      %v236 = vld [vmem:[%s210 + $0x38] sm:$0xff]
      %v237 = vld [vmem:[%s210 + $0x40] sm:$0xff]
      %v238 = vld [vmem:[%s210 + $0x48] sm:$0xff]
      %v239 = vld [vmem:[%s210 + $0x50] sm:$0xff]
      %v240 = vld [vmem:[%s210 + $0x58] sm:$0xff]
      %v241 = vld [vmem:[%s210 + $0x60] sm:$0xff]
      %v242 = vld [vmem:[%s210 + $0x68] sm:$0xff]
      %v243 = vld [vmem:[%s210 + $0x70] sm:$0xff]
      %v244 = vld [vmem:[%s210 + $0x78] sm:$0xff]
      %v245 = vld [vmem:[%s210 + $0x80] sm:$0xff]
      %v246 = vld [vmem:[%s210 + $0x88] sm:$0xff]
      %v247 = vld [vmem:[%s210 + $0x90] sm:$0xff]
      %v248 = vld [vmem:[%s210 + $0x98] sm:$0xff]
      %v249 = vld [vmem:[%s210 + $0xa0] sm:$0xff]
      %v250 = vld [vmem:[%s210 + $0xa8] sm:$0xff]
      %v251 = vld [vmem:[%s210 + $0xb0] sm:$0xff]
      %v252 = vld [vmem:[%s210 + $0xb8] sm:$0xff]
      %v253 = vld [vmem:[%s210 + $0xc0] sm:$0xff]
      %v254 = vld [vmem:[%s210 + $0xc8] sm:$0xff]
      %v255 = vld [vmem:[%s210 + $0xd0] sm:$0xff]
      %v256 = vld [vmem:[%s210 + $0xd8] sm:$0xff]
      %v257 = vld [vmem:[%s210 + $0xe0] sm:$0xff]
      %v258 = vld [vmem:[%s210 + $0xe8] sm:$0xff]
      %v259 = vld [vmem:[%s210 + $0xf0] sm:$0xff]
      %v260 = vld [vmem:[%s210 + $0xf8] sm:$0xff]
      %v261 = vld [vmem:[%s215] sm:$0xf]
      %v262 = vld [vmem:[%s215 + $0x4] sm:$0xf]
      %v263 = vld [vmem:[%s215 + $0x8] sm:$0xf]
      %v264 = vld [vmem:[%s215 + $0xc] sm:$0xf]
      %v265 = vld [vmem:[%s215 + $0x10] sm:$0xf]
      %v266 = vld [vmem:[%s215 + $0x14] sm:$0xf]
      %v267 = vld [vmem:[%s215 + $0x18] sm:$0xf]
      %v268 = vld [vmem:[%s215 + $0x1c] sm:$0xf]
      %v269 = vld [vmem:[%s215 + $0x20] sm:$0xf]
      %v270 = vld [vmem:[%s215 + $0x24] sm:$0xf]
      %v271 = vld [vmem:[%s215 + $0x28] sm:$0xf]
      %v272 = vld [vmem:[%s215 + $0x2c] sm:$0xf]
      %v273 = vld [vmem:[%s215 + $0x30] sm:$0xf]
      %v274 = vld [vmem:[%s215 + $0x34] sm:$0xf]
      %v275 = vld [vmem:[%s215 + $0x38] sm:$0xf]
      %v276 = vld [vmem:[%s215 + $0x3c] sm:$0xf]
      %v277 = vld [vmem:[%s215 + $0x40] sm:$0xf]
      %v278 = vld [vmem:[%s215 + $0x44] sm:$0xf]
      %v279 = vld [vmem:[%s215 + $0x48] sm:$0x3]
      %v280 = vld [vmem:[%s218] sm:$0x1]
      %v282 = vlaneseq
      %v283 = vshrl.u32 %v282, 7
      %v284 = vsub.s32 0, %v283
      %v285 = vrot.slane %v280, %v284
      %v319 = vunpack.c.l.b16 %v229
      %v320 = vunpack.c.h.b16 %v229
      %v321 = vunpack.c.l.b16 %v230
      %v322 = vunpack.c.h.b16 %v230
      %v323 = vunpack.c.l.b16 %v231
      %v324 = vunpack.c.h.b16 %v231
      %v325 = vunpack.c.l.b16 %v232
      %v326 = vunpack.c.h.b16 %v232
      %v327 = vunpack.c.l.b16 %v233
      %v328 = vunpack.c.h.b16 %v233
      %v329 = vunpack.c.l.b16 %v234
      %v330 = vunpack.c.h.b16 %v234
      %v331 = vunpack.c.l.b16 %v235
      %v332 = vunpack.c.h.b16 %v235
      %v333 = vunpack.c.l.b16 %v236
      %v334 = vunpack.c.h.b16 %v236
      %v335 = vunpack.c.l.b16 %v237
      %v336 = vunpack.c.h.b16 %v237
      %v337 = vunpack.c.l.b16 %v238
      %v338 = vunpack.c.h.b16 %v238
      %v339 = vunpack.c.l.b16 %v239
      %v340 = vunpack.c.h.b16 %v239
      %v341 = vunpack.c.l.b16 %v240
      %v342 = vunpack.c.h.b16 %v240
      %v343 = vunpack.c.l.b16 %v241
      %v344 = vunpack.c.h.b16 %v241
      %v345 = vunpack.c.l.b16 %v242
      %v346 = vunpack.c.h.b16 %v242
      %v347 = vunpack.c.l.b16 %v243
      %v348 = vunpack.c.h.b16 %v243
      %v349 = vunpack.c.l.b16 %v244
      %v350 = vunpack.c.h.b16 %v244
      %v351 = vunpack.c.l.b16 %v245
      %v352 = vunpack.c.h.b16 %v245
      %v353 = vunpack.c.l.b16 %v246
      %v354 = vunpack.c.h.b16 %v246
      %v355 = vunpack.c.l.b16 %v247
      %v356 = vunpack.c.h.b16 %v247
      %v357 = vunpack.c.l.b16 %v248
      %v358 = vunpack.c.h.b16 %v248
      %v359 = vunpack.c.l.b16 %v249
      %v360 = vunpack.c.h.b16 %v249
      %v361 = vunpack.c.l.b16 %v250
      %v362 = vunpack.c.h.b16 %v250
      %v363 = vunpack.c.l.b16 %v251
      %v364 = vunpack.c.h.b16 %v251
      %v365 = vunpack.c.l.b16 %v252
      %v366 = vunpack.c.h.b16 %v252
      %v367 = vunpack.c.l.b16 %v253
      %v368 = vunpack.c.h.b16 %v253
      %v369 = vunpack.c.l.b16 %v254
      %v370 = vunpack.c.h.b16 %v254
      %v371 = vunpack.c.l.b16 %v255
      %v372 = vunpack.c.h.b16 %v255
      %v373 = vunpack.c.l.b16 %v256
      %v374 = vunpack.c.h.b16 %v256
      %v375 = vunpack.c.l.b16 %v257
      %v376 = vunpack.c.h.b16 %v257
      %v377 = vunpack.c.l.b16 %v258
      %v378 = vunpack.c.h.b16 %v258
      %v379 = vunpack.c.l.b16 %v259
      %v380 = vunpack.c.h.b16 %v259
      %v381 = vunpack.c.l.b16 %v260
      %v382 = vunpack.c.h.b16 %v260
      %v383 = vpack.c.b16 %v321, %v319
      %v384 = vpack.c.b16 %v322, %v320
      %v385 = vpack.c.b16 %v325, %v323
      %v386 = vpack.c.b16 %v326, %v324
      %v387 = vpack.c.b16 %v329, %v327
      %v388 = vpack.c.b16 %v330, %v328
      %v389 = vpack.c.b16 %v333, %v331
      %v390 = vpack.c.b16 %v334, %v332
      %v391 = vpack.c.b16 %v337, %v335
      %v392 = vpack.c.b16 %v338, %v336
      %v393 = vpack.c.b16 %v341, %v339
      %v394 = vpack.c.b16 %v342, %v340
      %v395 = vpack.c.b16 %v345, %v343
      %v396 = vpack.c.b16 %v346, %v344
      %v397 = vpack.c.b16 %v349, %v347
      %v398 = vpack.c.b16 %v350, %v348
      %v399 = vpack.c.b16 %v353, %v351
      %v400 = vpack.c.b16 %v354, %v352
      %v401 = vpack.c.b16 %v357, %v355
      %v402 = vpack.c.b16 %v358, %v356
      %v403 = vpack.c.b16 %v361, %v359
      %v404 = vpack.c.b16 %v362, %v360
      %v405 = vpack.c.b16 %v365, %v363
      %v406 = vpack.c.b16 %v366, %v364
      %v407 = vpack.c.b16 %v369, %v367
      %v408 = vpack.c.b16 %v370, %v368
      %v409 = vpack.c.b16 %v373, %v371
      %v410 = vpack.c.b16 %v374, %v372
      %v411 = vpack.c.b16 %v377, %v375
      %v412 = vpack.c.b16 %v378, %v376
      %v413 = vpack.c.b16 %v381, %v379
      %v414 = vpack.c.b16 %v382, %v380
      %v450 = vunpack.c.l.b16 %v261
      %v451 = vunpack.c.l.b16 %v262
      %v452 = vunpack.c.l.b16 %v263
      %v453 = vunpack.c.l.b16 %v264
      %v454 = vunpack.c.l.b16 %v265
      %v455 = vunpack.c.l.b16 %v266
      %v456 = vunpack.c.l.b16 %v267
      %v457 = vunpack.c.l.b16 %v268
      %v458 = vunpack.c.l.b16 %v269
      %v459 = vunpack.c.l.b16 %v270
      %v460 = vunpack.c.l.b16 %v271
      %v461 = vunpack.c.l.b16 %v272
      %v462 = vunpack.c.l.b16 %v273
      %v463 = vunpack.c.l.b16 %v274
      %v464 = vunpack.c.l.b16 %v275
      %v465 = vunpack.c.l.b16 %v276
      %v466 = vunpack.c.l.b16 %v277
      %v467 = vunpack.c.l.b16 %v278
      %v468 = vunpack.c.l.b16 %v279
      %v469 = vpack.c.b16 %v451, %v450
      %v470 = vpack.c.b16 %v453, %v452
      %v471 = vpack.c.b16 %v455, %v454
      %v472 = vpack.c.b16 %v457, %v456
      %v473 = vpack.c.b16 %v459, %v458
      %v474 = vpack.c.b16 %v461, %v460
      %v475 = vpack.c.b16 %v463, %v462
      %v476 = vpack.c.b16 %v465, %v464
      %v477 = vpack.c.b16 %v467, %v466
      %v478 = vpack.c.b16 %v468, %v468
      %vm488 = vcmask 154624
      %v490 = vsel %vm488, %v384, 0
      %v493 = vsel %vm488, %v386, 0
      %v496 = vsel %vm488, %v388, 0
      %v499 = vsel %vm488, %v390, 0
      %v502 = vsel %vm488, %v392, 0
      %v505 = vsel %vm488, %v394, 0
      %v508 = vsel %vm488, %v396, 0
      %v511 = vsel %vm488, %v398, 0
      %v514 = vsel %vm488, %v400, 0
      %v517 = vsel %vm488, %v402, 0
      %v520 = vsel %vm488, %v404, 0
      %v523 = vsel %vm488, %v406, 0
      %v526 = vsel %vm488, %v408, 0
      %v529 = vsel %vm488, %v410, 0
      %v532 = vsel %vm488, %v412, 0
      %v535 = vsel %vm488, %v414, 0
      %vm537 = vcmask 1040384
      %vm538 = vcmask 1041408
      %v539 = vsel %vm537, 4294967295, 65535
      %v540 = vsel %vm538, %v539, 0
      %v542 = vand.u32 %v478, %v540
      %544 = vmatprep.subr.bf16.mxu0 0
      %545 = vmatpush1.bf16.msra.mxu0 %v469
      %546 = vmatprep.subr.bf16.mxu0 0
      %547 = vmatpush1.bf16.msra.mxu0 %v470
      %548 = vmatprep.subr.bf16.mxu0 0
      %549 = vmatpush1.bf16.msra.mxu0 %v471
      %550 = vmatprep.subr.bf16.mxu0 0
      %551 = vmatpush1.bf16.msra.mxu0 %v472
      %552 = vmatprep.subr.bf16.mxu0 0
      %553 = vmatpush1.bf16.msra.mxu0 %v473
      %554 = vmatprep.subr.bf16.mxu0 0
      %555 = vmatpush1.bf16.msra.mxu0 %v474
      %556 = vmatprep.subr.bf16.mxu0 0
      %557 = vmatpush1.bf16.msra.mxu0 %v475
      %558 = vmatprep.subr.bf16.mxu0 0
      %559 = vmatpush1.bf16.msra.mxu0 %v476
      %560 = vmatprep.subr.bf16.mxu0 0
      %561 = vmatpush1.bf16.msra.mxu0 %v477
      %562 = vmatprep.subr.bf16.mxu0 0
      %563 = vmatpush1.bf16.msra.mxu0 %v542
      %564 = vmatprep.subr.bf16.mxu0 0
      %565 = vmatpush1.bf16.msra.mxu0 0
      %566 = vmatprep.subr.bf16.mxu0 0
      %567 = vmatpush1.bf16.msra.mxu0 0
      %568 = vmatprep.subr.bf16.mxu0 0
      %569 = vmatpush1.bf16.msra.mxu0 0
      %570 = vmatprep.subr.bf16.mxu0 0
      %571 = vmatpush1.bf16.msra.mxu0 0
      %572 = vmatprep.subr.bf16.mxu0 0
      %573 = vmatpush1.bf16.msra.mxu0 0
      %574 = vmatprep.subr.bf16.mxu0 0
      %575 = vmatpush1.bf16.msra.mxu0 0
      %576 = vmatprep.mubr.bf16.mxu0 %v490
      %577 = vmatmul.mubr.bf16.gmra.mrb[0].mxu0 %v383
      %v578 = vpop.f32.mrb[0].mxu0
      %v579 = vadd.f32 %v285, %v578
      %v580 = vpop.f32.mrb[0].mxu0
      %v581 = vpop.f32.mrb[0].mxu0
      %v582 = vadd.f32 %v285, %v581
      %v583 = vpop.f32.mrb[0].mxu0
      %584 = vmatprep.mubr.bf16.mxu0 %v493
      %585 = vmatmul.mubr.bf16.gmra.mrb[0].mxu0 %v385
      %v586 = vpop.f32.mrb[0].mxu0
      %v587 = vadd.f32 %v285, %v586
      %v588 = vpop.f32.mrb[0].mxu0
      %v589 = vpop.f32.mrb[0].mxu0
      %v590 = vadd.f32 %v285, %v589
      %v591 = vpop.f32.mrb[0].mxu0
      %592 = vmatprep.mubr.bf16.mxu0 %v496
      %593 = vmatmul.mubr.bf16.gmra.mrb[0].mxu0 %v387
      %v594 = vpop.f32.mrb[0].mxu0
      %v595 = vadd.f32 %v285, %v594
      %v596 = vpop.f32.mrb[0].mxu0
      %v597 = vpop.f32.mrb[0].mxu0
      %v598 = vadd.f32 %v285, %v597
      %v599 = vpop.f32.mrb[0].mxu0
      %600 = vmatprep.mubr.bf16.mxu0 %v499
      %601 = vmatmul.mubr.bf16.gmra.mrb[0].mxu0 %v389
      %v602 = vpop.f32.mrb[0].mxu0
      %v603 = vadd.f32 %v285, %v602
      %v604 = vpop.f32.mrb[0].mxu0
      %v605 = vpop.f32.mrb[0].mxu0
      %v606 = vadd.f32 %v285, %v605
      %v607 = vpop.f32.mrb[0].mxu0
      %608 = vmatprep.mubr.bf16.mxu0 %v502
      %609 = vmatmul.mubr.bf16.gmra.mrb[0].mxu0 %v391
      %v610 = vpop.f32.mrb[0].mxu0
      %v611 = vadd.f32 %v285, %v610
      %v612 = vpop.f32.mrb[0].mxu0
      %v613 = vpop.f32.mrb[0].mxu0
      %v614 = vadd.f32 %v285, %v613
      %v615 = vpop.f32.mrb[0].mxu0
      %616 = vmatprep.mubr.bf16.mxu0 %v505
      %617 = vmatmul.mubr.bf16.gmra.mrb[0].mxu0 %v393
      %v618 = vpop.f32.mrb[0].mxu0
      %v619 = vadd.f32 %v285, %v618
      %v620 = vpop.f32.mrb[0].mxu0
      %v621 = vpop.f32.mrb[0].mxu0
      %v622 = vadd.f32 %v285, %v621
      %v623 = vpop.f32.mrb[0].mxu0
      %624 = vmatprep.mubr.bf16.mxu0 %v508
      %625 = vmatmul.mubr.bf16.gmra.mrb[0].mxu0 %v395
      %v626 = vpop.f32.mrb[0].mxu0
      %v627 = vadd.f32 %v285, %v626
      %v628 = vpop.f32.mrb[0].mxu0
      %v629 = vpop.f32.mrb[0].mxu0
      %v630 = vadd.f32 %v285, %v629
      %v631 = vpop.f32.mrb[0].mxu0
      %632 = vmatprep.mubr.bf16.mxu0 %v511
      %633 = vmatmul.mubr.bf16.gmra.mrb[0].mxu0 %v397
      %v634 = vpop.f32.mrb[0].mxu0
      %v635 = vadd.f32 %v285, %v634
      %v636 = vpop.f32.mrb[0].mxu0
      %v637 = vpop.f32.mrb[0].mxu0
      %v638 = vadd.f32 %v285, %v637
      %v639 = vpop.f32.mrb[0].mxu0
      %640 = vmatprep.mubr.bf16.mxu0 %v514
      %641 = vmatmul.mubr.bf16.gmra.mrb[0].mxu0 %v399
      %v642 = vpop.f32.mrb[0].mxu0
      %v643 = vadd.f32 %v285, %v642
      %v644 = vpop.f32.mrb[0].mxu0
      %v645 = vpop.f32.mrb[0].mxu0
      %v646 = vadd.f32 %v285, %v645
      %v647 = vpop.f32.mrb[0].mxu0
      %648 = vmatprep.mubr.bf16.mxu0 %v517
      %649 = vmatmul.mubr.bf16.gmra.mrb[0].mxu0 %v401
      %v650 = vpop.f32.mrb[0].mxu0
      %v651 = vadd.f32 %v285, %v650
      %v652 = vpop.f32.mrb[0].mxu0
      %v653 = vpop.f32.mrb[0].mxu0
      %v654 = vadd.f32 %v285, %v653
      %v655 = vpop.f32.mrb[0].mxu0
      %656 = vmatprep.mubr.bf16.mxu0 %v520
      %657 = vmatmul.mubr.bf16.gmra.mrb[0].mxu0 %v403
      %v658 = vpop.f32.mrb[0].mxu0
      %v659 = vadd.f32 %v285, %v658
      %v660 = vpop.f32.mrb[0].mxu0
      %v661 = vpop.f32.mrb[0].mxu0
      %v662 = vadd.f32 %v285, %v661
      %v663 = vpop.f32.mrb[0].mxu0
      %664 = vmatprep.mubr.bf16.mxu0 %v523
      %665 = vmatmul.mubr.bf16.gmra.mrb[0].mxu0 %v405
      %v666 = vpop.f32.mrb[0].mxu0
      %v667 = vadd.f32 %v285, %v666
      %v668 = vpop.f32.mrb[0].mxu0
      %v669 = vpop.f32.mrb[0].mxu0
      %v670 = vadd.f32 %v285, %v669
      %v671 = vpop.f32.mrb[0].mxu0
      %672 = vmatprep.mubr.bf16.mxu0 %v526
      %673 = vmatmul.mubr.bf16.gmra.mrb[0].mxu0 %v407
      %v674 = vpop.f32.mrb[0].mxu0
      %v675 = vadd.f32 %v285, %v674
      %v676 = vpop.f32.mrb[0].mxu0
      %v677 = vpop.f32.mrb[0].mxu0
      %v678 = vadd.f32 %v285, %v677
      %v679 = vpop.f32.mrb[0].mxu0
      %680 = vmatprep.mubr.bf16.mxu0 %v529
      %681 = vmatmul.mubr.bf16.gmra.mrb[0].mxu0 %v409
      %v682 = vpop.f32.mrb[0].mxu0
      %v683 = vadd.f32 %v285, %v682
      %v684 = vpop.f32.mrb[0].mxu0
      %v685 = vpop.f32.mrb[0].mxu0
      %v686 = vadd.f32 %v285, %v685
      %v687 = vpop.f32.mrb[0].mxu0
      %688 = vmatprep.mubr.bf16.mxu0 %v532
      %689 = vmatmul.mubr.bf16.gmra.mrb[0].mxu0 %v411
      %v690 = vpop.f32.mrb[0].mxu0
      %v691 = vadd.f32 %v285, %v690
      %v692 = vpop.f32.mrb[0].mxu0
      %v693 = vpop.f32.mrb[0].mxu0
      %v694 = vadd.f32 %v285, %v693
      %v695 = vpop.f32.mrb[0].mxu0
      %696 = vmatprep.mubr.bf16.mxu0 %v535
      %697 = vmatmul.mubr.bf16.gmra.mrb[0].mxu0 %v413
      %v698 = vpop.f32.mrb[0].mxu0
      %v699 = vadd.f32 %v285, %v698
      %v700 = vpop.f32.mrb[0].mxu0
      %v701 = vpop.f32.mrb[0].mxu0
      %v702 = vadd.f32 %v285, %v701
      %v703 = vpop.f32.mrb[0].mxu0
      %704 = vdwg.mxu0
      %v705 = vmax.f32 %v579, 0.0
      %v706 = vmax.f32 %v582, 0.0
      %v707 = vmax.f32 %v587, 0.0
      %v708 = vmax.f32 %v590, 0.0
      %v709 = vmax.f32 %v595, 0.0
      %v710 = vmax.f32 %v598, 0.0
      %v711 = vmax.f32 %v603, 0.0
      %v712 = vmax.f32 %v606, 0.0
      %v713 = vmax.f32 %v611, 0.0
      %v714 = vmax.f32 %v614, 0.0
      %v715 = vmax.f32 %v619, 0.0
      %v716 = vmax.f32 %v622, 0.0
      %v717 = vmax.f32 %v627, 0.0
      %v718 = vmax.f32 %v630, 0.0
      %v719 = vmax.f32 %v635, 0.0
      %v720 = vmax.f32 %v638, 0.0
      %v721 = vmax.f32 %v643, 0.0
      %v722 = vmax.f32 %v646, 0.0
      %v723 = vmax.f32 %v651, 0.0
      %v724 = vmax.f32 %v654, 0.0
      %v725 = vmax.f32 %v659, 0.0
      %v726 = vmax.f32 %v662, 0.0
      %v727 = vmax.f32 %v667, 0.0
      %v728 = vmax.f32 %v670, 0.0
      %v729 = vmax.f32 %v675, 0.0
      %v730 = vmax.f32 %v678, 0.0
      %v731 = vmax.f32 %v683, 0.0
      %v732 = vmax.f32 %v686, 0.0
      %v733 = vmax.f32 %v691, 0.0
      %v734 = vmax.f32 %v694, 0.0
      %v735 = vmax.f32 %v699, 0.0
      %v736 = vmax.f32 %v702, 0.0
      %v737 = vpack.c.bf16 %v706, %v705
      %v738 = vpack.c.bf16 %v708, %v707
      %v739 = vpack.c.bf16 %v710, %v709
      %v740 = vpack.c.bf16 %v712, %v711
      %v741 = vpack.c.bf16 %v714, %v713
      %v742 = vpack.c.bf16 %v716, %v715
      %v743 = vpack.c.bf16 %v718, %v717
      %v744 = vpack.c.bf16 %v720, %v719
      %v745 = vpack.c.bf16 %v722, %v721
      %v746 = vpack.c.bf16 %v724, %v723
      %v747 = vpack.c.bf16 %v726, %v725
      %v748 = vpack.c.bf16 %v728, %v727
      %v749 = vpack.c.bf16 %v730, %v729
      %v750 = vpack.c.bf16 %v732, %v731
      %v751 = vpack.c.bf16 %v734, %v733
      %v752 = vpack.c.bf16 %v736, %v735
      %v769 = vunpack.c.l.b16 %v737
      %v770 = vunpack.c.h.b16 %v737
      %v771 = vunpack.c.l.b16 %v738
      %v772 = vunpack.c.h.b16 %v738
      %v773 = vunpack.c.l.b16 %v739
      %v774 = vunpack.c.h.b16 %v739
      %v775 = vunpack.c.l.b16 %v740
      %v776 = vunpack.c.h.b16 %v740
      %v777 = vunpack.c.l.b16 %v741
      %v778 = vunpack.c.h.b16 %v741
      %v779 = vunpack.c.l.b16 %v742
      %v780 = vunpack.c.h.b16 %v742
      %v781 = vunpack.c.l.b16 %v743
      %v782 = vunpack.c.h.b16 %v743
      %v783 = vunpack.c.l.b16 %v744
      %v784 = vunpack.c.h.b16 %v744
      %v785 = vunpack.c.l.b16 %v745
      %v786 = vunpack.c.h.b16 %v745
      %v787 = vunpack.c.l.b16 %v746
      %v788 = vunpack.c.h.b16 %v746
      %v789 = vunpack.c.l.b16 %v747
      %v790 = vunpack.c.h.b16 %v747
      %v791 = vunpack.c.l.b16 %v748
      %v792 = vunpack.c.h.b16 %v748
      %v793 = vunpack.c.l.b16 %v749
      %v794 = vunpack.c.h.b16 %v749
      %v795 = vunpack.c.l.b16 %v750
      %v796 = vunpack.c.h.b16 %v750
      %v797 = vunpack.c.l.b16 %v751
      %v798 = vunpack.c.h.b16 %v751
      %v799 = vunpack.c.l.b16 %v752
      %v800 = vunpack.c.h.b16 %v752
      %v801 = vpack.c.b16 %v769, %v769
      %v802 = vpack.c.b16 %v770, %v770
      %v803 = vpack.c.b16 %v771, %v771
      %v804 = vpack.c.b16 %v772, %v772
      %v805 = vpack.c.b16 %v773, %v773
      %v806 = vpack.c.b16 %v774, %v774
      %v807 = vpack.c.b16 %v775, %v775
      %v808 = vpack.c.b16 %v776, %v776
      %v809 = vpack.c.b16 %v777, %v777
      %v810 = vpack.c.b16 %v778, %v778
      %v811 = vpack.c.b16 %v779, %v779
      %v812 = vpack.c.b16 %v780, %v780
      %v813 = vpack.c.b16 %v781, %v781
      %v814 = vpack.c.b16 %v782, %v782
      %v815 = vpack.c.b16 %v783, %v783
      %v816 = vpack.c.b16 %v784, %v784
      %v817 = vpack.c.b16 %v785, %v785
      %v818 = vpack.c.b16 %v786, %v786
      %v819 = vpack.c.b16 %v787, %v787
      %v820 = vpack.c.b16 %v788, %v788
      %v821 = vpack.c.b16 %v789, %v789
      %v822 = vpack.c.b16 %v790, %v790
      %v823 = vpack.c.b16 %v791, %v791
      %v824 = vpack.c.b16 %v792, %v792
      %v825 = vpack.c.b16 %v793, %v793
      %v826 = vpack.c.b16 %v794, %v794
      %v827 = vpack.c.b16 %v795, %v795
      %v828 = vpack.c.b16 %v796, %v796
      %v829 = vpack.c.b16 %v797, %v797
      %v830 = vpack.c.b16 %v798, %v798
      %v831 = vpack.c.b16 %v799, %v799
      %v832 = vpack.c.b16 %v800, %v800
      %865 = vst [vmem:[%s226] sm:$0xf] %v801
      %866 = vst [vmem:[%s226 + $0x4] sm:$0xf] %v802
      %867 = vst [vmem:[%s226 + $0x8] sm:$0xf] %v803
      %868 = vst [vmem:[%s226 + $0xc] sm:$0xf] %v804
      %869 = vst [vmem:[%s226 + $0x10] sm:$0xf] %v805
      %870 = vst [vmem:[%s226 + $0x14] sm:$0xf] %v806
      %871 = vst [vmem:[%s226 + $0x18] sm:$0xf] %v807
      %872 = vst [vmem:[%s226 + $0x1c] sm:$0xf] %v808
      %873 = vst [vmem:[%s226 + $0x20] sm:$0xf] %v809
      %874 = vst [vmem:[%s226 + $0x24] sm:$0xf] %v810
      %875 = vst [vmem:[%s226 + $0x28] sm:$0xf] %v811
      %876 = vst [vmem:[%s226 + $0x2c] sm:$0xf] %v812
      %877 = vst [vmem:[%s226 + $0x30] sm:$0xf] %v813
      %878 = vst [vmem:[%s226 + $0x34] sm:$0xf] %v814
      %879 = vst [vmem:[%s226 + $0x38] sm:$0xf] %v815
      %880 = vst [vmem:[%s226 + $0x3c] sm:$0xf] %v816
      %881 = vst [vmem:[%s226 + $0x40] sm:$0xf] %v817
      %882 = vst [vmem:[%s226 + $0x44] sm:$0xf] %v818
      %883 = vst [vmem:[%s226 + $0x48] sm:$0xf] %v819
      %884 = vst [vmem:[%s226 + $0x4c] sm:$0xf] %v820
      %885 = vst [vmem:[%s226 + $0x50] sm:$0xf] %v821
      %886 = vst [vmem:[%s226 + $0x54] sm:$0xf] %v822
      %887 = vst [vmem:[%s226 + $0x58] sm:$0xf] %v823
      %888 = vst [vmem:[%s226 + $0x5c] sm:$0xf] %v824
      %889 = vst [vmem:[%s226 + $0x60] sm:$0xf] %v825
      %890 = vst [vmem:[%s226 + $0x64] sm:$0xf] %v826
      %891 = vst [vmem:[%s226 + $0x68] sm:$0xf] %v827
      %892 = vst [vmem:[%s226 + $0x6c] sm:$0xf] %v828
      %893 = vst [vmem:[%s226 + $0x70] sm:$0xf] %v829
      %894 = vst [vmem:[%s226 + $0x74] sm:$0xf] %v830
      %895 = vst [vmem:[%s226 + $0x78] sm:$0xf] %v831
      %896 = vst [vmem:[%s226 + $0x7c] sm:$0xf] %v832
      %s897 = smul.u32 32, %s18
      %p898 = scmp.lt.s32.totalorder %s897, 255
      %s899 = scalar_select %p898, %s897, 255
      %p900 = scmp.lt.s32.totalorder %s19, 0
      %s901 = scalar_select %p900, %s19, 0
      %s902 = sadd.s32 %s901, %s899
      %s903 = smul.addr %s902, 4
      %s904 = scalar_lea.vmem %s3, %s903
      // Predicated region
      $region33: #{stem_forward.2} parent=31 // pred_check
        %p905 = pneg %p124
      $region34: #{stem_forward.2} parent=31 // pred_check_branch
        %907 = sbr.rel (%p905) target = $region36
      $region35: #{stem_forward.2} parent=31 // pred_region
        %s908 = smul.u32 32, %s18
      $region36: #{stem_forward.2} parent=31 // pred_fallthru
        _
    $region32: #{stem_forward.2} parent=5 // pred_fallthru
      _
    %p909 = scmp.le.s32.totalorder 2, %s9
    // Predicated region
    $region37: #{stem_forward.2} parent=5 // pred_check
      %p910 = pneg %p909
    $region38: #{stem_forward.2} parent=5 // pred_check_branch
      %912 = sbr.rel (%p910) target = $region40
    $region39: #{stem_forward.2} parent=5 // pred_region
      %s913 = ssub.s32 %s9, 2
      // Predicated region
      $region41: #{stem_forward.2} parent=39 // pred_check
        %p914 = pneg %p130
      $region42: #{stem_forward.2} parent=39 // pred_check_branch
        %916 = sbr.rel (%p914) target = $region44
      $region43: #{stem_forward.2} parent=39 // pred_region
        %s917 = smul.u32 32, %s20
        %p918 = scmp.lt.s32.totalorder %s917, 255
        %s919 = scalar_select %p918, %s917, 255
        %p920 = scmp.lt.s32.totalorder %s21, 0
        %s921 = scalar_select %p920, %s21, 0
        %s922 = sadd.s32 %s921, %s919
        %s923 = smul.addr %s922, 4
        %s924 = scalar_lea.vmem %s3, %s923
      $region44: #{stem_forward.2} parent=39 // pred_fallthru
        _
    $region40: #{stem_forward.2} parent=5 // pred_fallthru
      _
  $region6: #{stem_forward.2} parent=0 // loop_footer
    %s13 = sadd.s32 1, %s9
  $region7: #{stem_forward.2} parent=0 // loop_footer_branch
    %8 = sbr.rel target = $region3
  $region8: #{stem_forward.2} parent=0 // loop_exit
    _

// kernel: stem_forward.3
$region0: #{stem_forward.3}
  #allocation0 [shape = 'u32[]', space=smem, size = 0x4, offset = 0x4, fixed_abs, tag = 'smem constant byte address 0x4 - core index']
  #allocation1 [shape = 'u32[144,128]{1,0:T(1,128)}', space=vmem, size = 0x12000, scoped, tag = 'internal scratch']
  %s0 = inlined_call_operand.vmem [shape: bf16[2,1190,128], index: 0, kind: input, shape index: {}]
  %s1 = inlined_call_operand.vmem [shape: bf16[2,1088,128], index: 1, kind: output, shape index: {}]
  %s2 = sld [smem:[#allocation0]]
  $region37: #{stem_forward.3} parent=0
    _
  %s4 = ssub.s32 1, %s2
  %s5 = scalar_select 0, %s4, %s2
  loop: start=0, step=1, limit=4
  $region2: #{stem_forward.3} parent=0 // loop_pre_header
    _
  $region3: #{stem_forward.3} parent=0 // loop_header
    %s7 = sphi 0, %s11
    %p8 = scmp.ge.s32.totalorder %s7, 4
    %s17 = sphi 0, %s19
    %s20 = sphi 0, %s17
    %s21 = sphi 0, %s20
    %s37 = sphi 0, %s21
    %s43 = sphi 0, %s45
    %s46 = sphi 0, %s43
    %s47 = sphi 0, %s46
    %s63 = sphi 0, %s47
  $region4: #{stem_forward.3} parent=0 // loop_header_branch
    %10 = sbr.rel (%p8) target = $region8
  $region5: #{stem_forward.3} parent=0 // loop_body
    %s12 = ssub.s32 %s7, 1
    %s13 = ssub.s32 %s7, 2
    %s14 = sadd.s32 %s7, 1
    %s15 = ssub.s32 %s7, %s14
    %p16 = scmp.eq.s32.totalorder %s15, 0
    %s18 = sadd.s32 %s17, 1
    %s19 = scalar_select %p16, %s17, %s18
    %p22 = pneg %p16
    %p23 = scmp.eq.s32.totalorder %s7, 1
    %p24 = por %p22, %p23
    %p25 = scmp.ne.s32.totalorder %s17, %s20
    %p26 = scmp.eq.s32.totalorder %s7, 0
    %p27 = por %p25, %p26
    %p28 = scmp.ne.s32.totalorder %s17, %s20
    %p29 = scmp.eq.s32.totalorder %s12, 1
    %p30 = por %p28, %p29
    %p31 = scmp.ne.s32.totalorder %s20, %s21
    %p32 = scmp.eq.s32.totalorder %s12, 0
    %p33 = por %p31, %p32
    %p34 = scmp.ne.s32.totalorder %s20, %s21
    %p35 = scmp.eq.s32.totalorder %s13, 1
    %p36 = por %p34, %p35
    %p38 = scmp.ne.s32.totalorder %s21, %s37
    %p39 = scmp.eq.s32.totalorder %s13, 0
    %p40 = por %p38, %p39
    %s41 = ssub.s32 %s7, %s14
    %p42 = scmp.eq.s32.totalorder %s41, 0
    %s44 = sadd.s32 %s43, 1
    %s45 = scalar_select %p42, %s43, %s44
    %p48 = pneg %p42
    %p49 = scmp.eq.s32.totalorder %s7, 1
    %p50 = por %p48, %p49
    %p51 = scmp.ne.s32.totalorder %s43, %s46
    %p52 = scmp.eq.s32.totalorder %s7, 0
    %p53 = por %p51, %p52
    %p54 = scmp.ne.s32.totalorder %s43, %s46
    %p55 = scmp.eq.s32.totalorder %s12, 1
    %p56 = por %p54, %p55
    %p57 = scmp.ne.s32.totalorder %s46, %s47
    %p58 = scmp.eq.s32.totalorder %s12, 0
    %p59 = por %p57, %p58
    %p60 = scmp.ne.s32.totalorder %s46, %s47
    %p61 = scmp.eq.s32.totalorder %s13, 1
    %p62 = por %p60, %p61
    %p64 = scmp.ne.s32.totalorder %s47, %s63
    %p65 = scmp.eq.s32.totalorder %s13, 0
    %p66 = por %p64, %p65
    %p67 = scmp.le.s32.totalorder 1, %s7
    %p68 = scmp.lt.s32.totalorder %s7, 3
    %p69 = pnand %p67, %p68
    %p70 = pneg %p69
    // Predicated region
    $region9: #{stem_forward.3} parent=5 // pred_check
      _
    $region10: #{stem_forward.3} parent=5 // pred_check_branch
      %72 = sbr.rel (%p69) target = $region12
    $region11: #{stem_forward.3} parent=5 // pred_region
      %s73 = ssub.s32 %s7, 1
    $region12: #{stem_forward.3} parent=5 // pred_fallthru
      _
    %p74 = scmp.lt.s32.totalorder %s7, 2
    // Predicated region
    $region13: #{stem_forward.3} parent=5 // pred_check
      %p75 = pneg %p74
    $region14: #{stem_forward.3} parent=5 // pred_check_branch
      %77 = sbr.rel (%p75) target = $region16
    $region15: #{stem_forward.3} parent=5 // pred_region
      // Predicated region
      $region17: #{stem_forward.3} parent=15 // pred_check
        %p78 = pneg %p27
      $region18: #{stem_forward.3} parent=15 // pred_check_branch
        %80 = sbr.rel (%p78) target = $region20
      $region19: #{stem_forward.3} parent=15 // pred_region
        %p81 = scmp.lt.s32.totalorder %s7, 1
        %s82 = scalar_select %p81, %s7, 1
        %s83 = smul.addr %s82, 149
        %s84 = smul.addr %s83, 4
        %s85 = scalar_lea.vmem %s0, %s84
      $region20: #{stem_forward.3} parent=15 // pred_fallthru
        _
    $region16: #{stem_forward.3} parent=5 // pred_fallthru
      _
    %p86 = scmp.le.s32.totalorder 1, %s7
    %p87 = scmp.lt.s32.totalorder %s7, 3
    %p88 = pnand %p86, %p87
    %p89 = pneg %p88
    // Predicated region
    $region21: #{stem_forward.3} parent=5 // pred_check
      _
    $region22: #{stem_forward.3} parent=5 // pred_check_branch
      %91 = sbr.rel (%p88) target = $region24
    $region23: #{stem_forward.3} parent=5 // pred_region
      %s92 = ssub.s32 %s7, 1
      %p93 = scmp.lt.s32.totalorder %s12, 1
      %s94 = scalar_select %p93, %s12, 1
      %s95 = smul.addr %s94, 149
      %s96 = smul.addr %s95, 4
      %s97 = scalar_lea.vmem %s0, %s96
      %p98 = pneg %p33
      %p99 = pneg %p30
      %p100 = pneg %p59
      %p101 = pneg %p56
      %p102 = scmp.lt.s32.totalorder %s12, 1
      %s103 = scalar_select %p102, %s12, 1
      %s104 = smul.addr %s103, 136
      %s105 = smul.addr %s104, 4
      %s106 = scalar_lea.vmem %s1, %s105
      %p107 = scmp.lt.s32.totalorder %s12, 1
      %s108 = scalar_select %p107, %s12, 1
      %s109 = smul.addr %s108, 149
      %s110 = smul.addr %s109, 4
      %s111 = scalar_lea.vmem %s0, %s110
      %p112 = scmp.lt.s32.totalorder %s12, 1
      %s113 = scalar_select %p112, %s12, 1
      %s114 = smul.addr %s113, 136
      %s115 = smul.addr %s114, 4
      %s116 = scalar_lea.vmem %s1, %s115
      %v117 = vld [vmem:[%s111] sm:$0xf]
      %v118 = vld [vmem:[%s111 + $0x4] sm:$0xf]
      %v119 = vld [vmem:[%s111 + $0x8] sm:$0xf]
      %v120 = vld [vmem:[%s111 + $0xc] sm:$0xf]
      %v121 = vld [vmem:[%s111 + $0x10] sm:$0xf]
      %v122 = vld [vmem:[%s111 + $0x14] sm:$0xf]
      %v123 = vld [vmem:[%s111 + $0x18] sm:$0xf]
      %v124 = vld [vmem:[%s111 + $0x1c] sm:$0xf]
      %v125 = vld [vmem:[%s111 + $0x20] sm:$0xf]
      %v126 = vld [vmem:[%s111 + $0x24] sm:$0xf]
      %v127 = vld [vmem:[%s111 + $0x28] sm:$0xf]
      %v128 = vld [vmem:[%s111 + $0x2c] sm:$0xf]
      %v129 = vld [vmem:[%s111 + $0x30] sm:$0xf]
      %v130 = vld [vmem:[%s111 + $0x34] sm:$0xf]
      %v131 = vld [vmem:[%s111 + $0x38] sm:$0xf]
      %v132 = vld [vmem:[%s111 + $0x3c] sm:$0xf]
      %v133 = vld [vmem:[%s111 + $0x40] sm:$0xf]
      %v134 = vld [vmem:[%s111 + $0x44] sm:$0xf]
      %v135 = vld [vmem:[%s111 + $0x48] sm:$0xf]
      %v136 = vld [vmem:[%s111 + $0x4c] sm:$0xf]
      %v137 = vld [vmem:[%s111 + $0x50] sm:$0xf]
      %v138 = vld [vmem:[%s111 + $0x54] sm:$0xf]
      %v139 = vld [vmem:[%s111 + $0x58] sm:$0xf]
      %v140 = vld [vmem:[%s111 + $0x5c] sm:$0xf]
      %v141 = vld [vmem:[%s111 + $0x60] sm:$0xf]
      %v142 = vld [vmem:[%s111 + $0x64] sm:$0xf]
      %v143 = vld [vmem:[%s111 + $0x68] sm:$0xf]
      %v144 = vld [vmem:[%s111 + $0x6c] sm:$0xf]
      %v145 = vld [vmem:[%s111 + $0x70] sm:$0xf]
      %v146 = vld [vmem:[%s111 + $0x74] sm:$0xf]
      %v147 = vld [vmem:[%s111 + $0x78] sm:$0xf]
      %v148 = vld [vmem:[%s111 + $0x7c] sm:$0xf]
      %v149 = vld [vmem:[%s111 + $0x80] sm:$0xf]
      %v150 = vld [vmem:[%s111 + $0x84] sm:$0xf]
      %v151 = vld [vmem:[%s111 + $0x88] sm:$0xf]
      %v152 = vld [vmem:[%s111 + $0x8c] sm:$0xf]
      %v153 = vld [vmem:[%s111 + $0x90] sm:$0xf]
      %v154 = vld [vmem:[%s111 + $0x94] sm:$0xf]
      %v155 = vld [vmem:[%s111 + $0x98] sm:$0xf]
      %v156 = vld [vmem:[%s111 + $0x9c] sm:$0xf]
      %v157 = vld [vmem:[%s111 + $0xa0] sm:$0xf]
      %v158 = vld [vmem:[%s111 + $0xa4] sm:$0xf]
      %v159 = vld [vmem:[%s111 + $0xa8] sm:$0xf]
      %v160 = vld [vmem:[%s111 + $0xac] sm:$0xf]
      %v161 = vld [vmem:[%s111 + $0xb0] sm:$0xf]
      %v162 = vld [vmem:[%s111 + $0xb4] sm:$0xf]
      %v163 = vld [vmem:[%s111 + $0xb8] sm:$0xf]
      %v164 = vld [vmem:[%s111 + $0xbc] sm:$0xf]
      %v165 = vld [vmem:[%s111 + $0xc0] sm:$0xf]
      %v166 = vld [vmem:[%s111 + $0xc4] sm:$0xf]
      %v167 = vld [vmem:[%s111 + $0xc8] sm:$0xf]
      %v168 = vld [vmem:[%s111 + $0xcc] sm:$0xf]
      %v169 = vld [vmem:[%s111 + $0xd0] sm:$0xf]
      %v170 = vld [vmem:[%s111 + $0xd4] sm:$0xf]
      %v171 = vld [vmem:[%s111 + $0xd8] sm:$0xf]
      %v172 = vld [vmem:[%s111 + $0xdc] sm:$0xf]
      %v173 = vld [vmem:[%s111 + $0xe0] sm:$0xf]
      %v174 = vld [vmem:[%s111 + $0xe4] sm:$0xf]
      %v175 = vld [vmem:[%s111 + $0xe8] sm:$0xf]
      %v176 = vld [vmem:[%s111 + $0xec] sm:$0xf]
      %v177 = vld [vmem:[%s111 + $0xf0] sm:$0xf]
      %v178 = vld [vmem:[%s111 + $0xf4] sm:$0xf]
      %v179 = vld [vmem:[%s111 + $0xf8] sm:$0xf]
      %v180 = vld [vmem:[%s111 + $0xfc] sm:$0xf]
      %v181 = vld [vmem:[%s111 + $0x100] sm:$0xf]
      %v182 = vld [vmem:[%s111 + $0x104] sm:$0xf]
      %v183 = vld [vmem:[%s111 + $0x108] sm:$0xf]
      %v184 = vld [vmem:[%s111 + $0x10c] sm:$0xf]
      %v185 = vld [vmem:[%s111 + $0x110] sm:$0xf]
      %v186 = vld [vmem:[%s111 + $0x114] sm:$0xf]
      %v187 = vld [vmem:[%s111 + $0x118] sm:$0xf]
      %v188 = vld [vmem:[%s111 + $0x11c] sm:$0xf]
      %v189 = vld [vmem:[%s111 + $0x120] sm:$0xf]
      %v190 = vld [vmem:[%s111 + $0x124] sm:$0xf]
      %v191 = vld [vmem:[%s111 + $0x128] sm:$0xf]
      %v192 = vld [vmem:[%s111 + $0x12c] sm:$0xf]
      %v193 = vld [vmem:[%s111 + $0x130] sm:$0xf]
      %v194 = vld [vmem:[%s111 + $0x134] sm:$0xf]
      %v195 = vld [vmem:[%s111 + $0x138] sm:$0xf]
      %v196 = vld [vmem:[%s111 + $0x13c] sm:$0xf]
      %v197 = vld [vmem:[%s111 + $0x140] sm:$0xf]
      %v198 = vld [vmem:[%s111 + $0x144] sm:$0xf]
      %v199 = vld [vmem:[%s111 + $0x148] sm:$0xf]
      %v200 = vld [vmem:[%s111 + $0x14c] sm:$0xf]
      %v201 = vld [vmem:[%s111 + $0x150] sm:$0xf]
      %v202 = vld [vmem:[%s111 + $0x154] sm:$0xf]
      %v203 = vld [vmem:[%s111 + $0x158] sm:$0xf]
      %v204 = vld [vmem:[%s111 + $0x15c] sm:$0xf]
      %v205 = vld [vmem:[%s111 + $0x160] sm:$0xf]
      %v206 = vld [vmem:[%s111 + $0x164] sm:$0xf]
      %v207 = vld [vmem:[%s111 + $0x168] sm:$0xf]
      %v208 = vld [vmem:[%s111 + $0x16c] sm:$0xf]
      %v209 = vld [vmem:[%s111 + $0x170] sm:$0xf]
      %v210 = vld [vmem:[%s111 + $0x174] sm:$0xf]
      %v211 = vld [vmem:[%s111 + $0x178] sm:$0xf]
      %v212 = vld [vmem:[%s111 + $0x17c] sm:$0xf]
      %v213 = vld [vmem:[%s111 + $0x180] sm:$0xf]
      %v214 = vld [vmem:[%s111 + $0x184] sm:$0xf]
      %v215 = vld [vmem:[%s111 + $0x188] sm:$0xf]
      %v216 = vld [vmem:[%s111 + $0x18c] sm:$0xf]
      %v217 = vld [vmem:[%s111 + $0x190] sm:$0xf]
      %v218 = vld [vmem:[%s111 + $0x194] sm:$0xf]
      %v219 = vld [vmem:[%s111 + $0x198] sm:$0xf]
      %v220 = vld [vmem:[%s111 + $0x19c] sm:$0xf]
      %v221 = vld [vmem:[%s111 + $0x1a0] sm:$0xf]
      %v222 = vld [vmem:[%s111 + $0x1a4] sm:$0xf]
      %v223 = vld [vmem:[%s111 + $0x1a8] sm:$0xf]
      %v224 = vld [vmem:[%s111 + $0x1ac] sm:$0xf]
      %v225 = vld [vmem:[%s111 + $0x1b0] sm:$0xf]
      %v226 = vld [vmem:[%s111 + $0x1b4] sm:$0xf]
      %v227 = vld [vmem:[%s111 + $0x1b8] sm:$0xf]
      %v228 = vld [vmem:[%s111 + $0x1bc] sm:$0xf]
      %v229 = vld [vmem:[%s111 + $0x1c0] sm:$0xf]
      %v230 = vld [vmem:[%s111 + $0x1c4] sm:$0xf]
      %v231 = vld [vmem:[%s111 + $0x1c8] sm:$0xf]
      %v232 = vld [vmem:[%s111 + $0x1cc] sm:$0xf]
      %v233 = vld [vmem:[%s111 + $0x1d0] sm:$0xf]
      %v234 = vld [vmem:[%s111 + $0x1d4] sm:$0xf]
      %v235 = vld [vmem:[%s111 + $0x1d8] sm:$0xf]
      %v236 = vld [vmem:[%s111 + $0x1dc] sm:$0xf]
      %v237 = vld [vmem:[%s111 + $0x1e0] sm:$0xf]
      %v238 = vld [vmem:[%s111 + $0x1e4] sm:$0xf]
      %v239 = vld [vmem:[%s111 + $0x1e8] sm:$0xf]
      %v240 = vld [vmem:[%s111 + $0x1ec] sm:$0xf]
      %v241 = vld [vmem:[%s111 + $0x1f0] sm:$0xf]
      %v242 = vld [vmem:[%s111 + $0x1f4] sm:$0xf]
      %v243 = vld [vmem:[%s111 + $0x1f8] sm:$0xf]
      %v244 = vld [vmem:[%s111 + $0x1fc] sm:$0xf]
      %v245 = vld [vmem:[%s111 + $0x200] sm:$0xf]
      %v246 = vld [vmem:[%s111 + $0x204] sm:$0xf]
      %v247 = vld [vmem:[%s111 + $0x208] sm:$0xf]
      %v248 = vld [vmem:[%s111 + $0x20c] sm:$0xf]
      %v249 = vld [vmem:[%s111 + $0x210] sm:$0xf]
      %v250 = vld [vmem:[%s111 + $0x214] sm:$0xf]
      %v251 = vld [vmem:[%s111 + $0x218] sm:$0xf]
      %v252 = vld [vmem:[%s111 + $0x21c] sm:$0xf]
      %v253 = vld [vmem:[%s111 + $0x220] sm:$0x1]
      %vm254 = vsmask.f32 3328
      %vm255 = vsmask.f32 7440
      %vm256 = vmor %vm254, %vm255
      %v258 = vshrl.u32 %v117, 16
      %v260 = vrot.slane %v258, 4
      %v261 = vshll.u32 %v117, 16
      %v263 = vrot.slane %v261, 5
      %v264 = vor.u32 %v260, %v263
      %v265 = vrot.slane %v264, 4
      %v267 = vshll.u32 %v118, 16
      %v269 = vrot.slane %v267, 5
      %v270 = vsel %vm256, %v265, %v269
      %v271 = vshrl.u32 %v118, 16
      %v273 = vrot.slane %v271, 4
      %v274 = vor.u32 %v273, %v269
      %v275 = vrot.slane %v274, 4
      %v277 = vshll.u32 %v119, 16
      %v279 = vrot.slane %v277, 5
      %v280 = vsel %vm256, %v275, %v279
      %v281 = vshrl.u32 %v119, 16
      %v283 = vrot.slane %v281, 4
      %v284 = vor.u32 %v283, %v279
      %v285 = vrot.slane %v284, 4
      %v287 = vshll.u32 %v120, 16
      %v289 = vrot.slane %v287, 5
      %v290 = vsel %vm256, %v285, %v289
      %v291 = vshrl.u32 %v120, 16
      %v293 = vrot.slane %v291, 4
      %v294 = vor.u32 %v293, %v289
      %v295 = vrot.slane %v294, 4
      %v297 = vshll.u32 %v121, 16
      %v299 = vrot.slane %v297, 5
      %v300 = vsel %vm256, %v295, %v299
      %v301 = vshrl.u32 %v121, 16
      %v303 = vrot.slane %v301, 4
      %v304 = vor.u32 %v303, %v299
      %v305 = vrot.slane %v304, 4
      %v307 = vshll.u32 %v122, 16
      %v309 = vrot.slane %v307, 5
      %v310 = vsel %vm256, %v305, %v309
      %v311 = vshrl.u32 %v122, 16
      %v313 = vrot.slane %v311, 4
      %v314 = vor.u32 %v313, %v309
      %v315 = vrot.slane %v314, 4
      %v317 = vshll.u32 %v123, 16
      %v319 = vrot.slane %v317, 5
      %v320 = vsel %vm256, %v315, %v319
      %v321 = vshrl.u32 %v123, 16
      %v323 = vrot.slane %v321, 4
      %v324 = vor.u32 %v323, %v319
      %v325 = vrot.slane %v324, 4
      %v327 = vshll.u32 %v124, 16
      %v329 = vrot.slane %v327, 5
      %v330 = vsel %vm256, %v325, %v329
      %v331 = vshrl.u32 %v124, 16
      %v333 = vrot.slane %v331, 4
      %v334 = vor.u32 %v333, %v329
      %v335 = vrot.slane %v334, 4
      %v337 = vshll.u32 %v125, 16
      %v339 = vrot.slane %v337, 5
      %v340 = vsel %vm256, %v335, %v339
      %v341 = vshrl.u32 %v125, 16
      %v343 = vrot.slane %v341, 4
      %v344 = vor.u32 %v343, %v339
      %v345 = vrot.slane %v344, 4
      %v347 = vshll.u32 %v126, 16
      %v349 = vrot.slane %v347, 5
      %v350 = vsel %vm256, %v345, %v349
      %v351 = vshrl.u32 %v126, 16
      %v353 = vrot.slane %v351, 4
      %v354 = vor.u32 %v353, %v349
      %v355 = vrot.slane %v354, 4
      %v357 = vshll.u32 %v127, 16
      %v359 = vrot.slane %v357, 5
      %v360 = vsel %vm256, %v355, %v359
      %v361 = vshrl.u32 %v127, 16
      %v363 = vrot.slane %v361, 4
      %v364 = vor.u32 %v363, %v359
      %v365 = vrot.slane %v364, 4
      %v367 = vshll.u32 %v128, 16
      %v369 = vrot.slane %v367, 5
      %v370 = vsel %vm256, %v365, %v369
      %v371 = vshrl.u32 %v128, 16
      %v373 = vrot.slane %v371, 4
      %v374 = vor.u32 %v373, %v369
      %v375 = vrot.slane %v374, 4
      %v377 = vshll.u32 %v129, 16
      %v379 = vrot.slane %v377, 5
      %v380 = vsel %vm256, %v375, %v379
      %v381 = vshrl.u32 %v129, 16
      %v383 = vrot.slane %v381, 4
      %v384 = vor.u32 %v383, %v379
      %v385 = vrot.slane %v384, 4
      %v387 = vshll.u32 %v130, 16
      %v389 = vrot.slane %v387, 5
      %v390 = vsel %vm256, %v385, %v389
      %v391 = vshrl.u32 %v130, 16
      %v393 = vrot.slane %v391, 4
      %v394 = vor.u32 %v393, %v389
      %v395 = vrot.slane %v394, 4
      %v397 = vshll.u32 %v131, 16
      %v399 = vrot.slane %v397, 5
      %v400 = vsel %vm256, %v395, %v399
      %v401 = vshrl.u32 %v131, 16
      %v403 = vrot.slane %v401, 4
      %v404 = vor.u32 %v403, %v399
      %v405 = vrot.slane %v404, 4
      %v407 = vshll.u32 %v132, 16
      %v409 = vrot.slane %v407, 5
      %v410 = vsel %vm256, %v405, %v409
      %v411 = vshrl.u32 %v132, 16
      %v413 = vrot.slane %v411, 4
      %v414 = vor.u32 %v413, %v409
      %v415 = vrot.slane %v414, 4
      %v417 = vshll.u32 %v133, 16
      %v419 = vrot.slane %v417, 5
      %v420 = vsel %vm256, %v415, %v419
      %v421 = vshrl.u32 %v133, 16
      %v423 = vrot.slane %v421, 4
      %v424 = vor.u32 %v423, %v419
      %v425 = vrot.slane %v424, 4
      %v427 = vshll.u32 %v134, 16
      %v429 = vrot.slane %v427, 5
      %v430 = vsel %vm256, %v425, %v429
      %v431 = vshrl.u32 %v134, 16
      %v433 = vrot.slane %v431, 4
      %v434 = vor.u32 %v433, %v429
      %v435 = vrot.slane %v434, 4
      %v437 = vshll.u32 %v135, 16
      %v439 = vrot.slane %v437, 5
      %v440 = vsel %vm256, %v435, %v439
      %v441 = vshrl.u32 %v135, 16
      %v443 = vrot.slane %v441, 4
      %v444 = vor.u32 %v443, %v439
      %v445 = vrot.slane %v444, 4
      %v447 = vshll.u32 %v136, 16
      %v449 = vrot.slane %v447, 5
      %v450 = vsel %vm256, %v445, %v449
      %v451 = vshrl.u32 %v136, 16
      %v453 = vrot.slane %v451, 4
      %v454 = vor.u32 %v453, %v449
      %v455 = vrot.slane %v454, 4
      %v457 = vshll.u32 %v137, 16
      %v459 = vrot.slane %v457, 5
      %v460 = vsel %vm256, %v455, %v459
      %v461 = vshrl.u32 %v137, 16
      %v463 = vrot.slane %v461, 4
      %v464 = vor.u32 %v463, %v459
      %v465 = vrot.slane %v464, 4
      %v467 = vshll.u32 %v138, 16
      %v469 = vrot.slane %v467, 5
      %v470 = vsel %vm256, %v465, %v469
      %v471 = vshrl.u32 %v138, 16
      %v473 = vrot.slane %v471, 4
      %v474 = vor.u32 %v473, %v469
      %v475 = vrot.slane %v474, 4
      %v477 = vshll.u32 %v139, 16
      %v479 = vrot.slane %v477, 5
      %v480 = vsel %vm256, %v475, %v479
      %v481 = vshrl.u32 %v139, 16
      %v483 = vrot.slane %v481, 4
      %v484 = vor.u32 %v483, %v479
      %v485 = vrot.slane %v484, 4
      %v487 = vshll.u32 %v140, 16
      %v489 = vrot.slane %v487, 5
      %v490 = vsel %vm256, %v485, %v489
      %v491 = vshrl.u32 %v140, 16
      %v493 = vrot.slane %v491, 4
      %v494 = vor.u32 %v493, %v489
      %v495 = vrot.slane %v494, 4
      %v497 = vshll.u32 %v141, 16
      %v499 = vrot.slane %v497, 5
      %v500 = vsel %vm256, %v495, %v499
      %v501 = vshrl.u32 %v141, 16
      %v503 = vrot.slane %v501, 4
      %v504 = vor.u32 %v503, %v499
      %v505 = vrot.slane %v504, 4
      %v507 = vshll.u32 %v142, 16
      %v509 = vrot.slane %v507, 5
      %v510 = vsel %vm256, %v505, %v509
      %v511 = vshrl.u32 %v142, 16
      %v513 = vrot.slane %v511, 4
      %v514 = vor.u32 %v513, %v509
      %v515 = vrot.slane %v514, 4
      %v517 = vshll.u32 %v143, 16
      %v519 = vrot.slane %v517, 5
      %v520 = vsel %vm256, %v515, %v519
      %v521 = vshrl.u32 %v143, 16
      %v523 = vrot.slane %v521, 4
      %v524 = vor.u32 %v523, %v519
      %v525 = vrot.slane %v524, 4
      %v527 = vshll.u32 %v144, 16
      %v529 = vrot.slane %v527, 5
      %v530 = vsel %vm256, %v525, %v529
      %v531 = vshrl.u32 %v144, 16
      %v533 = vrot.slane %v531, 4
      %v534 = vor.u32 %v533, %v529
      %v535 = vrot.slane %v534, 4
      %v537 = vshll.u32 %v145, 16
      %v539 = vrot.slane %v537, 5
      %v540 = vsel %vm256, %v535, %v539
      %v541 = vshrl.u32 %v145, 16
      %v543 = vrot.slane %v541, 4
      %v544 = vor.u32 %v543, %v539
      %v545 = vrot.slane %v544, 4
      %v547 = vshll.u32 %v146, 16
      %v549 = vrot.slane %v547, 5
      %v550 = vsel %vm256, %v545, %v549
      %v551 = vshrl.u32 %v146, 16
      %v553 = vrot.slane %v551, 4
      %v554 = vor.u32 %v553, %v549
      %v555 = vrot.slane %v554, 4
      %v557 = vshll.u32 %v147, 16
      %v559 = vrot.slane %v557, 5
      %v560 = vsel %vm256, %v555, %v559
      %v561 = vshrl.u32 %v147, 16
      %v563 = vrot.slane %v561, 4
      %v564 = vor.u32 %v563, %v559
      %v565 = vrot.slane %v564, 4
      %v567 = vshll.u32 %v148, 16
      %v569 = vrot.slane %v567, 5
      %v570 = vsel %vm256, %v565, %v569
      %v571 = vshrl.u32 %v148, 16
      %v573 = vrot.slane %v571, 4
      %v574 = vor.u32 %v573, %v569
      %v575 = vrot.slane %v574, 4
      %v577 = vshll.u32 %v149, 16
      %v579 = vrot.slane %v577, 5
      %v580 = vsel %vm256, %v575, %v579
      %v581 = vshrl.u32 %v149, 16
      %v583 = vrot.slane %v581, 4
      %v584 = vor.u32 %v583, %v579
      %v585 = vrot.slane %v584, 4
      %v587 = vshll.u32 %v150, 16
      %v589 = vrot.slane %v587, 5
      %v590 = vsel %vm256, %v585, %v589
      %v591 = vshrl.u32 %v150, 16
      %v593 = vrot.slane %v591, 4
      %v594 = vor.u32 %v593, %v589
      %v595 = vrot.slane %v594, 4
      %v597 = vshll.u32 %v151, 16
      %v599 = vrot.slane %v597, 5
      %v600 = vsel %vm256, %v595, %v599
      %v601 = vshrl.u32 %v151, 16
      %v603 = vrot.slane %v601, 4
      %v604 = vor.u32 %v603, %v599
      %v605 = vrot.slane %v604, 4
      %v607 = vshll.u32 %v152, 16
      %v609 = vrot.slane %v607, 5
      %v610 = vsel %vm256, %v605, %v609
      %v611 = vshrl.u32 %v152, 16
      %v613 = vrot.slane %v611, 4
      %v614 = vor.u32 %v613, %v609
      %v615 = vrot.slane %v614, 4
      %v617 = vshll.u32 %v153, 16
      %v619 = vrot.slane %v617, 5
      %v620 = vsel %vm256, %v615, %v619
      %v621 = vshrl.u32 %v153, 16
      %v623 = vrot.slane %v621, 4
      %v624 = vor.u32 %v623, %v619
      %v625 = vrot.slane %v624, 4
      %v627 = vshll.u32 %v154, 16
      %v629 = vrot.slane %v627, 5
      %v630 = vsel %vm256, %v625, %v629
      %v631 = vshrl.u32 %v154, 16
      %v633 = vrot.slane %v631, 4
      %v634 = vor.u32 %v633, %v629
      %v635 = vrot.slane %v634, 4
      %v637 = vshll.u32 %v155, 16
      %v639 = vrot.slane %v637, 5
      %v640 = vsel %vm256, %v635, %v639
      %v641 = vshrl.u32 %v155, 16
      %v643 = vrot.slane %v641, 4
      %v644 = vor.u32 %v643, %v639
      %v645 = vrot.slane %v644, 4
      %v647 = vshll.u32 %v156, 16
      %v649 = vrot.slane %v647, 5
      %v650 = vsel %vm256, %v645, %v649
      %v651 = vshrl.u32 %v156, 16
      %v653 = vrot.slane %v651, 4
      %v654 = vor.u32 %v653, %v649
      %v655 = vrot.slane %v654, 4
      %v657 = vshll.u32 %v157, 16
      %v659 = vrot.slane %v657, 5
      %v660 = vsel %vm256, %v655, %v659
      %v661 = vshrl.u32 %v157, 16
      %v663 = vrot.slane %v661, 4
      %v664 = vor.u32 %v663, %v659
      %v665 = vrot.slane %v664, 4
      %v667 = vshll.u32 %v158, 16
      %v669 = vrot.slane %v667, 5
      %v670 = vsel %vm256, %v665, %v669
      %v671 = vshrl.u32 %v158, 16
      %v673 = vrot.slane %v671, 4
      %v674 = vor.u32 %v673, %v669
      %v675 = vrot.slane %v674, 4
      %v677 = vshll.u32 %v159, 16
      %v679 = vrot.slane %v677, 5
      %v680 = vsel %vm256, %v675, %v679
      %v681 = vshrl.u32 %v159, 16
      %v683 = vrot.slane %v681, 4
      %v684 = vor.u32 %v683, %v679
      %v685 = vrot.slane %v684, 4
      %v687 = vshll.u32 %v160, 16
      %v689 = vrot.slane %v687, 5
      %v690 = vsel %vm256, %v685, %v689
      %v691 = vshrl.u32 %v160, 16
      %v693 = vrot.slane %v691, 4
      %v694 = vor.u32 %v693, %v689
      %v695 = vrot.slane %v694, 4
      %v697 = vshll.u32 %v161, 16
      %v699 = vrot.slane %v697, 5
      %v700 = vsel %vm256, %v695, %v699
      %v701 = vshrl.u32 %v161, 16
      %v703 = vrot.slane %v701, 4
      %v704 = vor.u32 %v703, %v699
      %v705 = vrot.slane %v704, 4
      %v707 = vshll.u32 %v162, 16
      %v709 = vrot.slane %v707, 5
      %v710 = vsel %vm256, %v705, %v709
      %v711 = vshrl.u32 %v162, 16
      %v713 = vrot.slane %v711, 4
      %v714 = vor.u32 %v713, %v709
      %v715 = vrot.slane %v714, 4
      %v717 = vshll.u32 %v163, 16
      %v719 = vrot.slane %v717, 5
      %v720 = vsel %vm256, %v715, %v719
      %v721 = vshrl.u32 %v163, 16
      %v723 = vrot.slane %v721, 4
      %v724 = vor.u32 %v723, %v719
      %v725 = vrot.slane %v724, 4
      %v727 = vshll.u32 %v164, 16
      %v729 = vrot.slane %v727, 5
      %v730 = vsel %vm256, %v725, %v729
      %v731 = vshrl.u32 %v164, 16
      %v733 = vrot.slane %v731, 4
      %v734 = vor.u32 %v733, %v729
      %v735 = vrot.slane %v734, 4
      %v737 = vshll.u32 %v165, 16
      %v739 = vrot.slane %v737, 5
      %v740 = vsel %vm256, %v735, %v739
      %v741 = vshrl.u32 %v165, 16
      %v743 = vrot.slane %v741, 4
      %v744 = vor.u32 %v743, %v739
      %v745 = vrot.slane %v744, 4
      %v747 = vshll.u32 %v166, 16
      %v749 = vrot.slane %v747, 5
      %v750 = vsel %vm256, %v745, %v749
      %v751 = vshrl.u32 %v166, 16
      %v753 = vrot.slane %v751, 4
      %v754 = vor.u32 %v753, %v749
      %v755 = vrot.slane %v754, 4
      %v757 = vshll.u32 %v167, 16
      %v759 = vrot.slane %v757, 5
      %v760 = vsel %vm256, %v755, %v759
      %v761 = vshrl.u32 %v167, 16
      %v763 = vrot.slane %v761, 4
      %v764 = vor.u32 %v763, %v759
      %v765 = vrot.slane %v764, 4
      %v767 = vshll.u32 %v168, 16
      %v769 = vrot.slane %v767, 5
      %v770 = vsel %vm256, %v765, %v769
      %v771 = vshrl.u32 %v168, 16
      %v773 = vrot.slane %v771, 4
      %v774 = vor.u32 %v773, %v769
      %v775 = vrot.slane %v774, 4
      %v777 = vshll.u32 %v169, 16
      %v779 = vrot.slane %v777, 5
      %v780 = vsel %vm256, %v775, %v779
      %v781 = vshrl.u32 %v169, 16
      %v783 = vrot.slane %v781, 4
      %v784 = vor.u32 %v783, %v779
      %v785 = vrot.slane %v784, 4
      %v787 = vshll.u32 %v170, 16
      %v789 = vrot.slane %v787, 5
      %v790 = vsel %vm256, %v785, %v789
      %v791 = vshrl.u32 %v170, 16
      %v793 = vrot.slane %v791, 4
      %v794 = vor.u32 %v793, %v789
      %v795 = vrot.slane %v794, 4
      %v797 = vshll.u32 %v171, 16
      %v799 = vrot.slane %v797, 5
      %v800 = vsel %vm256, %v795, %v799
      %v801 = vshrl.u32 %v171, 16
      %v803 = vrot.slane %v801, 4
      %v804 = vor.u32 %v803, %v799
      %v805 = vrot.slane %v804, 4
      %v807 = vshll.u32 %v172, 16
      %v809 = vrot.slane %v807, 5
      %v810 = vsel %vm256, %v805, %v809
      %v811 = vshrl.u32 %v172, 16
      %v813 = vrot.slane %v811, 4
      %v814 = vor.u32 %v813, %v809
      %v815 = vrot.slane %v814, 4
      %v817 = vshll.u32 %v173, 16
      %v819 = vrot.slane %v817, 5
      %v820 = vsel %vm256, %v815, %v819
      %v821 = vshrl.u32 %v173, 16
      %v823 = vrot.slane %v821, 4
      %v824 = vor.u32 %v823, %v819
      %v825 = vrot.slane %v824, 4
      %v827 = vshll.u32 %v174, 16
      %v829 = vrot.slane %v827, 5
      %v830 = vsel %vm256, %v825, %v829
      %v831 = vshrl.u32 %v174, 16
      %v833 = vrot.slane %v831, 4
      %v834 = vor.u32 %v833, %v829
      %v835 = vrot.slane %v834, 4
      %v837 = vshll.u32 %v175, 16
      %v839 = vrot.slane %v837, 5
      %v840 = vsel %vm256, %v835, %v839
      %v841 = vshrl.u32 %v175, 16
      %v843 = vrot.slane %v841, 4
      %v844 = vor.u32 %v843, %v839
      %v845 = vrot.slane %v844, 4
      %v847 = vshll.u32 %v176, 16
      %v849 = vrot.slane %v847, 5
      %v850 = vsel %vm256, %v845, %v849
      %v851 = vshrl.u32 %v176, 16
      %v853 = vrot.slane %v851, 4
      %v854 = vor.u32 %v853, %v849
      %v855 = vrot.slane %v854, 4
      %v857 = vshll.u32 %v177, 16
      %v859 = vrot.slane %v857, 5
      %v860 = vsel %vm256, %v855, %v859
      %v861 = vshrl.u32 %v177, 16
      %v863 = vrot.slane %v861, 4
      %v864 = vor.u32 %v863, %v859
      %v865 = vrot.slane %v864, 4
      %v867 = vshll.u32 %v178, 16
      %v869 = vrot.slane %v867, 5
      %v870 = vsel %vm256, %v865, %v869
      %v871 = vshrl.u32 %v178, 16
      %v873 = vrot.slane %v871, 4
      %v874 = vor.u32 %v873, %v869
      %v875 = vrot.slane %v874, 4
      %v877 = vshll.u32 %v179, 16
      %v879 = vrot.slane %v877, 5
      %v880 = vsel %vm256, %v875, %v879
      %v881 = vshrl.u32 %v179, 16
      %v883 = vrot.slane %v881, 4
      %v884 = vor.u32 %v883, %v879
      %v885 = vrot.slane %v884, 4
      %v887 = vshll.u32 %v180, 16
      %v889 = vrot.slane %v887, 5
      %v890 = vsel %vm256, %v885, %v889
      %v891 = vshrl.u32 %v180, 16
      %v893 = vrot.slane %v891, 4
      %v894 = vor.u32 %v893, %v889
      %v895 = vrot.slane %v894, 4
      %v897 = vshll.u32 %v181, 16
      %v899 = vrot.slane %v897, 5
      %v900 = vsel %vm256, %v895, %v899
      %v901 = vshrl.u32 %v181, 16
      %v903 = vrot.slane %v901, 4
      %v904 = vor.u32 %v903, %v899
      %v905 = vrot.slane %v904, 4
      %v907 = vshll.u32 %v182, 16
      %v909 = vrot.slane %v907, 5
      %v910 = vsel %vm256, %v905, %v909
      %v911 = vshrl.u32 %v182, 16
      %v913 = vrot.slane %v911, 4
      %v914 = vor.u32 %v913, %v909
      %v915 = vrot.slane %v914, 4
      %v917 = vshll.u32 %v183, 16
      %v919 = vrot.slane %v917, 5
      %v920 = vsel %vm256, %v915, %v919
      %v921 = vshrl.u32 %v183, 16
      %v923 = vrot.slane %v921, 4
      %v924 = vor.u32 %v923, %v919
      %v925 = vrot.slane %v924, 4
      %v927 = vshll.u32 %v184, 16
      %v929 = vrot.slane %v927, 5
      %v930 = vsel %vm256, %v925, %v929
      %v931 = vshrl.u32 %v184, 16
      %v933 = vrot.slane %v931, 4
      %v934 = vor.u32 %v933, %v929
      %v935 = vrot.slane %v934, 4
      %v937 = vshll.u32 %v185, 16
      %v939 = vrot.slane %v937, 5
      %v940 = vsel %vm256, %v935, %v939
      %v941 = vshrl.u32 %v185, 16
      %v943 = vrot.slane %v941, 4
      %v944 = vor.u32 %v943, %v939
      %v945 = vrot.slane %v944, 4
      %v947 = vshll.u32 %v186, 16
      %v949 = vrot.slane %v947, 5
      %v950 = vsel %vm256, %v945, %v949
      %v951 = vshrl.u32 %v186, 16
      %v953 = vrot.slane %v951, 4
      %v954 = vor.u32 %v953, %v949
      %v955 = vrot.slane %v954, 4
      %v957 = vshll.u32 %v187, 16
      %v959 = vrot.slane %v957, 5
      %v960 = vsel %vm256, %v955, %v959
      %v961 = vshrl.u32 %v187, 16
      %v963 = vrot.slane %v961, 4
      %v964 = vor.u32 %v963, %v959
      %v965 = vrot.slane %v964, 4
      %v967 = vshll.u32 %v188, 16
      %v969 = vrot.slane %v967, 5
      %v970 = vsel %vm256, %v965, %v969
      %v971 = vshrl.u32 %v188, 16
      %v973 = vrot.slane %v971, 4
      %v974 = vor.u32 %v973, %v969
      %v975 = vrot.slane %v974, 4
      %v977 = vshll.u32 %v189, 16
      %v979 = vrot.slane %v977, 5
      %v980 = vsel %vm256, %v975, %v979
      %v981 = vshrl.u32 %v189, 16
      %v983 = vrot.slane %v981, 4
      %v984 = vor.u32 %v983, %v979
      %v985 = vrot.slane %v984, 4
      %v987 = vshll.u32 %v190, 16
      %v989 = vrot.slane %v987, 5
      %v990 = vsel %vm256, %v985, %v989
      %v991 = vshrl.u32 %v190, 16
      %v993 = vrot.slane %v991, 4
      %v994 = vor.u32 %v993, %v989
      %v995 = vrot.slane %v994, 4
      %v997 = vshll.u32 %v191, 16
      %v999 = vrot.slane %v997, 5
      %v1000 = vsel %vm256, %v995, %v999
      %v1001 = vshrl.u32 %v191, 16
      %v1003 = vrot.slane %v1001, 4
      %v1004 = vor.u32 %v1003, %v999
      %v1005 = vrot.slane %v1004, 4
      %v1007 = vshll.u32 %v192, 16
      %v1009 = vrot.slane %v1007, 5
      %v1010 = vsel %vm256, %v1005, %v1009
      %v1011 = vshrl.u32 %v192, 16
      %v1013 = vrot.slane %v1011, 4
      %v1014 = vor.u32 %v1013, %v1009
      %v1015 = vrot.slane %v1014, 4
      %v1017 = vshll.u32 %v193, 16
      %v1019 = vrot.slane %v1017, 5
      %v1020 = vsel %vm256, %v1015, %v1019
      %v1021 = vshrl.u32 %v193, 16
      %v1023 = vrot.slane %v1021, 4
      %v1024 = vor.u32 %v1023, %v1019
      %v1025 = vrot.slane %v1024, 4
      %v1027 = vshll.u32 %v194, 16
      %v1029 = vrot.slane %v1027, 5
      %v1030 = vsel %vm256, %v1025, %v1029
      %v1031 = vshrl.u32 %v194, 16
      %v1033 = vrot.slane %v1031, 4
      %v1034 = vor.u32 %v1033, %v1029
      %v1035 = vrot.slane %v1034, 4
      %v1037 = vshll.u32 %v195, 16
      %v1039 = vrot.slane %v1037, 5
      %v1040 = vsel %vm256, %v1035, %v1039
      %v1041 = vshrl.u32 %v195, 16
      %v1043 = vrot.slane %v1041, 4
      %v1044 = vor.u32 %v1043, %v1039
      %v1045 = vrot.slane %v1044, 4
      %v1047 = vshll.u32 %v196, 16
      %v1049 = vrot.slane %v1047, 5
      %v1050 = vsel %vm256, %v1045, %v1049
      %v1051 = vshrl.u32 %v196, 16
      %v1053 = vrot.slane %v1051, 4
      %v1054 = vor.u32 %v1053, %v1049
      %v1055 = vrot.slane %v1054, 4
      %v1057 = vshll.u32 %v197, 16
      %v1059 = vrot.slane %v1057, 5
      %v1060 = vsel %vm256, %v1055, %v1059
      %v1061 = vshrl.u32 %v197, 16
      %v1063 = vrot.slane %v1061, 4
      %v1064 = vor.u32 %v1063, %v1059
      %v1065 = vrot.slane %v1064, 4
      %v1067 = vshll.u32 %v198, 16
      %v1069 = vrot.slane %v1067, 5
      %v1070 = vsel %vm256, %v1065, %v1069
      %v1071 = vshrl.u32 %v198, 16
      %v1073 = vrot.slane %v1071, 4
      %v1074 = vor.u32 %v1073, %v1069
      %v1075 = vrot.slane %v1074, 4
      %v1077 = vshll.u32 %v199, 16
      %v1079 = vrot.slane %v1077, 5
      %v1080 = vsel %vm256, %v1075, %v1079
      %v1081 = vshrl.u32 %v199, 16
      %v1083 = vrot.slane %v1081, 4
      %v1084 = vor.u32 %v1083, %v1079
      %v1085 = vrot.slane %v1084, 4
      %v1087 = vshll.u32 %v200, 16
      %v1089 = vrot.slane %v1087, 5
      %v1090 = vsel %vm256, %v1085, %v1089
      %v1091 = vshrl.u32 %v200, 16
      %v1093 = vrot.slane %v1091, 4
      %v1094 = vor.u32 %v1093, %v1089
      %v1095 = vrot.slane %v1094, 4
      %v1097 = vshll.u32 %v201, 16
      %v1099 = vrot.slane %v1097, 5
      %v1100 = vsel %vm256, %v1095, %v1099
      %v1101 = vshrl.u32 %v201, 16
      %v1103 = vrot.slane %v1101, 4
      %v1104 = vor.u32 %v1103, %v1099
      %v1105 = vrot.slane %v1104, 4
      %v1107 = vshll.u32 %v202, 16
      %v1109 = vrot.slane %v1107, 5
      %v1110 = vsel %vm256, %v1105, %v1109
      %v1111 = vshrl.u32 %v202, 16
      %v1113 = vrot.slane %v1111, 4
      %v1114 = vor.u32 %v1113, %v1109
      %v1115 = vrot.slane %v1114, 4
      %v1117 = vshll.u32 %v203, 16
      %v1119 = vrot.slane %v1117, 5
      %v1120 = vsel %vm256, %v1115, %v1119
      %v1121 = vshrl.u32 %v203, 16
      %v1123 = vrot.slane %v1121, 4
      %v1124 = vor.u32 %v1123, %v1119
      %v1125 = vrot.slane %v1124, 4
      %v1127 = vshll.u32 %v204, 16
      %v1129 = vrot.slane %v1127, 5
      %v1130 = vsel %vm256, %v1125, %v1129
      %v1131 = vshrl.u32 %v204, 16
      %v1133 = vrot.slane %v1131, 4
      %v1134 = vor.u32 %v1133, %v1129
      %v1135 = vrot.slane %v1134, 4
      %v1137 = vshll.u32 %v205, 16
      %v1139 = vrot.slane %v1137, 5
      %v1140 = vsel %vm256, %v1135, %v1139
      %v1141 = vshrl.u32 %v205, 16
      %v1143 = vrot.slane %v1141, 4
      %v1144 = vor.u32 %v1143, %v1139
      %v1145 = vrot.slane %v1144, 4
      %v1147 = vshll.u32 %v206, 16
      %v1149 = vrot.slane %v1147, 5
      %v1150 = vsel %vm256, %v1145, %v1149
      %v1151 = vshrl.u32 %v206, 16
      %v1153 = vrot.slane %v1151, 4
      %v1154 = vor.u32 %v1153, %v1149
      %v1155 = vrot.slane %v1154, 4
      %v1157 = vshll.u32 %v207, 16
      %v1159 = vrot.slane %v1157, 5
      %v1160 = vsel %vm256, %v1155, %v1159
      %v1161 = vshrl.u32 %v207, 16
      %v1163 = vrot.slane %v1161, 4
      %v1164 = vor.u32 %v1163, %v1159
      %v1165 = vrot.slane %v1164, 4
      %v1167 = vshll.u32 %v208, 16
      %v1169 = vrot.slane %v1167, 5
      %v1170 = vsel %vm256, %v1165, %v1169
      %v1171 = vshrl.u32 %v208, 16
      %v1173 = vrot.slane %v1171, 4
      %v1174 = vor.u32 %v1173, %v1169
      %v1175 = vrot.slane %v1174, 4
      %v1177 = vshll.u32 %v209, 16
      %v1179 = vrot.slane %v1177, 5
      %v1180 = vsel %vm256, %v1175, %v1179
      %v1181 = vshrl.u32 %v209, 16
      %v1183 = vrot.slane %v1181, 4
      %v1184 = vor.u32 %v1183, %v1179
      %v1185 = vrot.slane %v1184, 4
      %v1187 = vshll.u32 %v210, 16
      %v1189 = vrot.slane %v1187, 5
      %v1190 = vsel %vm256, %v1185, %v1189
      %v1191 = vshrl.u32 %v210, 16
      %v1193 = vrot.slane %v1191, 4
      %v1194 = vor.u32 %v1193, %v1189
      %v1195 = vrot.slane %v1194, 4
      %v1197 = vshll.u32 %v211, 16
      %v1199 = vrot.slane %v1197, 5
      %v1200 = vsel %vm256, %v1195, %v1199
      %v1201 = vshrl.u32 %v211, 16
      %v1203 = vrot.slane %v1201, 4
      %v1204 = vor.u32 %v1203, %v1199
      %v1205 = vrot.slane %v1204, 4
      %v1207 = vshll.u32 %v212, 16
      %v1209 = vrot.slane %v1207, 5
      %v1210 = vsel %vm256, %v1205, %v1209
      %v1211 = vshrl.u32 %v212, 16
      %v1213 = vrot.slane %v1211, 4
      %v1214 = vor.u32 %v1213, %v1209
      %v1215 = vrot.slane %v1214, 4
      %v1217 = vshll.u32 %v213, 16
      %v1219 = vrot.slane %v1217, 5
      %v1220 = vsel %vm256, %v1215, %v1219
      %v1221 = vshrl.u32 %v213, 16
      %v1223 = vrot.slane %v1221, 4
      %v1224 = vor.u32 %v1223, %v1219
      %v1225 = vrot.slane %v1224, 4
      %v1227 = vshll.u32 %v214, 16
      %v1229 = vrot.slane %v1227, 5
      %v1230 = vsel %vm256, %v1225, %v1229
      %v1231 = vshrl.u32 %v214, 16
      %v1233 = vrot.slane %v1231, 4
      %v1234 = vor.u32 %v1233, %v1229
      %v1235 = vrot.slane %v1234, 4
      %v1237 = vshll.u32 %v215, 16
      %v1239 = vrot.slane %v1237, 5
      %v1240 = vsel %vm256, %v1235, %v1239
      %v1241 = vshrl.u32 %v215, 16
      %v1243 = vrot.slane %v1241, 4
      %v1244 = vor.u32 %v1243, %v1239
      %v1245 = vrot.slane %v1244, 4
      %v1247 = vshll.u32 %v216, 16
      %v1249 = vrot.slane %v1247, 5
      %v1250 = vsel %vm256, %v1245, %v1249
      %v1251 = vshrl.u32 %v216, 16
      %v1253 = vrot.slane %v1251, 4
      %v1254 = vor.u32 %v1253, %v1249
      %v1255 = vrot.slane %v1254, 4
      %v1257 = vshll.u32 %v217, 16
      %v1259 = vrot.slane %v1257, 5
      %v1260 = vsel %vm256, %v1255, %v1259
      %v1261 = vshrl.u32 %v217, 16
      %v1263 = vrot.slane %v1261, 4
      %v1264 = vor.u32 %v1263, %v1259
      %v1265 = vrot.slane %v1264, 4
      %v1267 = vshll.u32 %v218, 16
      %v1269 = vrot.slane %v1267, 5
      %v1270 = vsel %vm256, %v1265, %v1269
      %v1271 = vshrl.u32 %v218, 16
      %v1273 = vrot.slane %v1271, 4
      %v1274 = vor.u32 %v1273, %v1269
      %v1275 = vrot.slane %v1274, 4
      %v1277 = vshll.u32 %v219, 16
      %v1279 = vrot.slane %v1277, 5
      %v1280 = vsel %vm256, %v1275, %v1279
      %v1281 = vshrl.u32 %v219, 16
      %v1283 = vrot.slane %v1281, 4
      %v1284 = vor.u32 %v1283, %v1279
      %v1285 = vrot.slane %v1284, 4
      %v1287 = vshll.u32 %v220, 16
      %v1289 = vrot.slane %v1287, 5
      %v1290 = vsel %vm256, %v1285, %v1289
      %v1291 = vshrl.u32 %v220, 16
      %v1293 = vrot.slane %v1291, 4
      %v1294 = vor.u32 %v1293, %v1289
      %v1295 = vrot.slane %v1294, 4
      %v1297 = vshll.u32 %v221, 16
      %v1299 = vrot.slane %v1297, 5
      %v1300 = vsel %vm256, %v1295, %v1299
      %v1301 = vshrl.u32 %v221, 16
      %v1303 = vrot.slane %v1301, 4
      %v1304 = vor.u32 %v1303, %v1299
      %v1305 = vrot.slane %v1304, 4
      %v1307 = vshll.u32 %v222, 16
      %v1309 = vrot.slane %v1307, 5
      %v1310 = vsel %vm256, %v1305, %v1309
      %v1311 = vshrl.u32 %v222, 16
      %v1313 = vrot.slane %v1311, 4
      %v1314 = vor.u32 %v1313, %v1309
      %v1315 = vrot.slane %v1314, 4
      %v1317 = vshll.u32 %v223, 16
      %v1319 = vrot.slane %v1317, 5
      %v1320 = vsel %vm256, %v1315, %v1319
      %v1321 = vshrl.u32 %v223, 16
      %v1323 = vrot.slane %v1321, 4
      %v1324 = vor.u32 %v1323, %v1319
      %v1325 = vrot.slane %v1324, 4
      %v1327 = vshll.u32 %v224, 16
      %v1329 = vrot.slane %v1327, 5
      %v1330 = vsel %vm256, %v1325, %v1329
      %v1331 = vshrl.u32 %v224, 16
      %v1333 = vrot.slane %v1331, 4
      %v1334 = vor.u32 %v1333, %v1329
      %v1335 = vrot.slane %v1334, 4
      %v1337 = vshll.u32 %v225, 16
      %v1339 = vrot.slane %v1337, 5
      %v1340 = vsel %vm256, %v1335, %v1339
      %v1341 = vshrl.u32 %v225, 16
      %v1343 = vrot.slane %v1341, 4
      %v1344 = vor.u32 %v1343, %v1339
      %v1345 = vrot.slane %v1344, 4
      %v1347 = vshll.u32 %v226, 16
      %v1349 = vrot.slane %v1347, 5
      %v1350 = vsel %vm256, %v1345, %v1349
      %v1351 = vshrl.u32 %v226, 16
      %v1353 = vrot.slane %v1351, 4
      %v1354 = vor.u32 %v1353, %v1349
      %v1355 = vrot.slane %v1354, 4
      %v1357 = vshll.u32 %v227, 16
      %v1359 = vrot.slane %v1357, 5
      %v1360 = vsel %vm256, %v1355, %v1359
      %v1361 = vshrl.u32 %v227, 16
      %v1363 = vrot.slane %v1361, 4
      %v1364 = vor.u32 %v1363, %v1359
      %v1365 = vrot.slane %v1364, 4
      %v1367 = vshll.u32 %v228, 16
      %v1369 = vrot.slane %v1367, 5
      %v1370 = vsel %vm256, %v1365, %v1369
      %v1371 = vshrl.u32 %v228, 16
      %v1373 = vrot.slane %v1371, 4
      %v1374 = vor.u32 %v1373, %v1369
      %v1375 = vrot.slane %v1374, 4
      %v1377 = vshll.u32 %v229, 16
      %v1379 = vrot.slane %v1377, 5
      %v1380 = vsel %vm256, %v1375, %v1379
      %v1381 = vshrl.u32 %v229, 16
      %v1383 = vrot.slane %v1381, 4
      %v1384 = vor.u32 %v1383, %v1379
      %v1385 = vrot.slane %v1384, 4
      %v1387 = vshll.u32 %v230, 16
      %v1389 = vrot.slane %v1387, 5
      %v1390 = vsel %vm256, %v1385, %v1389
      %v1391 = vshrl.u32 %v230, 16
      %v1393 = vrot.slane %v1391, 4
      %v1394 = vor.u32 %v1393, %v1389
      %v1395 = vrot.slane %v1394, 4
      %v1397 = vshll.u32 %v231, 16
      %v1399 = vrot.slane %v1397, 5
      %v1400 = vsel %vm256, %v1395, %v1399
      %v1401 = vshrl.u32 %v231, 16
      %v1403 = vrot.slane %v1401, 4
      %v1404 = vor.u32 %v1403, %v1399
      %v1405 = vrot.slane %v1404, 4
      %v1407 = vshll.u32 %v232, 16
      %v1409 = vrot.slane %v1407, 5
      %v1410 = vsel %vm256, %v1405, %v1409
      %v1411 = vshrl.u32 %v232, 16
      %v1413 = vrot.slane %v1411, 4
      %v1414 = vor.u32 %v1413, %v1409
      %v1415 = vrot.slane %v1414, 4
      %v1417 = vshll.u32 %v233, 16
      %v1419 = vrot.slane %v1417, 5
      %v1420 = vsel %vm256, %v1415, %v1419
      %v1421 = vshrl.u32 %v233, 16
      %v1423 = vrot.slane %v1421, 4
      %v1424 = vor.u32 %v1423, %v1419
      %v1425 = vrot.slane %v1424, 4
      %v1427 = vshll.u32 %v234, 16
      %v1429 = vrot.slane %v1427, 5
      %v1430 = vsel %vm256, %v1425, %v1429
      %v1431 = vshrl.u32 %v234, 16
      %v1433 = vrot.slane %v1431, 4
      %v1434 = vor.u32 %v1433, %v1429
      %v1435 = vrot.slane %v1434, 4
      %v1437 = vshll.u32 %v235, 16
      %v1439 = vrot.slane %v1437, 5
      %v1440 = vsel %vm256, %v1435, %v1439
      %v1441 = vshrl.u32 %v235, 16
      %v1443 = vrot.slane %v1441, 4
      %v1444 = vor.u32 %v1443, %v1439
      %v1445 = vrot.slane %v1444, 4
      %v1447 = vshll.u32 %v236, 16
      %v1449 = vrot.slane %v1447, 5
      %v1450 = vsel %vm256, %v1445, %v1449
      %v1451 = vshrl.u32 %v236, 16
      %v1453 = vrot.slane %v1451, 4
      %v1454 = vor.u32 %v1453, %v1449
      %v1455 = vrot.slane %v1454, 4
      %v1457 = vshll.u32 %v237, 16
      %v1459 = vrot.slane %v1457, 5
      %v1460 = vsel %vm256, %v1455, %v1459
      %v1461 = vshrl.u32 %v237, 16
      %v1463 = vrot.slane %v1461, 4
      %v1464 = vor.u32 %v1463, %v1459
      %v1465 = vrot.slane %v1464, 4
      %v1467 = vshll.u32 %v238, 16
      %v1469 = vrot.slane %v1467, 5
      %v1470 = vsel %vm256, %v1465, %v1469
      %v1471 = vshrl.u32 %v238, 16
      %v1473 = vrot.slane %v1471, 4
      %v1474 = vor.u32 %v1473, %v1469
      %v1475 = vrot.slane %v1474, 4
      %v1477 = vshll.u32 %v239, 16
      %v1479 = vrot.slane %v1477, 5
      %v1480 = vsel %vm256, %v1475, %v1479
      %v1481 = vshrl.u32 %v239, 16
      %v1483 = vrot.slane %v1481, 4
      %v1484 = vor.u32 %v1483, %v1479
      %v1485 = vrot.slane %v1484, 4
      %v1487 = vshll.u32 %v240, 16
      %v1489 = vrot.slane %v1487, 5
      %v1490 = vsel %vm256, %v1485, %v1489
      %v1491 = vshrl.u32 %v240, 16
      %v1493 = vrot.slane %v1491, 4
      %v1494 = vor.u32 %v1493, %v1489
      %v1495 = vrot.slane %v1494, 4
      %v1497 = vshll.u32 %v241, 16
      %v1499 = vrot.slane %v1497, 5
      %v1500 = vsel %vm256, %v1495, %v1499
      %v1501 = vshrl.u32 %v241, 16
      %v1503 = vrot.slane %v1501, 4
      %v1504 = vor.u32 %v1503, %v1499
      %v1505 = vrot.slane %v1504, 4
      %v1507 = vshll.u32 %v242, 16
      %v1509 = vrot.slane %v1507, 5
      %v1510 = vsel %vm256, %v1505, %v1509
      %v1511 = vshrl.u32 %v242, 16
      %v1513 = vrot.slane %v1511, 4
      %v1514 = vor.u32 %v1513, %v1509
      %v1515 = vrot.slane %v1514, 4
      %v1517 = vshll.u32 %v243, 16
      %v1519 = vrot.slane %v1517, 5
      %v1520 = vsel %vm256, %v1515, %v1519
      %v1521 = vshrl.u32 %v243, 16
      %v1523 = vrot.slane %v1521, 4
      %v1524 = vor.u32 %v1523, %v1519
      %v1525 = vrot.slane %v1524, 4
      %v1527 = vshll.u32 %v244, 16
      %v1529 = vrot.slane %v1527, 5
      %v1530 = vsel %vm256, %v1525, %v1529
      %v1531 = vshrl.u32 %v244, 16
      %v1533 = vrot.slane %v1531, 4
      %v1534 = vor.u32 %v1533, %v1529
      %v1535 = vrot.slane %v1534, 4
      %v1537 = vshll.u32 %v245, 16
      %v1539 = vrot.slane %v1537, 5
      %v1540 = vsel %vm256, %v1535, %v1539
      %v1541 = vshrl.u32 %v245, 16
      %v1543 = vrot.slane %v1541, 4
      %v1544 = vor.u32 %v1543, %v1539
      %v1545 = vrot.slane %v1544, 4
      %v1547 = vshll.u32 %v246, 16
      %v1549 = vrot.slane %v1547, 5
      %v1550 = vsel %vm256, %v1545, %v1549
      %v1551 = vshrl.u32 %v246, 16
      %v1553 = vrot.slane %v1551, 4
      %v1554 = vor.u32 %v1553, %v1549
      %v1555 = vrot.slane %v1554, 4
      %v1557 = vshll.u32 %v247, 16
      %v1559 = vrot.slane %v1557, 5
      %v1560 = vsel %vm256, %v1555, %v1559
      %v1561 = vshrl.u32 %v247, 16
      %v1563 = vrot.slane %v1561, 4
      %v1564 = vor.u32 %v1563, %v1559
      %v1565 = vrot.slane %v1564, 4
      %v1567 = vshll.u32 %v248, 16
      %v1569 = vrot.slane %v1567, 5
      %v1570 = vsel %vm256, %v1565, %v1569
      %v1571 = vshrl.u32 %v248, 16
      %v1573 = vrot.slane %v1571, 4
      %v1574 = vor.u32 %v1573, %v1569
      %v1575 = vrot.slane %v1574, 4
      %v1577 = vshll.u32 %v249, 16
      %v1579 = vrot.slane %v1577, 5
      %v1580 = vsel %vm256, %v1575, %v1579
      %v1581 = vshrl.u32 %v249, 16
      %v1583 = vrot.slane %v1581, 4
      %v1584 = vor.u32 %v1583, %v1579
      %v1585 = vrot.slane %v1584, 4
      %v1587 = vshll.u32 %v250, 16
      %v1589 = vrot.slane %v1587, 5
      %v1590 = vsel %vm256, %v1585, %v1589
      %v1591 = vshrl.u32 %v250, 16
      %v1593 = vrot.slane %v1591, 4
      %v1594 = vor.u32 %v1593, %v1589
      %v1595 = vrot.slane %v1594, 4
      %v1597 = vshll.u32 %v251, 16
      %v1599 = vrot.slane %v1597, 5
      %v1600 = vsel %vm256, %v1595, %v1599
      %v1601 = vshrl.u32 %v251, 16
      %v1603 = vrot.slane %v1601, 4
      %v1604 = vor.u32 %v1603, %v1599
      %v1605 = vrot.slane %v1604, 4
      %v1607 = vshll.u32 %v252, 16
      %v1609 = vrot.slane %v1607, 5
      %v1610 = vsel %vm256, %v1605, %v1609
      %v1611 = vshrl.u32 %v252, 16
      %v1613 = vrot.slane %v1611, 4
      %v1614 = vor.u32 %v1613, %v1609
      %v1615 = vrot.slane %v1614, 4
      %v1617 = vshll.u32 %v253, 16
      %v1619 = vrot.slane %v1617, 5
      %v1620 = vsel %vm256, %v1615, %v1619
      %v1757 = vmax.bf16 %v117, %v270
      %v1758 = vmax.bf16 %v118, %v280
      %v1759 = vmax.bf16 %v119, %v290
      %v1760 = vmax.bf16 %v120, %v300
      %v1761 = vmax.bf16 %v121, %v310
      %v1762 = vmax.bf16 %v122, %v320
      %v1763 = vmax.bf16 %v123, %v330
      %v1764 = vmax.bf16 %v124, %v340
      %v1765 = vmax.bf16 %v125, %v350
      %v1766 = vmax.bf16 %v126, %v360
      %v1767 = vmax.bf16 %v127, %v370
      %v1768 = vmax.bf16 %v128, %v380
      %v1769 = vmax.bf16 %v129, %v390
      %v1770 = vmax.bf16 %v130, %v400
      %v1771 = vmax.bf16 %v131, %v410
      %v1772 = vmax.bf16 %v132, %v420
      %v1773 = vmax.bf16 %v133, %v430
      %v1774 = vmax.bf16 %v134, %v440
      %v1775 = vmax.bf16 %v135, %v450
      %v1776 = vmax.bf16 %v136, %v460
      %v1777 = vmax.bf16 %v137, %v470
      %v1778 = vmax.bf16 %v138, %v480
      %v1779 = vmax.bf16 %v139, %v490
      %v1780 = vmax.bf16 %v140, %v500
      %v1781 = vmax.bf16 %v141, %v510
      %v1782 = vmax.bf16 %v142, %v520
      %v1783 = vmax.bf16 %v143, %v530
      %v1784 = vmax.bf16 %v144, %v540
      %v1785 = vmax.bf16 %v145, %v550
      %v1786 = vmax.bf16 %v146, %v560
      %v1787 = vmax.bf16 %v147, %v570
      %v1788 = vmax.bf16 %v148, %v580
      %v1789 = vmax.bf16 %v149, %v590
      %v1790 = vmax.bf16 %v150, %v600
      %v1791 = vmax.bf16 %v151, %v610
      %v1792 = vmax.bf16 %v152, %v620
      %v1793 = vmax.bf16 %v153, %v630
      %v1794 = vmax.bf16 %v154, %v640
      %v1795 = vmax.bf16 %v155, %v650
      %v1796 = vmax.bf16 %v156, %v660
      %v1797 = vmax.bf16 %v157, %v670
      %v1798 = vmax.bf16 %v158, %v680
      %v1799 = vmax.bf16 %v159, %v690
      %v1800 = vmax.bf16 %v160, %v700
      %v1801 = vmax.bf16 %v161, %v710
      %v1802 = vmax.bf16 %v162, %v720
      %v1803 = vmax.bf16 %v163, %v730
      %v1804 = vmax.bf16 %v164, %v740
      %v1805 = vmax.bf16 %v165, %v750
      %v1806 = vmax.bf16 %v166, %v760
      %v1807 = vmax.bf16 %v167, %v770
      %v1808 = vmax.bf16 %v168, %v780
      %v1809 = vmax.bf16 %v169, %v790
      %v1810 = vmax.bf16 %v170, %v800
      %v1811 = vmax.bf16 %v171, %v810
      %v1812 = vmax.bf16 %v172, %v820
      %v1813 = vmax.bf16 %v173, %v830
      %v1814 = vmax.bf16 %v174, %v840
      %v1815 = vmax.bf16 %v175, %v850
      %v1816 = vmax.bf16 %v176, %v860
      %v1817 = vmax.bf16 %v177, %v870
      %v1818 = vmax.bf16 %v178, %v880
      %v1819 = vmax.bf16 %v179, %v890
      %v1820 = vmax.bf16 %v180, %v900
      %v1821 = vmax.bf16 %v181, %v910
      %v1822 = vmax.bf16 %v182, %v920
      %v1823 = vmax.bf16 %v183, %v930
      %v1824 = vmax.bf16 %v184, %v940
      %v1825 = vmax.bf16 %v185, %v950
      %v1826 = vmax.bf16 %v186, %v960
      %v1827 = vmax.bf16 %v187, %v970
      %v1828 = vmax.bf16 %v188, %v980
      %v1829 = vmax.bf16 %v189, %v990
      %v1830 = vmax.bf16 %v190, %v1000
      %v1831 = vmax.bf16 %v191, %v1010
      %v1832 = vmax.bf16 %v192, %v1020
      %v1833 = vmax.bf16 %v193, %v1030
      %v1834 = vmax.bf16 %v194, %v1040
      %v1835 = vmax.bf16 %v195, %v1050
      %v1836 = vmax.bf16 %v196, %v1060
      %v1837 = vmax.bf16 %v197, %v1070
      %v1838 = vmax.bf16 %v198, %v1080
      %v1839 = vmax.bf16 %v199, %v1090
      %v1840 = vmax.bf16 %v200, %v1100
      %v1841 = vmax.bf16 %v201, %v1110
      %v1842 = vmax.bf16 %v202, %v1120
      %v1843 = vmax.bf16 %v203, %v1130
      %v1844 = vmax.bf16 %v204, %v1140
      %v1845 = vmax.bf16 %v205, %v1150
      %v1846 = vmax.bf16 %v206, %v1160
      %v1847 = vmax.bf16 %v207, %v1170
      %v1848 = vmax.bf16 %v208, %v1180
      %v1849 = vmax.bf16 %v209, %v1190
      %v1850 = vmax.bf16 %v210, %v1200
      %v1851 = vmax.bf16 %v211, %v1210
      %v1852 = vmax.bf16 %v212, %v1220
      %v1853 = vmax.bf16 %v213, %v1230
      %v1854 = vmax.bf16 %v214, %v1240
      %v1855 = vmax.bf16 %v215, %v1250
      %v1856 = vmax.bf16 %v216, %v1260
      %v1857 = vmax.bf16 %v217, %v1270
      %v1858 = vmax.bf16 %v218, %v1280
      %v1859 = vmax.bf16 %v219, %v1290
      %v1860 = vmax.bf16 %v220, %v1300
      %v1861 = vmax.bf16 %v221, %v1310
      %v1862 = vmax.bf16 %v222, %v1320
      %v1863 = vmax.bf16 %v223, %v1330
      %v1864 = vmax.bf16 %v224, %v1340
      %v1865 = vmax.bf16 %v225, %v1350
      %v1866 = vmax.bf16 %v226, %v1360
      %v1867 = vmax.bf16 %v227, %v1370
      %v1868 = vmax.bf16 %v228, %v1380
      %v1869 = vmax.bf16 %v229, %v1390
      %v1870 = vmax.bf16 %v230, %v1400
      %v1871 = vmax.bf16 %v231, %v1410
      %v1872 = vmax.bf16 %v232, %v1420
      %v1873 = vmax.bf16 %v233, %v1430
      %v1874 = vmax.bf16 %v234, %v1440
      %v1875 = vmax.bf16 %v235, %v1450
      %v1876 = vmax.bf16 %v236, %v1460
      %v1877 = vmax.bf16 %v237, %v1470
      %v1878 = vmax.bf16 %v238, %v1480
      %v1879 = vmax.bf16 %v239, %v1490
      %v1880 = vmax.bf16 %v240, %v1500
      %v1881 = vmax.bf16 %v241, %v1510
      %v1882 = vmax.bf16 %v242, %v1520
      %v1883 = vmax.bf16 %v243, %v1530
      %v1884 = vmax.bf16 %v244, %v1540
      %v1885 = vmax.bf16 %v245, %v1550
      %v1886 = vmax.bf16 %v246, %v1560
      %v1887 = vmax.bf16 %v247, %v1570
      %v1888 = vmax.bf16 %v248, %v1580
      %v1889 = vmax.bf16 %v249, %v1590
      %v1890 = vmax.bf16 %v250, %v1600
      %v1891 = vmax.bf16 %v251, %v1610
      %v1892 = vmax.bf16 %v252, %v1620
      %v1893 = vld [vmem:[%s111] sm:$0xe]
      %vm2031 = vcmask 1042432
      %vm2032 = vcmask 1046532
      %vm2033 = vmor %vm2031, %vm2032
      %v2034 = vrot.slane %v1893, 5
      %v2035 = vrot.slane %v2034, 4
      %v2036 = vrot.slane %v118, 5
      %v2037 = vsel %vm2033, %v2035, %v2036
      %v2038 = vrot.slane %v2036, 4
      %v2039 = vrot.slane %v119, 5
      %v2040 = vsel %vm2033, %v2038, %v2039
      %v2041 = vrot.slane %v2039, 4
      %v2042 = vrot.slane %v120, 5
      %v2043 = vsel %vm2033, %v2041, %v2042
      %v2044 = vrot.slane %v2042, 4
      %v2045 = vrot.slane %v121, 5
      %v2046 = vsel %vm2033, %v2044, %v2045
      %v2047 = vrot.slane %v2045, 4
      %v2048 = vrot.slane %v122, 5
      %v2049 = vsel %vm2033, %v2047, %v2048
      %v2050 = vrot.slane %v2048, 4
      %v2051 = vrot.slane %v123, 5
      %v2052 = vsel %vm2033, %v2050, %v2051
      %v2053 = vrot.slane %v2051, 4
      %v2054 = vrot.slane %v124, 5
      %v2055 = vsel %vm2033, %v2053, %v2054
      %v2056 = vrot.slane %v2054, 4
      %v2057 = vrot.slane %v125, 5
      %v2058 = vsel %vm2033, %v2056, %v2057
      %v2059 = vrot.slane %v2057, 4
      %v2060 = vrot.slane %v126, 5
      %v2061 = vsel %vm2033, %v2059, %v2060
      %v2062 = vrot.slane %v2060, 4
      %v2063 = vrot.slane %v127, 5
      %v2064 = vsel %vm2033, %v2062, %v2063
      %v2065 = vrot.slane %v2063, 4
      %v2066 = vrot.slane %v128, 5
      %v2067 = vsel %vm2033, %v2065, %v2066
      %v2068 = vrot.slane %v2066, 4
      %v2069 = vrot.slane %v129, 5
      %v2070 = vsel %vm2033, %v2068, %v2069
      %v2071 = vrot.slane %v2069, 4
      %v2072 = vrot.slane %v130, 5
      %v2073 = vsel %vm2033, %v2071, %v2072
      %v2074 = vrot.slane %v2072, 4
      %v2075 = vrot.slane %v131, 5
      %v2076 = vsel %vm2033, %v2074, %v2075
      %v2077 = vrot.slane %v2075, 4
      %v2078 = vrot.slane %v132, 5
      %v2079 = vsel %vm2033, %v2077, %v2078
      %v2080 = vrot.slane %v2078, 4
      %v2081 = vrot.slane %v133, 5
      %v2082 = vsel %vm2033, %v2080, %v2081
      %v2083 = vrot.slane %v2081, 4
      %v2084 = vrot.slane %v134, 5
      %v2085 = vsel %vm2033, %v2083, %v2084
      %v2086 = vrot.slane %v2084, 4
      %v2087 = vrot.slane %v135, 5
      %v2088 = vsel %vm2033, %v2086, %v2087
      %v2089 = vrot.slane %v2087, 4
      %v2090 = vrot.slane %v136, 5
      %v2091 = vsel %vm2033, %v2089, %v2090
      %v2092 = vrot.slane %v2090, 4
      %v2093 = vrot.slane %v137, 5
      %v2094 = vsel %vm2033, %v2092, %v2093
      %v2095 = vrot.slane %v2093, 4
      %v2096 = vrot.slane %v138, 5
      %v2097 = vsel %vm2033, %v2095, %v2096
      %v2098 = vrot.slane %v2096, 4
      %v2099 = vrot.slane %v139, 5
      %v2100 = vsel %vm2033, %v2098, %v2099
      %v2101 = vrot.slane %v2099, 4
      %v2102 = vrot.slane %v140, 5
      %v2103 = vsel %vm2033, %v2101, %v2102
      %v2104 = vrot.slane %v2102, 4
      %v2105 = vrot.slane %v141, 5
      %v2106 = vsel %vm2033, %v2104, %v2105
      %v2107 = vrot.slane %v2105, 4
      %v2108 = vrot.slane %v142, 5
      %v2109 = vsel %vm2033, %v2107, %v2108
      %v2110 = vrot.slane %v2108, 4
      %v2111 = vrot.slane %v143, 5
      %v2112 = vsel %vm2033, %v2110, %v2111
      %v2113 = vrot.slane %v2111, 4
      %v2114 = vrot.slane %v144, 5
      %v2115 = vsel %vm2033, %v2113, %v2114
      %v2116 = vrot.slane %v2114, 4
      %v2117 = vrot.slane %v145, 5
      %v2118 = vsel %vm2033, %v2116, %v2117
      %v2119 = vrot.slane %v2117, 4
      %v2120 = vrot.slane %v146, 5
      %v2121 = vsel %vm2033, %v2119, %v2120
      %v2122 = vrot.slane %v2120, 4
      %v2123 = vrot.slane %v147, 5
      %v2124 = vsel %vm2033, %v2122, %v2123
      %v2125 = vrot.slane %v2123, 4
      %v2126 = vrot.slane %v148, 5
      %v2127 = vsel %vm2033, %v2125, %v2126
      %v2128 = vrot.slane %v2126, 4
      %v2129 = vrot.slane %v149, 5
      %v2130 = vsel %vm2033, %v2128, %v2129
      %v2131 = vrot.slane %v2129, 4
      %v2132 = vrot.slane %v150, 5
      %v2133 = vsel %vm2033, %v2131, %v2132
      %v2134 = vrot.slane %v2132, 4
      %v2135 = vrot.slane %v151, 5
      %v2136 = vsel %vm2033, %v2134, %v2135
      %v2137 = vrot.slane %v2135, 4
      %v2138 = vrot.slane %v152, 5
      %v2139 = vsel %vm2033, %v2137, %v2138
      %v2140 = vrot.slane %v2138, 4
      %v2141 = vrot.slane %v153, 5
      %v2142 = vsel %vm2033, %v2140, %v2141
      %v2143 = vrot.slane %v2141, 4
      %v2144 = vrot.slane %v154, 5
      %v2145 = vsel %vm2033, %v2143, %v2144
      %v2146 = vrot.slane %v2144, 4
      %v2147 = vrot.slane %v155, 5
      %v2148 = vsel %vm2033, %v2146, %v2147
      %v2149 = vrot.slane %v2147, 4
      %v2150 = vrot.slane %v156, 5
      %v2151 = vsel %vm2033, %v2149, %v2150
      %v2152 = vrot.slane %v2150, 4
      %v2153 = vrot.slane %v157, 5
      %v2154 = vsel %vm2033, %v2152, %v2153
      %v2155 = vrot.slane %v2153, 4
      %v2156 = vrot.slane %v158, 5
      %v2157 = vsel %vm2033, %v2155, %v2156
      %v2158 = vrot.slane %v2156, 4
      %v2159 = vrot.slane %v159, 5
      %v2160 = vsel %vm2033, %v2158, %v2159
      %v2161 = vrot.slane %v2159, 4
      %v2162 = vrot.slane %v160, 5
      %v2163 = vsel %vm2033, %v2161, %v2162
      %v2164 = vrot.slane %v2162, 4
      %v2165 = vrot.slane %v161, 5
      %v2166 = vsel %vm2033, %v2164, %v2165
      %v2167 = vrot.slane %v2165, 4
      %v2168 = vrot.slane %v162, 5
      %v2169 = vsel %vm2033, %v2167, %v2168
      %v2170 = vrot.slane %v2168, 4
      %v2171 = vrot.slane %v163, 5
      %v2172 = vsel %vm2033, %v2170, %v2171
      %v2173 = vrot.slane %v2171, 4
      %v2174 = vrot.slane %v164, 5
      %v2175 = vsel %vm2033, %v2173, %v2174
      %v2176 = vrot.slane %v2174, 4
      %v2177 = vrot.slane %v165, 5
      %v2178 = vsel %vm2033, %v2176, %v2177
      %v2179 = vrot.slane %v2177, 4
      %v2180 = vrot.slane %v166, 5
      %v2181 = vsel %vm2033, %v2179, %v2180
      %v2182 = vrot.slane %v2180, 4
      %v2183 = vrot.slane %v167, 5
      %v2184 = vsel %vm2033, %v2182, %v2183
      %v2185 = vrot.slane %v2183, 4
      %v2186 = vrot.slane %v168, 5
      %v2187 = vsel %vm2033, %v2185, %v2186
      %v2188 = vrot.slane %v2186, 4
      %v2189 = vrot.slane %v169, 5
      %v2190 = vsel %vm2033, %v2188, %v2189
      %v2191 = vrot.slane %v2189, 4
      %v2192 = vrot.slane %v170, 5
      %v2193 = vsel %vm2033, %v2191, %v2192
      %v2194 = vrot.slane %v2192, 4
      %v2195 = vrot.slane %v171, 5
      %v2196 = vsel %vm2033, %v2194, %v2195
      %v2197 = vrot.slane %v2195, 4
      %v2198 = vrot.slane %v172, 5
      %v2199 = vsel %vm2033, %v2197, %v2198
      %v2200 = vrot.slane %v2198, 4
      %v2201 = vrot.slane %v173, 5
      %v2202 = vsel %vm2033, %v2200, %v2201
      %v2203 = vrot.slane %v2201, 4
      %v2204 = vrot.slane %v174, 5
      %v2205 = vsel %vm2033, %v2203, %v2204
      %v2206 = vrot.slane %v2204, 4
      %v2207 = vrot.slane %v175, 5
      %v2208 = vsel %vm2033, %v2206, %v2207
      %v2209 = vrot.slane %v2207, 4
      %v2210 = vrot.slane %v176, 5
      %v2211 = vsel %vm2033, %v2209, %v2210
      %v2212 = vrot.slane %v2210, 4
      %v2213 = vrot.slane %v177, 5
      %v2214 = vsel %vm2033, %v2212, %v2213
      %v2215 = vrot.slane %v2213, 4
      %v2216 = vrot.slane %v178, 5
      %v2217 = vsel %vm2033, %v2215, %v2216
      %v2218 = vrot.slane %v2216, 4
      %v2219 = vrot.slane %v179, 5
      %v2220 = vsel %vm2033, %v2218, %v2219
      %v2221 = vrot.slane %v2219, 4
      %v2222 = vrot.slane %v180, 5
      %v2223 = vsel %vm2033, %v2221, %v2222
      %v2224 = vrot.slane %v2222, 4
      %v2225 = vrot.slane %v181, 5
      %v2226 = vsel %vm2033, %v2224, %v2225
      %v2227 = vrot.slane %v2225, 4
      %v2228 = vrot.slane %v182, 5
      %v2229 = vsel %vm2033, %v2227, %v2228
      %v2230 = vrot.slane %v2228, 4
      %v2231 = vrot.slane %v183, 5
      %v2232 = vsel %vm2033, %v2230, %v2231
      %v2233 = vrot.slane %v2231, 4
      %v2234 = vrot.slane %v184, 5
      %v2235 = vsel %vm2033, %v2233, %v2234
      %v2236 = vrot.slane %v2234, 4
      %v2237 = vrot.slane %v185, 5
      %v2238 = vsel %vm2033, %v2236, %v2237
      %v2239 = vrot.slane %v2237, 4
      %v2240 = vrot.slane %v186, 5
      %v2241 = vsel %vm2033, %v2239, %v2240
      %v2242 = vrot.slane %v2240, 4
      %v2243 = vrot.slane %v187, 5
      %v2244 = vsel %vm2033, %v2242, %v2243
      %v2245 = vrot.slane %v2243, 4
      %v2246 = vrot.slane %v188, 5
      %v2247 = vsel %vm2033, %v2245, %v2246
      %v2248 = vrot.slane %v2246, 4
      %v2249 = vrot.slane %v189, 5
      %v2250 = vsel %vm2033, %v2248, %v2249
      %v2251 = vrot.slane %v2249, 4
      %v2252 = vrot.slane %v190, 5
      %v2253 = vsel %vm2033, %v2251, %v2252
      %v2254 = vrot.slane %v2252, 4
      %v2255 = vrot.slane %v191, 5
      %v2256 = vsel %vm2033, %v2254, %v2255
      %v2257 = vrot.slane %v2255, 4
      %v2258 = vrot.slane %v192, 5
      %v2259 = vsel %vm2033, %v2257, %v2258
      %v2260 = vrot.slane %v2258, 4
      %v2261 = vrot.slane %v193, 5
      %v2262 = vsel %vm2033, %v2260, %v2261
      %v2263 = vrot.slane %v2261, 4
      %v2264 = vrot.slane %v194, 5
      %v2265 = vsel %vm2033, %v2263, %v2264
      %v2266 = vrot.slane %v2264, 4
      %v2267 = vrot.slane %v195, 5
      %v2268 = vsel %vm2033, %v2266, %v2267
      %v2269 = vrot.slane %v2267, 4
      %v2270 = vrot.slane %v196, 5
      %v2271 = vsel %vm2033, %v2269, %v2270
      %v2272 = vrot.slane %v2270, 4
      %v2273 = vrot.slane %v197, 5
      %v2274 = vsel %vm2033, %v2272, %v2273
      %v2275 = vrot.slane %v2273, 4
      %v2276 = vrot.slane %v198, 5
      %v2277 = vsel %vm2033, %v2275, %v2276
      %v2278 = vrot.slane %v2276, 4
      %v2279 = vrot.slane %v199, 5
      %v2280 = vsel %vm2033, %v2278, %v2279
      %v2281 = vrot.slane %v2279, 4
      %v2282 = vrot.slane %v200, 5
      %v2283 = vsel %vm2033, %v2281, %v2282
      %v2284 = vrot.slane %v2282, 4
      %v2285 = vrot.slane %v201, 5
      %v2286 = vsel %vm2033, %v2284, %v2285
      %v2287 = vrot.slane %v2285, 4
      %v2288 = vrot.slane %v202, 5
      %v2289 = vsel %vm2033, %v2287, %v2288
      %v2290 = vrot.slane %v2288, 4
      %v2291 = vrot.slane %v203, 5
      %v2292 = vsel %vm2033, %v2290, %v2291
      %v2293 = vrot.slane %v2291, 4
      %v2294 = vrot.slane %v204, 5
      %v2295 = vsel %vm2033, %v2293, %v2294
      %v2296 = vrot.slane %v2294, 4
      %v2297 = vrot.slane %v205, 5
      %v2298 = vsel %vm2033, %v2296, %v2297
      %v2299 = vrot.slane %v2297, 4
      %v2300 = vrot.slane %v206, 5
      %v2301 = vsel %vm2033, %v2299, %v2300
      %v2302 = vrot.slane %v2300, 4
      %v2303 = vrot.slane %v207, 5
      %v2304 = vsel %vm2033, %v2302, %v2303
      %v2305 = vrot.slane %v2303, 4
      %v2306 = vrot.slane %v208, 5
      %v2307 = vsel %vm2033, %v2305, %v2306
      %v2308 = vrot.slane %v2306, 4
      %v2309 = vrot.slane %v209, 5
      %v2310 = vsel %vm2033, %v2308, %v2309
      %v2311 = vrot.slane %v2309, 4
      %v2312 = vrot.slane %v210, 5
      %v2313 = vsel %vm2033, %v2311, %v2312
      %v2314 = vrot.slane %v2312, 4
      %v2315 = vrot.slane %v211, 5
      %v2316 = vsel %vm2033, %v2314, %v2315
      %v2317 = vrot.slane %v2315, 4
      %v2318 = vrot.slane %v212, 5
      %v2319 = vsel %vm2033, %v2317, %v2318
      %v2320 = vrot.slane %v2318, 4
      %v2321 = vrot.slane %v213, 5
      %v2322 = vsel %vm2033, %v2320, %v2321
      %v2323 = vrot.slane %v2321, 4
      %v2324 = vrot.slane %v214, 5
      %v2325 = vsel %vm2033, %v2323, %v2324
      %v2326 = vrot.slane %v2324, 4
      %v2327 = vrot.slane %v215, 5
      %v2328 = vsel %vm2033, %v2326, %v2327
      %v2329 = vrot.slane %v2327, 4
      %v2330 = vrot.slane %v216, 5
      %v2331 = vsel %vm2033, %v2329, %v2330
      %v2332 = vrot.slane %v2330, 4
      %v2333 = vrot.slane %v217, 5
      %v2334 = vsel %vm2033, %v2332, %v2333
      %v2335 = vrot.slane %v2333, 4
      %v2336 = vrot.slane %v218, 5
      %v2337 = vsel %vm2033, %v2335, %v2336
      %v2338 = vrot.slane %v2336, 4
      %v2339 = vrot.slane %v219, 5
      %v2340 = vsel %vm2033, %v2338, %v2339
      %v2341 = vrot.slane %v2339, 4
      %v2342 = vrot.slane %v220, 5
      %v2343 = vsel %vm2033, %v2341, %v2342
      %v2344 = vrot.slane %v2342, 4
      %v2345 = vrot.slane %v221, 5
      %v2346 = vsel %vm2033, %v2344, %v2345
      %v2347 = vrot.slane %v2345, 4
      %v2348 = vrot.slane %v222, 5
      %v2349 = vsel %vm2033, %v2347, %v2348
      %v2350 = vrot.slane %v2348, 4
      %v2351 = vrot.slane %v223, 5
      %v2352 = vsel %vm2033, %v2350, %v2351
      %v2353 = vrot.slane %v2351, 4
      %v2354 = vrot.slane %v224, 5
      %v2355 = vsel %vm2033, %v2353, %v2354
      %v2356 = vrot.slane %v2354, 4
      %v2357 = vrot.slane %v225, 5
      %v2358 = vsel %vm2033, %v2356, %v2357
      %v2359 = vrot.slane %v2357, 4
      %v2360 = vrot.slane %v226, 5
      %v2361 = vsel %vm2033, %v2359, %v2360
      %v2362 = vrot.slane %v2360, 4
      %v2363 = vrot.slane %v227, 5
      %v2364 = vsel %vm2033, %v2362, %v2363
      %v2365 = vrot.slane %v2363, 4
      %v2366 = vrot.slane %v228, 5
      %v2367 = vsel %vm2033, %v2365, %v2366
      %v2368 = vrot.slane %v2366, 4
      %v2369 = vrot.slane %v229, 5
      %v2370 = vsel %vm2033, %v2368, %v2369
      %v2371 = vrot.slane %v2369, 4
      %v2372 = vrot.slane %v230, 5
      %v2373 = vsel %vm2033, %v2371, %v2372
      %v2374 = vrot.slane %v2372, 4
      %v2375 = vrot.slane %v231, 5
      %v2376 = vsel %vm2033, %v2374, %v2375
      %v2377 = vrot.slane %v2375, 4
      %v2378 = vrot.slane %v232, 5
      %v2379 = vsel %vm2033, %v2377, %v2378
      %v2380 = vrot.slane %v2378, 4
      %v2381 = vrot.slane %v233, 5
      %v2382 = vsel %vm2033, %v2380, %v2381
      %v2383 = vrot.slane %v2381, 4
      %v2384 = vrot.slane %v234, 5
      %v2385 = vsel %vm2033, %v2383, %v2384
      %v2386 = vrot.slane %v2384, 4
      %v2387 = vrot.slane %v235, 5
      %v2388 = vsel %vm2033, %v2386, %v2387
      %v2389 = vrot.slane %v2387, 4
      %v2390 = vrot.slane %v236, 5
      %v2391 = vsel %vm2033, %v2389, %v2390
      %v2392 = vrot.slane %v2390, 4
      %v2393 = vrot.slane %v237, 5
      %v2394 = vsel %vm2033, %v2392, %v2393
      %v2395 = vrot.slane %v2393, 4
      %v2396 = vrot.slane %v238, 5
      %v2397 = vsel %vm2033, %v2395, %v2396
      %v2398 = vrot.slane %v2396, 4
      %v2399 = vrot.slane %v239, 5
      %v2400 = vsel %vm2033, %v2398, %v2399
      %v2401 = vrot.slane %v2399, 4
      %v2402 = vrot.slane %v240, 5
      %v2403 = vsel %vm2033, %v2401, %v2402
      %v2404 = vrot.slane %v2402, 4
      %v2405 = vrot.slane %v241, 5
      %v2406 = vsel %vm2033, %v2404, %v2405
      %v2407 = vrot.slane %v2405, 4
      %v2408 = vrot.slane %v242, 5
      %v2409 = vsel %vm2033, %v2407, %v2408
      %v2410 = vrot.slane %v2408, 4
      %v2411 = vrot.slane %v243, 5
      %v2412 = vsel %vm2033, %v2410, %v2411
      %v2413 = vrot.slane %v2411, 4
      %v2414 = vrot.slane %v244, 5
      %v2415 = vsel %vm2033, %v2413, %v2414
      %v2416 = vrot.slane %v2414, 4
      %v2417 = vrot.slane %v245, 5
      %v2418 = vsel %vm2033, %v2416, %v2417
      %v2419 = vrot.slane %v2417, 4
      %v2420 = vrot.slane %v246, 5
      %v2421 = vsel %vm2033, %v2419, %v2420
      %v2422 = vrot.slane %v2420, 4
      %v2423 = vrot.slane %v247, 5
      %v2424 = vsel %vm2033, %v2422, %v2423
      %v2425 = vrot.slane %v2423, 4
      %v2426 = vrot.slane %v248, 5
      %v2427 = vsel %vm2033, %v2425, %v2426
      %v2428 = vrot.slane %v2426, 4
      %v2429 = vrot.slane %v249, 5
      %v2430 = vsel %vm2033, %v2428, %v2429
      %v2431 = vrot.slane %v2429, 4
      %v2432 = vrot.slane %v250, 5
      %v2433 = vsel %vm2033, %v2431, %v2432
      %v2434 = vrot.slane %v2432, 4
      %v2435 = vrot.slane %v251, 5
      %v2436 = vsel %vm2033, %v2434, %v2435
      %v2437 = vrot.slane %v2435, 4
      %v2438 = vrot.slane %v252, 5
      %v2439 = vsel %vm2033, %v2437, %v2438
      %v2440 = vrot.slane %v2438, 4
      %v2441 = vrot.slane %v253, 5
      %v2442 = vsel %vm2033, %v2440, %v2441
      %v2579 = vmax.bf16 %v1757, %v2037
      %v2580 = vmax.bf16 %v1758, %v2040
      %v2581 = vmax.bf16 %v1759, %v2043
      %v2582 = vmax.bf16 %v1760, %v2046
      %v2583 = vmax.bf16 %v1761, %v2049
      %v2584 = vmax.bf16 %v1762, %v2052
      %v2585 = vmax.bf16 %v1763, %v2055
      %v2586 = vmax.bf16 %v1764, %v2058
      %v2587 = vmax.bf16 %v1765, %v2061
      %v2588 = vmax.bf16 %v1766, %v2064
      %v2589 = vmax.bf16 %v1767, %v2067
      %v2590 = vmax.bf16 %v1768, %v2070
      %v2591 = vmax.bf16 %v1769, %v2073
      %v2592 = vmax.bf16 %v1770, %v2076
      %v2593 = vmax.bf16 %v1771, %v2079
      %v2594 = vmax.bf16 %v1772, %v2082
      %v2595 = vmax.bf16 %v1773, %v2085
      %v2596 = vmax.bf16 %v1774, %v2088
      %v2597 = vmax.bf16 %v1775, %v2091
      %v2598 = vmax.bf16 %v1776, %v2094
      %v2599 = vmax.bf16 %v1777, %v2097
      %v2600 = vmax.bf16 %v1778, %v2100
      %v2601 = vmax.bf16 %v1779, %v2103
      %v2602 = vmax.bf16 %v1780, %v2106
      %v2603 = vmax.bf16 %v1781, %v2109
      %v2604 = vmax.bf16 %v1782, %v2112
      %v2605 = vmax.bf16 %v1783, %v2115
      %v2606 = vmax.bf16 %v1784, %v2118
      %v2607 = vmax.bf16 %v1785, %v2121
      %v2608 = vmax.bf16 %v1786, %v2124
      %v2609 = vmax.bf16 %v1787, %v2127
      %v2610 = vmax.bf16 %v1788, %v2130
      %v2611 = vmax.bf16 %v1789, %v2133
      %v2612 = vmax.bf16 %v1790, %v2136
      %v2613 = vmax.bf16 %v1791, %v2139
      %v2614 = vmax.bf16 %v1792, %v2142
      %v2615 = vmax.bf16 %v1793, %v2145
      %v2616 = vmax.bf16 %v1794, %v2148
      %v2617 = vmax.bf16 %v1795, %v2151
      %v2618 = vmax.bf16 %v1796, %v2154
      %v2619 = vmax.bf16 %v1797, %v2157
      %v2620 = vmax.bf16 %v1798, %v2160
      %v2621 = vmax.bf16 %v1799, %v2163
      %v2622 = vmax.bf16 %v1800, %v2166
      %v2623 = vmax.bf16 %v1801, %v2169
      %v2624 = vmax.bf16 %v1802, %v2172
      %v2625 = vmax.bf16 %v1803, %v2175
      %v2626 = vmax.bf16 %v1804, %v2178
      %v2627 = vmax.bf16 %v1805, %v2181
      %v2628 = vmax.bf16 %v1806, %v2184
      %v2629 = vmax.bf16 %v1807, %v2187
      %v2630 = vmax.bf16 %v1808, %v2190
      %v2631 = vmax.bf16 %v1809, %v2193
      %v2632 = vmax.bf16 %v1810, %v2196
      %v2633 = vmax.bf16 %v1811, %v2199
      %v2634 = vmax.bf16 %v1812, %v2202
      %v2635 = vmax.bf16 %v1813, %v2205
      %v2636 = vmax.bf16 %v1814, %v2208
      %v2637 = vmax.bf16 %v1815, %v2211
      %v2638 = vmax.bf16 %v1816, %v2214
      %v2639 = vmax.bf16 %v1817, %v2217
      %v2640 = vmax.bf16 %v1818, %v2220
      %v2641 = vmax.bf16 %v1819, %v2223
      %v2642 = vmax.bf16 %v1820, %v2226
      %v2643 = vmax.bf16 %v1821, %v2229
      %v2644 = vmax.bf16 %v1822, %v2232
      %v2645 = vmax.bf16 %v1823, %v2235
      %v2646 = vmax.bf16 %v1824, %v2238
      %v2647 = vmax.bf16 %v1825, %v2241
      %v2648 = vmax.bf16 %v1826, %v2244
      %v2649 = vmax.bf16 %v1827, %v2247
      %v2650 = vmax.bf16 %v1828, %v2250
      %v2651 = vmax.bf16 %v1829, %v2253
      %v2652 = vmax.bf16 %v1830, %v2256
      %v2653 = vmax.bf16 %v1831, %v2259
      %v2654 = vmax.bf16 %v1832, %v2262
      %v2655 = vmax.bf16 %v1833, %v2265
      %v2656 = vmax.bf16 %v1834, %v2268
      %v2657 = vmax.bf16 %v1835, %v2271
      %v2658 = vmax.bf16 %v1836, %v2274
      %v2659 = vmax.bf16 %v1837, %v2277
      %v2660 = vmax.bf16 %v1838, %v2280
      %v2661 = vmax.bf16 %v1839, %v2283
      %v2662 = vmax.bf16 %v1840, %v2286
      %v2663 = vmax.bf16 %v1841, %v2289
      %v2664 = vmax.bf16 %v1842, %v2292
      %v2665 = vmax.bf16 %v1843, %v2295
      %v2666 = vmax.bf16 %v1844, %v2298
      %v2667 = vmax.bf16 %v1845, %v2301
      %v2668 = vmax.bf16 %v1846, %v2304
      %v2669 = vmax.bf16 %v1847, %v2307
      %v2670 = vmax.bf16 %v1848, %v2310
      %v2671 = vmax.bf16 %v1849, %v2313
      %v2672 = vmax.bf16 %v1850, %v2316
      %v2673 = vmax.bf16 %v1851, %v2319
      %v2674 = vmax.bf16 %v1852, %v2322
      %v2675 = vmax.bf16 %v1853, %v2325
      %v2676 = vmax.bf16 %v1854, %v2328
      %v2677 = vmax.bf16 %v1855, %v2331
      %v2678 = vmax.bf16 %v1856, %v2334
      %v2679 = vmax.bf16 %v1857, %v2337
      %v2680 = vmax.bf16 %v1858, %v2340
      %v2681 = vmax.bf16 %v1859, %v2343
      %v2682 = vmax.bf16 %v1860, %v2346
      %v2683 = vmax.bf16 %v1861, %v2349
      %v2684 = vmax.bf16 %v1862, %v2352
      %v2685 = vmax.bf16 %v1863, %v2355
      %v2686 = vmax.bf16 %v1864, %v2358
      %v2687 = vmax.bf16 %v1865, %v2361
      %v2688 = vmax.bf16 %v1866, %v2364
      %v2689 = vmax.bf16 %v1867, %v2367
      %v2690 = vmax.bf16 %v1868, %v2370
      %v2691 = vmax.bf16 %v1869, %v2373
      %v2692 = vmax.bf16 %v1870, %v2376
      %v2693 = vmax.bf16 %v1871, %v2379
      %v2694 = vmax.bf16 %v1872, %v2382
      %v2695 = vmax.bf16 %v1873, %v2385
      %v2696 = vmax.bf16 %v1874, %v2388
      %v2697 = vmax.bf16 %v1875, %v2391
      %v2698 = vmax.bf16 %v1876, %v2394
      %v2699 = vmax.bf16 %v1877, %v2397
      %v2700 = vmax.bf16 %v1878, %v2400
      %v2701 = vmax.bf16 %v1879, %v2403
      %v2702 = vmax.bf16 %v1880, %v2406
      %v2703 = vmax.bf16 %v1881, %v2409
      %v2704 = vmax.bf16 %v1882, %v2412
      %v2705 = vmax.bf16 %v1883, %v2415
      %v2706 = vmax.bf16 %v1884, %v2418
      %v2707 = vmax.bf16 %v1885, %v2421
      %v2708 = vmax.bf16 %v1886, %v2424
      %v2709 = vmax.bf16 %v1887, %v2427
      %v2710 = vmax.bf16 %v1888, %v2430
      %v2711 = vmax.bf16 %v1889, %v2433
      %v2712 = vmax.bf16 %v1890, %v2436
      %v2713 = vmax.bf16 %v1891, %v2439
      %v2714 = vmax.bf16 %v1892, %v2442
      %v2715 = vld [vmem:[%s111 + $0x10] sm:$0xe]
      %v2716 = vld [vmem:[%s111 + $0x220] sm:$0xf]
      %v2717 = vld [vmem:[%s111 + $0x224] sm:$0xf]
      %v2718 = vld [vmem:[%s111 + $0x228] sm:$0xf]
      %v2719 = vld [vmem:[%s111 + $0x22c] sm:$0xf]
      %v2720 = vld [vmem:[%s111 + $0x230] sm:$0x1]
      %v2727 = vrot.slane %v2715, 5
      %v2728 = vrot.slane %v2727, 4
      %v2729 = vsel %vm2033, %v2728, %v2048
      %v2730 = vrot.slane %v2716, 5
      %v2731 = vsel %vm2033, %v2440, %v2730
      %v2732 = vrot.slane %v2730, 4
      %v2733 = vrot.slane %v2717, 5
      %v2734 = vsel %vm2033, %v2732, %v2733
      %v2735 = vrot.slane %v2733, 4
      %v2736 = vrot.slane %v2718, 5
      %v2737 = vsel %vm2033, %v2735, %v2736
      %v2738 = vrot.slane %v2736, 4
      %v2739 = vrot.slane %v2719, 5
      %v2740 = vsel %vm2033, %v2738, %v2739
      %v2741 = vrot.slane %v2739, 4
      %v2742 = vrot.slane %v2720, 5
      %v2743 = vsel %vm2033, %v2741, %v2742
      %v2750 = vmax.bf16 %v2579, %v2729
      %v2751 = vmax.bf16 %v2580, %v2052
      %v2752 = vmax.bf16 %v2581, %v2055
      %v2753 = vmax.bf16 %v2582, %v2058
      %v2754 = vmax.bf16 %v2583, %v2061
      %v2755 = vmax.bf16 %v2584, %v2064
      %v2756 = vmax.bf16 %v2585, %v2067
      %v2757 = vmax.bf16 %v2586, %v2070
      %v2758 = vmax.bf16 %v2587, %v2073
      %v2759 = vmax.bf16 %v2588, %v2076
      %v2760 = vmax.bf16 %v2589, %v2079
      %v2761 = vmax.bf16 %v2590, %v2082
      %v2762 = vmax.bf16 %v2591, %v2085
      %v2763 = vmax.bf16 %v2592, %v2088
      %v2764 = vmax.bf16 %v2593, %v2091
      %v2765 = vmax.bf16 %v2594, %v2094
      %v2766 = vmax.bf16 %v2595, %v2097
      %v2767 = vmax.bf16 %v2596, %v2100
      %v2768 = vmax.bf16 %v2597, %v2103
      %v2769 = vmax.bf16 %v2598, %v2106
      %v2770 = vmax.bf16 %v2599, %v2109
      %v2771 = vmax.bf16 %v2600, %v2112
      %v2772 = vmax.bf16 %v2601, %v2115
      %v2773 = vmax.bf16 %v2602, %v2118
      %v2774 = vmax.bf16 %v2603, %v2121
      %v2775 = vmax.bf16 %v2604, %v2124
      %v2776 = vmax.bf16 %v2605, %v2127
      %v2777 = vmax.bf16 %v2606, %v2130
      %v2778 = vmax.bf16 %v2607, %v2133
      %v2779 = vmax.bf16 %v2608, %v2136
      %v2780 = vmax.bf16 %v2609, %v2139
      %v2781 = vmax.bf16 %v2610, %v2142
      %v2782 = vmax.bf16 %v2611, %v2145
      %v2783 = vmax.bf16 %v2612, %v2148
      %v2784 = vmax.bf16 %v2613, %v2151
      %v2785 = vmax.bf16 %v2614, %v2154
      %v2786 = vmax.bf16 %v2615, %v2157
      %v2787 = vmax.bf16 %v2616, %v2160
      %v2788 = vmax.bf16 %v2617, %v2163
      %v2789 = vmax.bf16 %v2618, %v2166
      %v2790 = vmax.bf16 %v2619, %v2169
      %v2791 = vmax.bf16 %v2620, %v2172
      %v2792 = vmax.bf16 %v2621, %v2175
      %v2793 = vmax.bf16 %v2622, %v2178
      %v2794 = vmax.bf16 %v2623, %v2181
      %v2795 = vmax.bf16 %v2624, %v2184
      %v2796 = vmax.bf16 %v2625, %v2187
      %v2797 = vmax.bf16 %v2626, %v2190
      %v2798 = vmax.bf16 %v2627, %v2193
      %v2799 = vmax.bf16 %v2628, %v2196
      %v2800 = vmax.bf16 %v2629, %v2199
      %v2801 = vmax.bf16 %v2630, %v2202
      %v2802 = vmax.bf16 %v2631, %v2205
      %v2803 = vmax.bf16 %v2632, %v2208
      %v2804 = vmax.bf16 %v2633, %v2211
      %v2805 = vmax.bf16 %v2634, %v2214
      %v2806 = vmax.bf16 %v2635, %v2217
      %v2807 = vmax.bf16 %v2636, %v2220
      %v2808 = vmax.bf16 %v2637, %v2223
      %v2809 = vmax.bf16 %v2638, %v2226
      %v2810 = vmax.bf16 %v2639, %v2229
      %v2811 = vmax.bf16 %v2640, %v2232
      %v2812 = vmax.bf16 %v2641, %v2235
      %v2813 = vmax.bf16 %v2642, %v2238
      %v2814 = vmax.bf16 %v2643, %v2241
      %v2815 = vmax.bf16 %v2644, %v2244
      %v2816 = vmax.bf16 %v2645, %v2247
      %v2817 = vmax.bf16 %v2646, %v2250
      %v2818 = vmax.bf16 %v2647, %v2253
      %v2819 = vmax.bf16 %v2648, %v2256
      %v2820 = vmax.bf16 %v2649, %v2259
      %v2821 = vmax.bf16 %v2650, %v2262
      %v2822 = vmax.bf16 %v2651, %v2265
      %v2823 = vmax.bf16 %v2652, %v2268
      %v2824 = vmax.bf16 %v2653, %v2271
      %v2825 = vmax.bf16 %v2654, %v2274
      %v2826 = vmax.bf16 %v2655, %v2277
      %v2827 = vmax.bf16 %v2656, %v2280
      %v2828 = vmax.bf16 %v2657, %v2283
      %v2829 = vmax.bf16 %v2658, %v2286
      %v2830 = vmax.bf16 %v2659, %v2289
      %v2831 = vmax.bf16 %v2660, %v2292
      %v2832 = vmax.bf16 %v2661, %v2295
      %v2833 = vmax.bf16 %v2662, %v2298
      %v2834 = vmax.bf16 %v2663, %v2301
      %v2835 = vmax.bf16 %v2664, %v2304
      %v2836 = vmax.bf16 %v2665, %v2307
      %v2837 = vmax.bf16 %v2666, %v2310
      %v2838 = vmax.bf16 %v2667, %v2313
      %v2839 = vmax.bf16 %v2668, %v2316
      %v2840 = vmax.bf16 %v2669, %v2319
      %v2841 = vmax.bf16 %v2670, %v2322
      %v2842 = vmax.bf16 %v2671, %v2325
      %v2843 = vmax.bf16 %v2672, %v2328
      %v2844 = vmax.bf16 %v2673, %v2331
      %v2845 = vmax.bf16 %v2674, %v2334
      %v2846 = vmax.bf16 %v2675, %v2337
      %v2847 = vmax.bf16 %v2676, %v2340
      %v2848 = vmax.bf16 %v2677, %v2343
      %v2849 = vmax.bf16 %v2678, %v2346
      %v2850 = vmax.bf16 %v2679, %v2349
      %v2851 = vmax.bf16 %v2680, %v2352
      %v2852 = vmax.bf16 %v2681, %v2355
      %v2853 = vmax.bf16 %v2682, %v2358
      %v2854 = vmax.bf16 %v2683, %v2361
      %v2855 = vmax.bf16 %v2684, %v2364
      %v2856 = vmax.bf16 %v2685, %v2367
      %v2857 = vmax.bf16 %v2686, %v2370
      %v2858 = vmax.bf16 %v2687, %v2373
      %v2859 = vmax.bf16 %v2688, %v2376
      %v2860 = vmax.bf16 %v2689, %v2379
      %v2861 = vmax.bf16 %v2690, %v2382
      %v2862 = vmax.bf16 %v2691, %v2385
      %v2863 = vmax.bf16 %v2692, %v2388
      %v2864 = vmax.bf16 %v2693, %v2391
      %v2865 = vmax.bf16 %v2694, %v2394
      %v2866 = vmax.bf16 %v2695, %v2397
      %v2867 = vmax.bf16 %v2696, %v2400
      %v2868 = vmax.bf16 %v2697, %v2403
      %v2869 = vmax.bf16 %v2698, %v2406
      %v2870 = vmax.bf16 %v2699, %v2409
      %v2871 = vmax.bf16 %v2700, %v2412
      %v2872 = vmax.bf16 %v2701, %v2415
      %v2873 = vmax.bf16 %v2702, %v2418
      %v2874 = vmax.bf16 %v2703, %v2421
      %v2875 = vmax.bf16 %v2704, %v2424
      %v2876 = vmax.bf16 %v2705, %v2427
      %v2877 = vmax.bf16 %v2706, %v2430
      %v2878 = vmax.bf16 %v2707, %v2433
      %v2879 = vmax.bf16 %v2708, %v2436
      %v2880 = vmax.bf16 %v2709, %v2439
      %v2881 = vmax.bf16 %v2710, %v2731
      %v2882 = vmax.bf16 %v2711, %v2734
      %v2883 = vmax.bf16 %v2712, %v2737
      %v2884 = vmax.bf16 %v2713, %v2740
      %v2885 = vmax.bf16 %v2714, %v2743
      %v2886 = vld [vmem:[%s111 + $0x230] sm:$0x3]
      %vm2887 = vsmask.f32 2304
      %vm2888 = vsmask.f32 6416
      %vm2889 = vmor %vm2887, %vm2888
      %v2891 = vshrl.u32 %v2715, 16
      %v2893 = vrot.slane %v2891, 5
      %v2894 = vshll.u32 %v2715, 16
      %v2896 = vrot.slane %v2894, 6
      %v2897 = vor.u32 %v2893, %v2896
      %v2898 = vrot.slane %v2897, 4
      %v2899 = vrot.slane %v311, 5
      %v2900 = vrot.slane %v307, 6
      %v2901 = vor.u32 %v2899, %v2900
      %v2902 = vsel %vm2889, %v2898, %v2901
      %v2903 = vrot.slane %v2901, 4
      %v2904 = vrot.slane %v321, 5
      %v2905 = vrot.slane %v317, 6
      %v2906 = vor.u32 %v2904, %v2905
      %v2907 = vsel %vm2889, %v2903, %v2906
      %v2908 = vrot.slane %v2906, 4
      %v2909 = vrot.slane %v331, 5
      %v2910 = vrot.slane %v327, 6
      %v2911 = vor.u32 %v2909, %v2910
      %v2912 = vsel %vm2889, %v2908, %v2911
      %v2913 = vrot.slane %v2911, 4
      %v2914 = vrot.slane %v341, 5
      %v2915 = vrot.slane %v337, 6
      %v2916 = vor.u32 %v2914, %v2915
      %v2917 = vsel %vm2889, %v2913, %v2916
      %v2918 = vrot.slane %v2916, 4
      %v2919 = vrot.slane %v351, 5
      %v2920 = vrot.slane %v347, 6
      %v2921 = vor.u32 %v2919, %v2920
      %v2922 = vsel %vm2889, %v2918, %v2921
      %v2923 = vrot.slane %v2921, 4
      %v2924 = vrot.slane %v361, 5
      %v2925 = vrot.slane %v357, 6
      %v2926 = vor.u32 %v2924, %v2925
      %v2927 = vsel %vm2889, %v2923, %v2926
      %v2928 = vrot.slane %v2926, 4
      %v2929 = vrot.slane %v371, 5
      %v2930 = vrot.slane %v367, 6
      %v2931 = vor.u32 %v2929, %v2930
      %v2932 = vsel %vm2889, %v2928, %v2931
      %v2933 = vrot.slane %v2931, 4
      %v2934 = vrot.slane %v381, 5
      %v2935 = vrot.slane %v377, 6
      %v2936 = vor.u32 %v2934, %v2935
      %v2937 = vsel %vm2889, %v2933, %v2936
      %v2938 = vrot.slane %v2936, 4
      %v2939 = vrot.slane %v391, 5
      %v2940 = vrot.slane %v387, 6
      %v2941 = vor.u32 %v2939, %v2940
      %v2942 = vsel %vm2889, %v2938, %v2941
      %v2943 = vrot.slane %v2941, 4
      %v2944 = vrot.slane %v401, 5
      %v2945 = vrot.slane %v397, 6
      %v2946 = vor.u32 %v2944, %v2945
      %v2947 = vsel %vm2889, %v2943, %v2946
      %v2948 = vrot.slane %v2946, 4
      %v2949 = vrot.slane %v411, 5
      %v2950 = vrot.slane %v407, 6
      %v2951 = vor.u32 %v2949, %v2950
      %v2952 = vsel %vm2889, %v2948, %v2951
      %v2953 = vrot.slane %v2951, 4
      %v2954 = vrot.slane %v421, 5
      %v2955 = vrot.slane %v417, 6
      %v2956 = vor.u32 %v2954, %v2955
      %v2957 = vsel %vm2889, %v2953, %v2956
      %v2958 = vrot.slane %v2956, 4
      %v2959 = vrot.slane %v431, 5
      %v2960 = vrot.slane %v427, 6
      %v2961 = vor.u32 %v2959, %v2960
      %v2962 = vsel %vm2889, %v2958, %v2961
      %v2963 = vrot.slane %v2961, 4
      %v2964 = vrot.slane %v441, 5
      %v2965 = vrot.slane %v437, 6
      %v2966 = vor.u32 %v2964, %v2965
      %v2967 = vsel %vm2889, %v2963, %v2966
      %v2968 = vrot.slane %v2966, 4
      %v2969 = vrot.slane %v451, 5
      %v2970 = vrot.slane %v447, 6
      %v2971 = vor.u32 %v2969, %v2970
      %v2972 = vsel %vm2889, %v2968, %v2971
      %v2973 = vrot.slane %v2971, 4
      %v2974 = vrot.slane %v461, 5
      %v2975 = vrot.slane %v457, 6
      %v2976 = vor.u32 %v2974, %v2975
      %v2977 = vsel %vm2889, %v2973, %v2976
      %v2978 = vrot.slane %v2976, 4
      %v2979 = vrot.slane %v471, 5
      %v2980 = vrot.slane %v467, 6
      %v2981 = vor.u32 %v2979, %v2980
      %v2982 = vsel %vm2889, %v2978, %v2981
      %v2983 = vrot.slane %v2981, 4
      %v2984 = vrot.slane %v481, 5
      %v2985 = vrot.slane %v477, 6
      %v2986 = vor.u32 %v2984, %v2985
      %v2987 = vsel %vm2889, %v2983, %v2986
      %v2988 = vrot.slane %v2986, 4
      %v2989 = vrot.slane %v491, 5
      %v2990 = vrot.slane %v487, 6
      %v2991 = vor.u32 %v2989, %v2990
      %v2992 = vsel %vm2889, %v2988, %v2991
      %v2993 = vrot.slane %v2991, 4
      %v2994 = vrot.slane %v501, 5
      %v2995 = vrot.slane %v497, 6
      %v2996 = vor.u32 %v2994, %v2995
      %v2997 = vsel %vm2889, %v2993, %v2996
      %v2998 = vrot.slane %v2996, 4
      %v2999 = vrot.slane %v511, 5
      %v3000 = vrot.slane %v507, 6
      %v3001 = vor.u32 %v2999, %v3000
      %v3002 = vsel %vm2889, %v2998, %v3001
      %v3003 = vrot.slane %v3001, 4
      %v3004 = vrot.slane %v521, 5
      %v3005 = vrot.slane %v517, 6
      %v3006 = vor.u32 %v3004, %v3005
      %v3007 = vsel %vm2889, %v3003, %v3006
      %v3008 = vrot.slane %v3006, 4
      %v3009 = vrot.slane %v531, 5
      %v3010 = vrot.slane %v527, 6
      %v3011 = vor.u32 %v3009, %v3010
      %v3012 = vsel %vm2889, %v3008, %v3011
      %v3013 = vrot.slane %v3011, 4
      %v3014 = vrot.slane %v541, 5
      %v3015 = vrot.slane %v537, 6
      %v3016 = vor.u32 %v3014, %v3015
      %v3017 = vsel %vm2889, %v3013, %v3016
      %v3018 = vrot.slane %v3016, 4
      %v3019 = vrot.slane %v551, 5
      %v3020 = vrot.slane %v547, 6
      %v3021 = vor.u32 %v3019, %v3020
      %v3022 = vsel %vm2889, %v3018, %v3021
      %v3023 = vrot.slane %v3021, 4
      %v3024 = vrot.slane %v561, 5
      %v3025 = vrot.slane %v557, 6
      %v3026 = vor.u32 %v3024, %v3025
      %v3027 = vsel %vm2889, %v3023, %v3026
      %v3028 = vrot.slane %v3026, 4
      %v3029 = vrot.slane %v571, 5
      %v3030 = vrot.slane %v567, 6
      %v3031 = vor.u32 %v3029, %v3030
      %v3032 = vsel %vm2889, %v3028, %v3031
      %v3033 = vrot.slane %v3031, 4
      %v3034 = vrot.slane %v581, 5
      %v3035 = vrot.slane %v577, 6
      %v3036 = vor.u32 %v3034, %v3035
      %v3037 = vsel %vm2889, %v3033, %v3036
      %v3038 = vrot.slane %v3036, 4
      %v3039 = vrot.slane %v591, 5
      %v3040 = vrot.slane %v587, 6
      %v3041 = vor.u32 %v3039, %v3040
      %v3042 = vsel %vm2889, %v3038, %v3041
      %v3043 = vrot.slane %v3041, 4
      %v3044 = vrot.slane %v601, 5
      %v3045 = vrot.slane %v597, 6
      %v3046 = vor.u32 %v3044, %v3045
      %v3047 = vsel %vm2889, %v3043, %v3046
      %v3048 = vrot.slane %v3046, 4
      %v3049 = vrot.slane %v611, 5
      %v3050 = vrot.slane %v607, 6
      %v3051 = vor.u32 %v3049, %v3050
      %v3052 = vsel %vm2889, %v3048, %v3051
      %v3053 = vrot.slane %v3051, 4
      %v3054 = vrot.slane %v621, 5
      %v3055 = vrot.slane %v617, 6
      %v3056 = vor.u32 %v3054, %v3055
      %v3057 = vsel %vm2889, %v3053, %v3056
      %v3058 = vrot.slane %v3056, 4
      %v3059 = vrot.slane %v631, 5
      %v3060 = vrot.slane %v627, 6
      %v3061 = vor.u32 %v3059, %v3060
      %v3062 = vsel %vm2889, %v3058, %v3061
      %v3063 = vrot.slane %v3061, 4
      %v3064 = vrot.slane %v641, 5
      %v3065 = vrot.slane %v637, 6
      %v3066 = vor.u32 %v3064, %v3065
      %v3067 = vsel %vm2889, %v3063, %v3066
      %v3068 = vrot.slane %v3066, 4
      %v3069 = vrot.slane %v651, 5
      %v3070 = vrot.slane %v647, 6
      %v3071 = vor.u32 %v3069, %v3070
      %v3072 = vsel %vm2889, %v3068, %v3071
      %v3073 = vrot.slane %v3071, 4
      %v3074 = vrot.slane %v661, 5
      %v3075 = vrot.slane %v657, 6
      %v3076 = vor.u32 %v3074, %v3075
      %v3077 = vsel %vm2889, %v3073, %v3076
      %v3078 = vrot.slane %v3076, 4
      %v3079 = vrot.slane %v671, 5
      %v3080 = vrot.slane %v667, 6
      %v3081 = vor.u32 %v3079, %v3080
      %v3082 = vsel %vm2889, %v3078, %v3081
      %v3083 = vrot.slane %v3081, 4
      %v3084 = vrot.slane %v681, 5
      %v3085 = vrot.slane %v677, 6
      %v3086 = vor.u32 %v3084, %v3085
      %v3087 = vsel %vm2889, %v3083, %v3086
      %v3088 = vrot.slane %v3086, 4
      %v3089 = vrot.slane %v691, 5
      %v3090 = vrot.slane %v687, 6
      %v3091 = vor.u32 %v3089, %v3090
      %v3092 = vsel %vm2889, %v3088, %v3091
      %v3093 = vrot.slane %v3091, 4
      %v3094 = vrot.slane %v701, 5
      %v3095 = vrot.slane %v697, 6
      %v3096 = vor.u32 %v3094, %v3095
      %v3097 = vsel %vm2889, %v3093, %v3096
      %v3098 = vrot.slane %v3096, 4
      %v3099 = vrot.slane %v711, 5
      %v3100 = vrot.slane %v707, 6
      %v3101 = vor.u32 %v3099, %v3100
      %v3102 = vsel %vm2889, %v3098, %v3101
      %v3103 = vrot.slane %v3101, 4
      %v3104 = vrot.slane %v721, 5
      %v3105 = vrot.slane %v717, 6
      %v3106 = vor.u32 %v3104, %v3105
      %v3107 = vsel %vm2889, %v3103, %v3106
      %v3108 = vrot.slane %v3106, 4
      %v3109 = vrot.slane %v731, 5
      %v3110 = vrot.slane %v727, 6
      %v3111 = vor.u32 %v3109, %v3110
      %v3112 = vsel %vm2889, %v3108, %v3111
      %v3113 = vrot.slane %v3111, 4
      %v3114 = vrot.slane %v741, 5
      %v3115 = vrot.slane %v737, 6
      %v3116 = vor.u32 %v3114, %v3115
      %v3117 = vsel %vm2889, %v3113, %v3116
      %v3118 = vrot.slane %v3116, 4
      %v3119 = vrot.slane %v751, 5
      %v3120 = vrot.slane %v747, 6
      %v3121 = vor.u32 %v3119, %v3120
      %v3122 = vsel %vm2889, %v3118, %v3121
      %v3123 = vrot.slane %v3121, 4
      %v3124 = vrot.slane %v761, 5
      %v3125 = vrot.slane %v757, 6
      %v3126 = vor.u32 %v3124, %v3125
      %v3127 = vsel %vm2889, %v3123, %v3126
      %v3128 = vrot.slane %v3126, 4
      %v3129 = vrot.slane %v771, 5
      %v3130 = vrot.slane %v767, 6
      %v3131 = vor.u32 %v3129, %v3130
      %v3132 = vsel %vm2889, %v3128, %v3131
      %v3133 = vrot.slane %v3131, 4
      %v3134 = vrot.slane %v781, 5
      %v3135 = vrot.slane %v777, 6
      %v3136 = vor.u32 %v3134, %v3135
      %v3137 = vsel %vm2889, %v3133, %v3136
      %v3138 = vrot.slane %v3136, 4
      %v3139 = vrot.slane %v791, 5
      %v3140 = vrot.slane %v787, 6
      %v3141 = vor.u32 %v3139, %v3140
      %v3142 = vsel %vm2889, %v3138, %v3141
      %v3143 = vrot.slane %v3141, 4
      %v3144 = vrot.slane %v801, 5
      %v3145 = vrot.slane %v797, 6
      %v3146 = vor.u32 %v3144, %v3145
      %v3147 = vsel %vm2889, %v3143, %v3146
      %v3148 = vrot.slane %v3146, 4
      %v3149 = vrot.slane %v811, 5
      %v3150 = vrot.slane %v807, 6
      %v3151 = vor.u32 %v3149, %v3150
      %v3152 = vsel %vm2889, %v3148, %v3151
      %v3153 = vrot.slane %v3151, 4
      %v3154 = vrot.slane %v821, 5
      %v3155 = vrot.slane %v817, 6
      %v3156 = vor.u32 %v3154, %v3155
      %v3157 = vsel %vm2889, %v3153, %v3156
      %v3158 = vrot.slane %v3156, 4
      %v3159 = vrot.slane %v831, 5
      %v3160 = vrot.slane %v827, 6
      %v3161 = vor.u32 %v3159, %v3160
      %v3162 = vsel %vm2889, %v3158, %v3161
      %v3163 = vrot.slane %v3161, 4
      %v3164 = vrot.slane %v841, 5
      %v3165 = vrot.slane %v837, 6
      %v3166 = vor.u32 %v3164, %v3165
      %v3167 = vsel %vm2889, %v3163, %v3166
      %v3168 = vrot.slane %v3166, 4
      %v3169 = vrot.slane %v851, 5
      %v3170 = vrot.slane %v847, 6
      %v3171 = vor.u32 %v3169, %v3170
      %v3172 = vsel %vm2889, %v3168, %v3171
      %v3173 = vrot.slane %v3171, 4
      %v3174 = vrot.slane %v861, 5
      %v3175 = vrot.slane %v857, 6
      %v3176 = vor.u32 %v3174, %v3175
      %v3177 = vsel %vm2889, %v3173, %v3176
      %v3178 = vrot.slane %v3176, 4
      %v3179 = vrot.slane %v871, 5
      %v3180 = vrot.slane %v867, 6
      %v3181 = vor.u32 %v3179, %v3180
      %v3182 = vsel %vm2889, %v3178, %v3181
      %v3183 = vrot.slane %v3181, 4
      %v3184 = vrot.slane %v881, 5
      %v3185 = vrot.slane %v877, 6
      %v3186 = vor.u32 %v3184, %v3185
      %v3187 = vsel %vm2889, %v3183, %v3186
      %v3188 = vrot.slane %v3186, 4
      %v3189 = vrot.slane %v891, 5
      %v3190 = vrot.slane %v887, 6
      %v3191 = vor.u32 %v3189, %v3190
      %v3192 = vsel %vm2889, %v3188, %v3191
      %v3193 = vrot.slane %v3191, 4
      %v3194 = vrot.slane %v901, 5
      %v3195 = vrot.slane %v897, 6
      %v3196 = vor.u32 %v3194, %v3195
      %v3197 = vsel %vm2889, %v3193, %v3196
      %v3198 = vrot.slane %v3196, 4
      %v3199 = vrot.slane %v911, 5
      %v3200 = vrot.slane %v907, 6
      %v3201 = vor.u32 %v3199, %v3200
      %v3202 = vsel %vm2889, %v3198, %v3201
      %v3203 = vrot.slane %v3201, 4
      %v3204 = vrot.slane %v921, 5
      %v3205 = vrot.slane %v917, 6
      %v3206 = vor.u32 %v3204, %v3205
      %v3207 = vsel %vm2889, %v3203, %v3206
      %v3208 = vrot.slane %v3206, 4
      %v3209 = vrot.slane %v931, 5
      %v3210 = vrot.slane %v927, 6
      %v3211 = vor.u32 %v3209, %v3210
      %v3212 = vsel %vm2889, %v3208, %v3211
      %v3213 = vrot.slane %v3211, 4
      %v3214 = vrot.slane %v941, 5
      %v3215 = vrot.slane %v937, 6
      %v3216 = vor.u32 %v3214, %v3215
      %v3217 = vsel %vm2889, %v3213, %v3216
      %v3218 = vrot.slane %v3216, 4
      %v3219 = vrot.slane %v951, 5
      %v3220 = vrot.slane %v947, 6
      %v3221 = vor.u32 %v3219, %v3220
      %v3222 = vsel %vm2889, %v3218, %v3221
      %v3223 = vrot.slane %v3221, 4
      %v3224 = vrot.slane %v961, 5
      %v3225 = vrot.slane %v957, 6
      %v3226 = vor.u32 %v3224, %v3225
      %v3227 = vsel %vm2889, %v3223, %v3226
      %v3228 = vrot.slane %v3226, 4
      %v3229 = vrot.slane %v971, 5
      %v3230 = vrot.slane %v967, 6
      %v3231 = vor.u32 %v3229, %v3230
      %v3232 = vsel %vm2889, %v3228, %v3231
      %v3233 = vrot.slane %v3231, 4
      %v3234 = vrot.slane %v981, 5
      %v3235 = vrot.slane %v977, 6
      %v3236 = vor.u32 %v3234, %v3235
      %v3237 = vsel %vm2889, %v3233, %v3236
      %v3238 = vrot.slane %v3236, 4
      %v3239 = vrot.slane %v991, 5
      %v3240 = vrot.slane %v987, 6
      %v3241 = vor.u32 %v3239, %v3240
      %v3242 = vsel %vm2889, %v3238, %v3241
      %v3243 = vrot.slane %v3241, 4
      %v3244 = vrot.slane %v1001, 5
      %v3245 = vrot.slane %v997, 6
      %v3246 = vor.u32 %v3244, %v3245
      %v3247 = vsel %vm2889, %v3243, %v3246
      %v3248 = vrot.slane %v3246, 4
      %v3249 = vrot.slane %v1011, 5
      %v3250 = vrot.slane %v1007, 6
      %v3251 = vor.u32 %v3249, %v3250
      %v3252 = vsel %vm2889, %v3248, %v3251
      %v3253 = vrot.slane %v3251, 4
      %v3254 = vrot.slane %v1021, 5
      %v3255 = vrot.slane %v1017, 6
      %v3256 = vor.u32 %v3254, %v3255
      %v3257 = vsel %vm2889, %v3253, %v3256
      %v3258 = vrot.slane %v3256, 4
      %v3259 = vrot.slane %v1031, 5
      %v3260 = vrot.slane %v1027, 6
      %v3261 = vor.u32 %v3259, %v3260
      %v3262 = vsel %vm2889, %v3258, %v3261
      %v3263 = vrot.slane %v3261, 4
      %v3264 = vrot.slane %v1041, 5
      %v3265 = vrot.slane %v1037, 6
      %v3266 = vor.u32 %v3264, %v3265
      %v3267 = vsel %vm2889, %v3263, %v3266
      %v3268 = vrot.slane %v3266, 4
      %v3269 = vrot.slane %v1051, 5
      %v3270 = vrot.slane %v1047, 6
      %v3271 = vor.u32 %v3269, %v3270
      %v3272 = vsel %vm2889, %v3268, %v3271
      %v3273 = vrot.slane %v3271, 4
      %v3274 = vrot.slane %v1061, 5
      %v3275 = vrot.slane %v1057, 6
      %v3276 = vor.u32 %v3274, %v3275
      %v3277 = vsel %vm2889, %v3273, %v3276
      %v3278 = vrot.slane %v3276, 4
      %v3279 = vrot.slane %v1071, 5
      %v3280 = vrot.slane %v1067, 6
      %v3281 = vor.u32 %v3279, %v3280
      %v3282 = vsel %vm2889, %v3278, %v3281
      %v3283 = vrot.slane %v3281, 4
      %v3284 = vrot.slane %v1081, 5
      %v3285 = vrot.slane %v1077, 6
      %v3286 = vor.u32 %v3284, %v3285
      %v3287 = vsel %vm2889, %v3283, %v3286
      %v3288 = vrot.slane %v3286, 4
      %v3289 = vrot.slane %v1091, 5
      %v3290 = vrot.slane %v1087, 6
      %v3291 = vor.u32 %v3289, %v3290
      %v3292 = vsel %vm2889, %v3288, %v3291
      %v3293 = vrot.slane %v3291, 4
      %v3294 = vrot.slane %v1101, 5
      %v3295 = vrot.slane %v1097, 6
      %v3296 = vor.u32 %v3294, %v3295
      %v3297 = vsel %vm2889, %v3293, %v3296
      %v3298 = vrot.slane %v3296, 4
      %v3299 = vrot.slane %v1111, 5
      %v3300 = vrot.slane %v1107, 6
      %v3301 = vor.u32 %v3299, %v3300
      %v3302 = vsel %vm2889, %v3298, %v3301
      %v3303 = vrot.slane %v3301, 4
      %v3304 = vrot.slane %v1121, 5
      %v3305 = vrot.slane %v1117, 6
      %v3306 = vor.u32 %v3304, %v3305
      %v3307 = vsel %vm2889, %v3303, %v3306
      %v3308 = vrot.slane %v3306, 4
      %v3309 = vrot.slane %v1131, 5
      %v3310 = vrot.slane %v1127, 6
      %v3311 = vor.u32 %v3309, %v3310
      %v3312 = vsel %vm2889, %v3308, %v3311
      %v3313 = vrot.slane %v3311, 4
      %v3314 = vrot.slane %v1141, 5
      %v3315 = vrot.slane %v1137, 6
      %v3316 = vor.u32 %v3314, %v3315
      %v3317 = vsel %vm2889, %v3313, %v3316
      %v3318 = vrot.slane %v3316, 4
      %v3319 = vrot.slane %v1151, 5
      %v3320 = vrot.slane %v1147, 6
      %v3321 = vor.u32 %v3319, %v3320
      %v3322 = vsel %vm2889, %v3318, %v3321
      %v3323 = vrot.slane %v3321, 4
      %v3324 = vrot.slane %v1161, 5
      %v3325 = vrot.slane %v1157, 6
      %v3326 = vor.u32 %v3324, %v3325
      %v3327 = vsel %vm2889, %v3323, %v3326
      %v3328 = vrot.slane %v3326, 4
      %v3329 = vrot.slane %v1171, 5
      %v3330 = vrot.slane %v1167, 6
      %v3331 = vor.u32 %v3329, %v3330
      %v3332 = vsel %vm2889, %v3328, %v3331
      %v3333 = vrot.slane %v3331, 4
      %v3334 = vrot.slane %v1181, 5
      %v3335 = vrot.slane %v1177, 6
      %v3336 = vor.u32 %v3334, %v3335
      %v3337 = vsel %vm2889, %v3333, %v3336
      %v3338 = vrot.slane %v3336, 4
      %v3339 = vrot.slane %v1191, 5
      %v3340 = vrot.slane %v1187, 6
      %v3341 = vor.u32 %v3339, %v3340
      %v3342 = vsel %vm2889, %v3338, %v3341
      %v3343 = vrot.slane %v3341, 4
      %v3344 = vrot.slane %v1201, 5
      %v3345 = vrot.slane %v1197, 6
      %v3346 = vor.u32 %v3344, %v3345
      %v3347 = vsel %vm2889, %v3343, %v3346
      %v3348 = vrot.slane %v3346, 4
      %v3349 = vrot.slane %v1211, 5
      %v3350 = vrot.slane %v1207, 6
      %v3351 = vor.u32 %v3349, %v3350
      %v3352 = vsel %vm2889, %v3348, %v3351
      %v3353 = vrot.slane %v3351, 4
      %v3354 = vrot.slane %v1221, 5
      %v3355 = vrot.slane %v1217, 6
      %v3356 = vor.u32 %v3354, %v3355
      %v3357 = vsel %vm2889, %v3353, %v3356
      %v3358 = vrot.slane %v3356, 4
      %v3359 = vrot.slane %v1231, 5
      %v3360 = vrot.slane %v1227, 6
      %v3361 = vor.u32 %v3359, %v3360
      %v3362 = vsel %vm2889, %v3358, %v3361
      %v3363 = vrot.slane %v3361, 4
      %v3364 = vrot.slane %v1241, 5
      %v3365 = vrot.slane %v1237, 6
      %v3366 = vor.u32 %v3364, %v3365
      %v3367 = vsel %vm2889, %v3363, %v3366
      %v3368 = vrot.slane %v3366, 4
      %v3369 = vrot.slane %v1251, 5
      %v3370 = vrot.slane %v1247, 6
      %v3371 = vor.u32 %v3369, %v3370
      %v3372 = vsel %vm2889, %v3368, %v3371
      %v3373 = vrot.slane %v3371, 4
      %v3374 = vrot.slane %v1261, 5
      %v3375 = vrot.slane %v1257, 6
      %v3376 = vor.u32 %v3374, %v3375
      %v3377 = vsel %vm2889, %v3373, %v3376
      %v3378 = vrot.slane %v3376, 4
      %v3379 = vrot.slane %v1271, 5
      %v3380 = vrot.slane %v1267, 6
      %v3381 = vor.u32 %v3379, %v3380
      %v3382 = vsel %vm2889, %v3378, %v3381
      %v3383 = vrot.slane %v3381, 4
      %v3384 = vrot.slane %v1281, 5
      %v3385 = vrot.slane %v1277, 6
      %v3386 = vor.u32 %v3384, %v3385
      %v3387 = vsel %vm2889, %v3383, %v3386
      %v3388 = vrot.slane %v3386, 4
      %v3389 = vrot.slane %v1291, 5
      %v3390 = vrot.slane %v1287, 6
      %v3391 = vor.u32 %v3389, %v3390
      %v3392 = vsel %vm2889, %v3388, %v3391
      %v3393 = vrot.slane %v3391, 4
      %v3394 = vrot.slane %v1301, 5
      %v3395 = vrot.slane %v1297, 6
      %v3396 = vor.u32 %v3394, %v3395
      %v3397 = vsel %vm2889, %v3393, %v3396
      %v3398 = vrot.slane %v3396, 4
      %v3399 = vrot.slane %v1311, 5
      %v3400 = vrot.slane %v1307, 6
      %v3401 = vor.u32 %v3399, %v3400
      %v3402 = vsel %vm2889, %v3398, %v3401
      %v3403 = vrot.slane %v3401, 4
      %v3404 = vrot.slane %v1321, 5
      %v3405 = vrot.slane %v1317, 6
      %v3406 = vor.u32 %v3404, %v3405
      %v3407 = vsel %vm2889, %v3403, %v3406
      %v3408 = vrot.slane %v3406, 4
      %v3409 = vrot.slane %v1331, 5
      %v3410 = vrot.slane %v1327, 6
      %v3411 = vor.u32 %v3409, %v3410
      %v3412 = vsel %vm2889, %v3408, %v3411
      %v3413 = vrot.slane %v3411, 4
      %v3414 = vrot.slane %v1341, 5
      %v3415 = vrot.slane %v1337, 6
      %v3416 = vor.u32 %v3414, %v3415
      %v3417 = vsel %vm2889, %v3413, %v3416
      %v3418 = vrot.slane %v3416, 4
      %v3419 = vrot.slane %v1351, 5
      %v3420 = vrot.slane %v1347, 6
      %v3421 = vor.u32 %v3419, %v3420
      %v3422 = vsel %vm2889, %v3418, %v3421
      %v3423 = vrot.slane %v3421, 4
      %v3424 = vrot.slane %v1361, 5
      %v3425 = vrot.slane %v1357, 6
      %v3426 = vor.u32 %v3424, %v3425
      %v3427 = vsel %vm2889, %v3423, %v3426
      %v3428 = vrot.slane %v3426, 4
      %v3429 = vrot.slane %v1371, 5
      %v3430 = vrot.slane %v1367, 6
      %v3431 = vor.u32 %v3429, %v3430
      %v3432 = vsel %vm2889, %v3428, %v3431
      %v3433 = vrot.slane %v3431, 4
      %v3434 = vrot.slane %v1381, 5
      %v3435 = vrot.slane %v1377, 6
      %v3436 = vor.u32 %v3434, %v3435
      %v3437 = vsel %vm2889, %v3433, %v3436
      %v3438 = vrot.slane %v3436, 4
      %v3439 = vrot.slane %v1391, 5
      %v3440 = vrot.slane %v1387, 6
      %v3441 = vor.u32 %v3439, %v3440
      %v3442 = vsel %vm2889, %v3438, %v3441
      %v3443 = vrot.slane %v3441, 4
      %v3444 = vrot.slane %v1401, 5
      %v3445 = vrot.slane %v1397, 6
      %v3446 = vor.u32 %v3444, %v3445
      %v3447 = vsel %vm2889, %v3443, %v3446
      %v3448 = vrot.slane %v3446, 4
      %v3449 = vrot.slane %v1411, 5
      %v3450 = vrot.slane %v1407, 6
      %v3451 = vor.u32 %v3449, %v3450
      %v3452 = vsel %vm2889, %v3448, %v3451
      %v3453 = vrot.slane %v3451, 4
      %v3454 = vrot.slane %v1421, 5
      %v3455 = vrot.slane %v1417, 6
      %v3456 = vor.u32 %v3454, %v3455
      %v3457 = vsel %vm2889, %v3453, %v3456
      %v3458 = vrot.slane %v3456, 4
      %v3459 = vrot.slane %v1431, 5
      %v3460 = vrot.slane %v1427, 6
      %v3461 = vor.u32 %v3459, %v3460
      %v3462 = vsel %vm2889, %v3458, %v3461
      %v3463 = vrot.slane %v3461, 4
      %v3464 = vrot.slane %v1441, 5
      %v3465 = vrot.slane %v1437, 6
      %v3466 = vor.u32 %v3464, %v3465
      %v3467 = vsel %vm2889, %v3463, %v3466
      %v3468 = vrot.slane %v3466, 4
      %v3469 = vrot.slane %v1451, 5
      %v3470 = vrot.slane %v1447, 6
      %v3471 = vor.u32 %v3469, %v3470
      %v3472 = vsel %vm2889, %v3468, %v3471
      %v3473 = vrot.slane %v3471, 4
      %v3474 = vrot.slane %v1461, 5
      %v3475 = vrot.slane %v1457, 6
      %v3476 = vor.u32 %v3474, %v3475
      %v3477 = vsel %vm2889, %v3473, %v3476
      %v3478 = vrot.slane %v3476, 4
      %v3479 = vrot.slane %v1471, 5
      %v3480 = vrot.slane %v1467, 6
      %v3481 = vor.u32 %v3479, %v3480
      %v3482 = vsel %vm2889, %v3478, %v3481
      %v3483 = vrot.slane %v3481, 4
      %v3484 = vrot.slane %v1481, 5
      %v3485 = vrot.slane %v1477, 6
      %v3486 = vor.u32 %v3484, %v3485
      %v3487 = vsel %vm2889, %v3483, %v3486
      %v3488 = vrot.slane %v3486, 4
      %v3489 = vrot.slane %v1491, 5
      %v3490 = vrot.slane %v1487, 6
      %v3491 = vor.u32 %v3489, %v3490
      %v3492 = vsel %vm2889, %v3488, %v3491
      %v3493 = vrot.slane %v3491, 4
      %v3494 = vrot.slane %v1501, 5
      %v3495 = vrot.slane %v1497, 6
      %v3496 = vor.u32 %v3494, %v3495
      %v3497 = vsel %vm2889, %v3493, %v3496
      %v3498 = vrot.slane %v3496, 4
      %v3499 = vrot.slane %v1511, 5
      %v3500 = vrot.slane %v1507, 6
      %v3501 = vor.u32 %v3499, %v3500
      %v3502 = vsel %vm2889, %v3498, %v3501
      %v3503 = vrot.slane %v3501, 4
      %v3504 = vrot.slane %v1521, 5
      %v3505 = vrot.slane %v1517, 6
      %v3506 = vor.u32 %v3504, %v3505
      %v3507 = vsel %vm2889, %v3503, %v3506
      %v3508 = vrot.slane %v3506, 4
      %v3509 = vrot.slane %v1531, 5
      %v3510 = vrot.slane %v1527, 6
      %v3511 = vor.u32 %v3509, %v3510
      %v3512 = vsel %vm2889, %v3508, %v3511
      %v3513 = vrot.slane %v3511, 4
      %v3514 = vrot.slane %v1541, 5
      %v3515 = vrot.slane %v1537, 6
      %v3516 = vor.u32 %v3514, %v3515
      %v3517 = vsel %vm2889, %v3513, %v3516
      %v3518 = vrot.slane %v3516, 4
      %v3519 = vrot.slane %v1551, 5
      %v3520 = vrot.slane %v1547, 6
      %v3521 = vor.u32 %v3519, %v3520
      %v3522 = vsel %vm2889, %v3518, %v3521
      %v3523 = vrot.slane %v3521, 4
      %v3524 = vrot.slane %v1561, 5
      %v3525 = vrot.slane %v1557, 6
      %v3526 = vor.u32 %v3524, %v3525
      %v3527 = vsel %vm2889, %v3523, %v3526
      %v3528 = vrot.slane %v3526, 4
      %v3529 = vrot.slane %v1571, 5
      %v3530 = vrot.slane %v1567, 6
      %v3531 = vor.u32 %v3529, %v3530
      %v3532 = vsel %vm2889, %v3528, %v3531
      %v3533 = vrot.slane %v3531, 4
      %v3534 = vrot.slane %v1581, 5
      %v3535 = vrot.slane %v1577, 6
      %v3536 = vor.u32 %v3534, %v3535
      %v3537 = vsel %vm2889, %v3533, %v3536
      %v3538 = vrot.slane %v3536, 4
      %v3539 = vrot.slane %v1591, 5
      %v3540 = vrot.slane %v1587, 6
      %v3541 = vor.u32 %v3539, %v3540
      %v3542 = vsel %vm2889, %v3538, %v3541
      %v3543 = vrot.slane %v3541, 4
      %v3544 = vrot.slane %v1601, 5
      %v3545 = vrot.slane %v1597, 6
      %v3546 = vor.u32 %v3544, %v3545
      %v3547 = vsel %vm2889, %v3543, %v3546
      %v3548 = vrot.slane %v3546, 4
      %v3549 = vrot.slane %v1611, 5
      %v3550 = vrot.slane %v1607, 6
      %v3551 = vor.u32 %v3549, %v3550
      %v3552 = vsel %vm2889, %v3548, %v3551
      %v3553 = vrot.slane %v3551, 4
      %v3555 = vshrl.u32 %v2716, 16
      %v3557 = vrot.slane %v3555, 5
      %v3558 = vshll.u32 %v2716, 16
      %v3560 = vrot.slane %v3558, 6
      %v3561 = vor.u32 %v3557, %v3560
      %v3562 = vsel %vm2889, %v3553, %v3561
      %v3563 = vrot.slane %v3561, 4
      %v3565 = vshrl.u32 %v2717, 16
      %v3567 = vrot.slane %v3565, 5
      %v3568 = vshll.u32 %v2717, 16
      %v3570 = vrot.slane %v3568, 6
      %v3571 = vor.u32 %v3567, %v3570
      %v3572 = vsel %vm2889, %v3563, %v3571
      %v3573 = vrot.slane %v3571, 4
      %v3575 = vshrl.u32 %v2718, 16
      %v3577 = vrot.slane %v3575, 5
      %v3578 = vshll.u32 %v2718, 16
      %v3580 = vrot.slane %v3578, 6
      %v3581 = vor.u32 %v3577, %v3580
      %v3582 = vsel %vm2889, %v3573, %v3581
      %v3583 = vrot.slane %v3581, 4
      %v3585 = vshrl.u32 %v2719, 16
      %v3587 = vrot.slane %v3585, 5
      %v3588 = vshll.u32 %v2719, 16
      %v3590 = vrot.slane %v3588, 6
      %v3591 = vor.u32 %v3587, %v3590
      %v3592 = vsel %vm2889, %v3583, %v3591
      %v3593 = vrot.slane %v3591, 4
      %v3595 = vshrl.u32 %v2886, 16
      %v3597 = vrot.slane %v3595, 5
      %v3598 = vshll.u32 %v2886, 16
      %v3600 = vrot.slane %v3598, 6
      %v3601 = vor.u32 %v3597, %v3600
      %v3602 = vsel %vm2889, %v3593, %v3601
      %v3739 = vmax.bf16 %v2750, %v2902
      %v3740 = vmax.bf16 %v2751, %v2907
      %v3741 = vmax.bf16 %v2752, %v2912
      %v3742 = vmax.bf16 %v2753, %v2917
      %v3743 = vmax.bf16 %v2754, %v2922
      %v3744 = vmax.bf16 %v2755, %v2927
      %v3745 = vmax.bf16 %v2756, %v2932
      %v3746 = vmax.bf16 %v2757, %v2937
      %v3747 = vmax.bf16 %v2758, %v2942
      %v3748 = vmax.bf16 %v2759, %v2947
      %v3749 = vmax.bf16 %v2760, %v2952
      %v3750 = vmax.bf16 %v2761, %v2957
      %v3751 = vmax.bf16 %v2762, %v2962
      %v3752 = vmax.bf16 %v2763, %v2967
      %v3753 = vmax.bf16 %v2764, %v2972
      %v3754 = vmax.bf16 %v2765, %v2977
      %v3755 = vmax.bf16 %v2766, %v2982
      %v3756 = vmax.bf16 %v2767, %v2987
      %v3757 = vmax.bf16 %v2768, %v2992
      %v3758 = vmax.bf16 %v2769, %v2997
      %v3759 = vmax.bf16 %v2770, %v3002
      %v3760 = vmax.bf16 %v2771, %v3007
      %v3761 = vmax.bf16 %v2772, %v3012
      %v3762 = vmax.bf16 %v2773, %v3017
      %v3763 = vmax.bf16 %v2774, %v3022
      %v3764 = vmax.bf16 %v2775, %v3027
      %v3765 = vmax.bf16 %v2776, %v3032
      %v3766 = vmax.bf16 %v2777, %v3037
      %v3767 = vmax.bf16 %v2778, %v3042
      %v3768 = vmax.bf16 %v2779, %v3047
      %v3769 = vmax.bf16 %v2780, %v3052
      %v3770 = vmax.bf16 %v2781, %v3057
      %v3771 = vmax.bf16 %v2782, %v3062
      %v3772 = vmax.bf16 %v2783, %v3067
      %v3773 = vmax.bf16 %v2784, %v3072
      %v3774 = vmax.bf16 %v2785, %v3077
      %v3775 = vmax.bf16 %v2786, %v3082
      %v3776 = vmax.bf16 %v2787, %v3087
      %v3777 = vmax.bf16 %v2788, %v3092
      %v3778 = vmax.bf16 %v2789, %v3097
      %v3779 = vmax.bf16 %v2790, %v3102
      %v3780 = vmax.bf16 %v2791, %v3107
      %v3781 = vmax.bf16 %v2792, %v3112
      %v3782 = vmax.bf16 %v2793, %v3117
      %v3783 = vmax.bf16 %v2794, %v3122
      %v3784 = vmax.bf16 %v2795, %v3127
      %v3785 = vmax.bf16 %v2796, %v3132
      %v3786 = vmax.bf16 %v2797, %v3137
      %v3787 = vmax.bf16 %v2798, %v3142
      %v3788 = vmax.bf16 %v2799, %v3147
      %v3789 = vmax.bf16 %v2800, %v3152
      %v3790 = vmax.bf16 %v2801, %v3157
      %v3791 = vmax.bf16 %v2802, %v3162
      %v3792 = vmax.bf16 %v2803, %v3167
      %v3793 = vmax.bf16 %v2804, %v3172
      %v3794 = vmax.bf16 %v2805, %v3177
      %v3795 = vmax.bf16 %v2806, %v3182
      %v3796 = vmax.bf16 %v2807, %v3187
      %v3797 = vmax.bf16 %v2808, %v3192
      %v3798 = vmax.bf16 %v2809, %v3197
      %v3799 = vmax.bf16 %v2810, %v3202
      %v3800 = vmax.bf16 %v2811, %v3207
      %v3801 = vmax.bf16 %v2812, %v3212
      %v3802 = vmax.bf16 %v2813, %v3217
      %v3803 = vmax.bf16 %v2814, %v3222
      %v3804 = vmax.bf16 %v2815, %v3227
      %v3805 = vmax.bf16 %v2816, %v3232
      %v3806 = vmax.bf16 %v2817, %v3237
      %v3807 = vmax.bf16 %v2818, %v3242
      %v3808 = vmax.bf16 %v2819, %v3247
      %v3809 = vmax.bf16 %v2820, %v3252
      %v3810 = vmax.bf16 %v2821, %v3257
      %v3811 = vmax.bf16 %v2822, %v3262
      %v3812 = vmax.bf16 %v2823, %v3267
      %v3813 = vmax.bf16 %v2824, %v3272
      %v3814 = vmax.bf16 %v2825, %v3277
      %v3815 = vmax.bf16 %v2826, %v3282
      %v3816 = vmax.bf16 %v2827, %v3287
      %v3817 = vmax.bf16 %v2828, %v3292
      %v3818 = vmax.bf16 %v2829, %v3297
      %v3819 = vmax.bf16 %v2830, %v3302
      %v3820 = vmax.bf16 %v2831, %v3307
      %v3821 = vmax.bf16 %v2832, %v3312
      %v3822 = vmax.bf16 %v2833, %v3317
      %v3823 = vmax.bf16 %v2834, %v3322
      %v3824 = vmax.bf16 %v2835, %v3327
      %v3825 = vmax.bf16 %v2836, %v3332
      %v3826 = vmax.bf16 %v2837, %v3337
      %v3827 = vmax.bf16 %v2838, %v3342
      %v3828 = vmax.bf16 %v2839, %v3347
      %v3829 = vmax.bf16 %v2840, %v3352
      %v3830 = vmax.bf16 %v2841, %v3357
      %v3831 = vmax.bf16 %v2842, %v3362
      %v3832 = vmax.bf16 %v2843, %v3367
      %v3833 = vmax.bf16 %v2844, %v3372
      %v3834 = vmax.bf16 %v2845, %v3377
      %v3835 = vmax.bf16 %v2846, %v3382
      %v3836 = vmax.bf16 %v2847, %v3387
      %v3837 = vmax.bf16 %v2848, %v3392
      %v3838 = vmax.bf16 %v2849, %v3397
      %v3839 = vmax.bf16 %v2850, %v3402
      %v3840 = vmax.bf16 %v2851, %v3407
      %v3841 = vmax.bf16 %v2852, %v3412
      %v3842 = vmax.bf16 %v2853, %v3417
      %v3843 = vmax.bf16 %v2854, %v3422
      %v3844 = vmax.bf16 %v2855, %v3427
      %v3845 = vmax.bf16 %v2856, %v3432
      %v3846 = vmax.bf16 %v2857, %v3437
      %v3847 = vmax.bf16 %v2858, %v3442
      %v3848 = vmax.bf16 %v2859, %v3447
      %v3849 = vmax.bf16 %v2860, %v3452
      %v3850 = vmax.bf16 %v2861, %v3457
      %v3851 = vmax.bf16 %v2862, %v3462
      %v3852 = vmax.bf16 %v2863, %v3467
      %v3853 = vmax.bf16 %v2864, %v3472
      %v3854 = vmax.bf16 %v2865, %v3477
      %v3855 = vmax.bf16 %v2866, %v3482
      %v3856 = vmax.bf16 %v2867, %v3487
      %v3857 = vmax.bf16 %v2868, %v3492
      %v3858 = vmax.bf16 %v2869, %v3497
      %v3859 = vmax.bf16 %v2870, %v3502
      %v3860 = vmax.bf16 %v2871, %v3507
      %v3861 = vmax.bf16 %v2872, %v3512
      %v3862 = vmax.bf16 %v2873, %v3517
      %v3863 = vmax.bf16 %v2874, %v3522
      %v3864 = vmax.bf16 %v2875, %v3527
      %v3865 = vmax.bf16 %v2876, %v3532
      %v3866 = vmax.bf16 %v2877, %v3537
      %v3867 = vmax.bf16 %v2878, %v3542
      %v3868 = vmax.bf16 %v2879, %v3547
      %v3869 = vmax.bf16 %v2880, %v3552
      %v3870 = vmax.bf16 %v2881, %v3562
      %v3871 = vmax.bf16 %v2882, %v3572
      %v3872 = vmax.bf16 %v2883, %v3582
      %v3873 = vmax.bf16 %v2884, %v3592
      %v3874 = vmax.bf16 %v2885, %v3602
      %v3875 = vld [vmem:[%s111 + $0x10] sm:$0xc]
      %vm3878 = vcmask 1041408
      %vm3879 = vcmask 1045508
      %vm3880 = vmor %vm3878, %vm3879
      %v3881 = vrot.slane %v3875, 6
      %v3882 = vrot.slane %v3881, 4
      %v3883 = vrot.slane %v122, 6
      %v3884 = vsel %vm3880, %v3882, %v3883
      %v3885 = vrot.slane %v3883, 4
      %v3886 = vrot.slane %v123, 6
      %v3887 = vsel %vm3880, %v3885, %v3886
      %v3888 = vrot.slane %v3886, 4
      %v3889 = vrot.slane %v124, 6
      %v3890 = vsel %vm3880, %v3888, %v3889
      %v3891 = vrot.slane %v3889, 4
      %v3892 = vrot.slane %v125, 6
      %v3893 = vsel %vm3880, %v3891, %v3892
      %v3894 = vrot.slane %v3892, 4
      %v3895 = vrot.slane %v126, 6
      %v3896 = vsel %vm3880, %v3894, %v3895
      %v3897 = vrot.slane %v3895, 4
      %v3898 = vrot.slane %v127, 6
      %v3899 = vsel %vm3880, %v3897, %v3898
      %v3900 = vrot.slane %v3898, 4
      %v3901 = vrot.slane %v128, 6
      %v3902 = vsel %vm3880, %v3900, %v3901
      %v3903 = vrot.slane %v3901, 4
      %v3904 = vrot.slane %v129, 6
      %v3905 = vsel %vm3880, %v3903, %v3904
      %v3906 = vrot.slane %v3904, 4
      %v3907 = vrot.slane %v130, 6
      %v3908 = vsel %vm3880, %v3906, %v3907
      %v3909 = vrot.slane %v3907, 4
      %v3910 = vrot.slane %v131, 6
      %v3911 = vsel %vm3880, %v3909, %v3910
      %v3912 = vrot.slane %v3910, 4
      %v3913 = vrot.slane %v132, 6
      %v3914 = vsel %vm3880, %v3912, %v3913
      %v3915 = vrot.slane %v3913, 4
      %v3916 = vrot.slane %v133, 6
      %v3917 = vsel %vm3880, %v3915, %v3916
      %v3918 = vrot.slane %v3916, 4
      %v3919 = vrot.slane %v134, 6
      %v3920 = vsel %vm3880, %v3918, %v3919
      %v3921 = vrot.slane %v3919, 4
      %v3922 = vrot.slane %v135, 6
      %v3923 = vsel %vm3880, %v3921, %v3922
      %v3924 = vrot.slane %v3922, 4
      %v3925 = vrot.slane %v136, 6
      %v3926 = vsel %vm3880, %v3924, %v3925
      %v3927 = vrot.slane %v3925, 4
      %v3928 = vrot.slane %v137, 6
      %v3929 = vsel %vm3880, %v3927, %v3928
      %v3930 = vrot.slane %v3928, 4
      %v3931 = vrot.slane %v138, 6
      %v3932 = vsel %vm3880, %v3930, %v3931
      %v3933 = vrot.slane %v3931, 4
      %v3934 = vrot.slane %v139, 6
      %v3935 = vsel %vm3880, %v3933, %v3934
      %v3936 = vrot.slane %v3934, 4
      %v3937 = vrot.slane %v140, 6
      %v3938 = vsel %vm3880, %v3936, %v3937
      %v3939 = vrot.slane %v3937, 4
      %v3940 = vrot.slane %v141, 6
      %v3941 = vsel %vm3880, %v3939, %v3940
      %v3942 = vrot.slane %v3940, 4
      %v3943 = vrot.slane %v142, 6
      %v3944 = vsel %vm3880, %v3942, %v3943
      %v3945 = vrot.slane %v3943, 4
      %v3946 = vrot.slane %v143, 6
      %v3947 = vsel %vm3880, %v3945, %v3946
      %v3948 = vrot.slane %v3946, 4
      %v3949 = vrot.slane %v144, 6
      %v3950 = vsel %vm3880, %v3948, %v3949
      %v3951 = vrot.slane %v3949, 4
      %v3952 = vrot.slane %v145, 6
      %v3953 = vsel %vm3880, %v3951, %v3952
      %v3954 = vrot.slane %v3952, 4
      %v3955 = vrot.slane %v146, 6
      %v3956 = vsel %vm3880, %v3954, %v3955
      %v3957 = vrot.slane %v3955, 4
      %v3958 = vrot.slane %v147, 6
      %v3959 = vsel %vm3880, %v3957, %v3958
      %v3960 = vrot.slane %v3958, 4
      %v3961 = vrot.slane %v148, 6
      %v3962 = vsel %vm3880, %v3960, %v3961
      %v3963 = vrot.slane %v3961, 4
      %v3964 = vrot.slane %v149, 6
      %v3965 = vsel %vm3880, %v3963, %v3964
      %v3966 = vrot.slane %v3964, 4
      %v3967 = vrot.slane %v150, 6
      %v3968 = vsel %vm3880, %v3966, %v3967
      %v3969 = vrot.slane %v3967, 4
      %v3970 = vrot.slane %v151, 6
      %v3971 = vsel %vm3880, %v3969, %v3970
      %v3972 = vrot.slane %v3970, 4
      %v3973 = vrot.slane %v152, 6
      %v3974 = vsel %vm3880, %v3972, %v3973
      %v3975 = vrot.slane %v3973, 4
      %v3976 = vrot.slane %v153, 6
      %v3977 = vsel %vm3880, %v3975, %v3976
      %v3978 = vrot.slane %v3976, 4
      %v3979 = vrot.slane %v154, 6
      %v3980 = vsel %vm3880, %v3978, %v3979
      %v3981 = vrot.slane %v3979, 4
      %v3982 = vrot.slane %v155, 6
      %v3983 = vsel %vm3880, %v3981, %v3982
      %v3984 = vrot.slane %v3982, 4
      %v3985 = vrot.slane %v156, 6
      %v3986 = vsel %vm3880, %v3984, %v3985
      %v3987 = vrot.slane %v3985, 4
      %v3988 = vrot.slane %v157, 6
      %v3989 = vsel %vm3880, %v3987, %v3988
      %v3990 = vrot.slane %v3988, 4
      %v3991 = vrot.slane %v158, 6
      %v3992 = vsel %vm3880, %v3990, %v3991
      %v3993 = vrot.slane %v3991, 4
      %v3994 = vrot.slane %v159, 6
      %v3995 = vsel %vm3880, %v3993, %v3994
      %v3996 = vrot.slane %v3994, 4
      %v3997 = vrot.slane %v160, 6
      %v3998 = vsel %vm3880, %v3996, %v3997
      %v3999 = vrot.slane %v3997, 4
      %v4000 = vrot.slane %v161, 6
      %v4001 = vsel %vm3880, %v3999, %v4000
      %v4002 = vrot.slane %v4000, 4
      %v4003 = vrot.slane %v162, 6
      %v4004 = vsel %vm3880, %v4002, %v4003
      %v4005 = vrot.slane %v4003, 4
      %v4006 = vrot.slane %v163, 6
      %v4007 = vsel %vm3880, %v4005, %v4006
      %v4008 = vrot.slane %v4006, 4
      %v4009 = vrot.slane %v164, 6
      %v4010 = vsel %vm3880, %v4008, %v4009
      %v4011 = vrot.slane %v4009, 4
      %v4012 = vrot.slane %v165, 6
      %v4013 = vsel %vm3880, %v4011, %v4012
      %v4014 = vrot.slane %v4012, 4
      %v4015 = vrot.slane %v166, 6
      %v4016 = vsel %vm3880, %v4014, %v4015
      %v4017 = vrot.slane %v4015, 4
      %v4018 = vrot.slane %v167, 6
      %v4019 = vsel %vm3880, %v4017, %v4018
      %v4020 = vrot.slane %v4018, 4
      %v4021 = vrot.slane %v168, 6
      %v4022 = vsel %vm3880, %v4020, %v4021
      %v4023 = vrot.slane %v4021, 4
      %v4024 = vrot.slane %v169, 6
      %v4025 = vsel %vm3880, %v4023, %v4024
      %v4026 = vrot.slane %v4024, 4
      %v4027 = vrot.slane %v170, 6
      %v4028 = vsel %vm3880, %v4026, %v4027
      %v4029 = vrot.slane %v4027, 4
      %v4030 = vrot.slane %v171, 6
      %v4031 = vsel %vm3880, %v4029, %v4030
      %v4032 = vrot.slane %v4030, 4
      %v4033 = vrot.slane %v172, 6
      %v4034 = vsel %vm3880, %v4032, %v4033
      %v4035 = vrot.slane %v4033, 4
      %v4036 = vrot.slane %v173, 6
      %v4037 = vsel %vm3880, %v4035, %v4036
      %v4038 = vrot.slane %v4036, 4
      %v4039 = vrot.slane %v174, 6
      %v4040 = vsel %vm3880, %v4038, %v4039
      %v4041 = vrot.slane %v4039, 4
      %v4042 = vrot.slane %v175, 6
      %v4043 = vsel %vm3880, %v4041, %v4042
      %v4044 = vrot.slane %v4042, 4
      %v4045 = vrot.slane %v176, 6
      %v4046 = vsel %vm3880, %v4044, %v4045
      %v4047 = vrot.slane %v4045, 4
      %v4048 = vrot.slane %v177, 6
      %v4049 = vsel %vm3880, %v4047, %v4048
      %v4050 = vrot.slane %v4048, 4
      %v4051 = vrot.slane %v178, 6
      %v4052 = vsel %vm3880, %v4050, %v4051
      %v4053 = vrot.slane %v4051, 4
      %v4054 = vrot.slane %v179, 6
      %v4055 = vsel %vm3880, %v4053, %v4054
      %v4056 = vrot.slane %v4054, 4
      %v4057 = vrot.slane %v180, 6
      %v4058 = vsel %vm3880, %v4056, %v4057
      %v4059 = vrot.slane %v4057, 4
      %v4060 = vrot.slane %v181, 6
      %v4061 = vsel %vm3880, %v4059, %v4060
      %v4062 = vrot.slane %v4060, 4
      %v4063 = vrot.slane %v182, 6
      %v4064 = vsel %vm3880, %v4062, %v4063
      %v4065 = vrot.slane %v4063, 4
      %v4066 = vrot.slane %v183, 6
      %v4067 = vsel %vm3880, %v4065, %v4066
      %v4068 = vrot.slane %v4066, 4
      %v4069 = vrot.slane %v184, 6
      %v4070 = vsel %vm3880, %v4068, %v4069
      %v4071 = vrot.slane %v4069, 4
      %v4072 = vrot.slane %v185, 6
      %v4073 = vsel %vm3880, %v4071, %v4072
      %v4074 = vrot.slane %v4072, 4
      %v4075 = vrot.slane %v186, 6
      %v4076 = vsel %vm3880, %v4074, %v4075
      %v4077 = vrot.slane %v4075, 4
      %v4078 = vrot.slane %v187, 6
      %v4079 = vsel %vm3880, %v4077, %v4078
      %v4080 = vrot.slane %v4078, 4
      %v4081 = vrot.slane %v188, 6
      %v4082 = vsel %vm3880, %v4080, %v4081
      %v4083 = vrot.slane %v4081, 4
      %v4084 = vrot.slane %v189, 6
      %v4085 = vsel %vm3880, %v4083, %v4084
      %v4086 = vrot.slane %v4084, 4
      %v4087 = vrot.slane %v190, 6
      %v4088 = vsel %vm3880, %v4086, %v4087
      %v4089 = vrot.slane %v4087, 4
      %v4090 = vrot.slane %v191, 6
      %v4091 = vsel %vm3880, %v4089, %v4090
      %v4092 = vrot.slane %v4090, 4
      %v4093 = vrot.slane %v192, 6
      %v4094 = vsel %vm3880, %v4092, %v4093
      %v4095 = vrot.slane %v4093, 4
      %v4096 = vrot.slane %v193, 6
      %v4097 = vsel %vm3880, %v4095, %v4096
      %v4098 = vrot.slane %v4096, 4
      %v4099 = vrot.slane %v194, 6
      %v4100 = vsel %vm3880, %v4098, %v4099
      %v4101 = vrot.slane %v4099, 4
      %v4102 = vrot.slane %v195, 6
      %v4103 = vsel %vm3880, %v4101, %v4102
      %v4104 = vrot.slane %v4102, 4
      %v4105 = vrot.slane %v196, 6
      %v4106 = vsel %vm3880, %v4104, %v4105
      %v4107 = vrot.slane %v4105, 4
      %v4108 = vrot.slane %v197, 6
      %v4109 = vsel %vm3880, %v4107, %v4108
      %v4110 = vrot.slane %v4108, 4
      %v4111 = vrot.slane %v198, 6
      %v4112 = vsel %vm3880, %v4110, %v4111
      %v4113 = vrot.slane %v4111, 4
      %v4114 = vrot.slane %v199, 6
      %v4115 = vsel %vm3880, %v4113, %v4114
      %v4116 = vrot.slane %v4114, 4
      %v4117 = vrot.slane %v200, 6
      %v4118 = vsel %vm3880, %v4116, %v4117
      %v4119 = vrot.slane %v4117, 4
      %v4120 = vrot.slane %v201, 6
      %v4121 = vsel %vm3880, %v4119, %v4120
      %v4122 = vrot.slane %v4120, 4
      %v4123 = vrot.slane %v202, 6
      %v4124 = vsel %vm3880, %v4122, %v4123
      %v4125 = vrot.slane %v4123, 4
      %v4126 = vrot.slane %v203, 6
      %v4127 = vsel %vm3880, %v4125, %v4126
      %v4128 = vrot.slane %v4126, 4
      %v4129 = vrot.slane %v204, 6
      %v4130 = vsel %vm3880, %v4128, %v4129
      %v4131 = vrot.slane %v4129, 4
      %v4132 = vrot.slane %v205, 6
      %v4133 = vsel %vm3880, %v4131, %v4132
      %v4134 = vrot.slane %v4132, 4
      %v4135 = vrot.slane %v206, 6
      %v4136 = vsel %vm3880, %v4134, %v4135
      %v4137 = vrot.slane %v4135, 4
      %v4138 = vrot.slane %v207, 6
      %v4139 = vsel %vm3880, %v4137, %v4138
      %v4140 = vrot.slane %v4138, 4
      %v4141 = vrot.slane %v208, 6
      %v4142 = vsel %vm3880, %v4140, %v4141
      %v4143 = vrot.slane %v4141, 4
      %v4144 = vrot.slane %v209, 6
      %v4145 = vsel %vm3880, %v4143, %v4144
      %v4146 = vrot.slane %v4144, 4
      %v4147 = vrot.slane %v210, 6
      %v4148 = vsel %vm3880, %v4146, %v4147
      %v4149 = vrot.slane %v4147, 4
      %v4150 = vrot.slane %v211, 6
      %v4151 = vsel %vm3880, %v4149, %v4150
      %v4152 = vrot.slane %v4150, 4
      %v4153 = vrot.slane %v212, 6
      %v4154 = vsel %vm3880, %v4152, %v4153
      %v4155 = vrot.slane %v4153, 4
      %v4156 = vrot.slane %v213, 6
      %v4157 = vsel %vm3880, %v4155, %v4156
      %v4158 = vrot.slane %v4156, 4
      %v4159 = vrot.slane %v214, 6
      %v4160 = vsel %vm3880, %v4158, %v4159
      %v4161 = vrot.slane %v4159, 4
      %v4162 = vrot.slane %v215, 6
      %v4163 = vsel %vm3880, %v4161, %v4162
      %v4164 = vrot.slane %v4162, 4
      %v4165 = vrot.slane %v216, 6
      %v4166 = vsel %vm3880, %v4164, %v4165
      %v4167 = vrot.slane %v4165, 4
      %v4168 = vrot.slane %v217, 6
      %v4169 = vsel %vm3880, %v4167, %v4168
      %v4170 = vrot.slane %v4168, 4
      %v4171 = vrot.slane %v218, 6
      %v4172 = vsel %vm3880, %v4170, %v4171
      %v4173 = vrot.slane %v4171, 4
      %v4174 = vrot.slane %v219, 6
      %v4175 = vsel %vm3880, %v4173, %v4174
      %v4176 = vrot.slane %v4174, 4
      %v4177 = vrot.slane %v220, 6
      %v4178 = vsel %vm3880, %v4176, %v4177
      %v4179 = vrot.slane %v4177, 4
      %v4180 = vrot.slane %v221, 6
      %v4181 = vsel %vm3880, %v4179, %v4180
      %v4182 = vrot.slane %v4180, 4
      %v4183 = vrot.slane %v222, 6
      %v4184 = vsel %vm3880, %v4182, %v4183
      %v4185 = vrot.slane %v4183, 4
      %v4186 = vrot.slane %v223, 6
      %v4187 = vsel %vm3880, %v4185, %v4186
      %v4188 = vrot.slane %v4186, 4
      %v4189 = vrot.slane %v224, 6
      %v4190 = vsel %vm3880, %v4188, %v4189
      %v4191 = vrot.slane %v4189, 4
      %v4192 = vrot.slane %v225, 6
      %v4193 = vsel %vm3880, %v4191, %v4192
      %v4194 = vrot.slane %v4192, 4
      %v4195 = vrot.slane %v226, 6
      %v4196 = vsel %vm3880, %v4194, %v4195
      %v4197 = vrot.slane %v4195, 4
      %v4198 = vrot.slane %v227, 6
      %v4199 = vsel %vm3880, %v4197, %v4198
      %v4200 = vrot.slane %v4198, 4
      %v4201 = vrot.slane %v228, 6
      %v4202 = vsel %vm3880, %v4200, %v4201
      %v4203 = vrot.slane %v4201, 4
      %v4204 = vrot.slane %v229, 6
      %v4205 = vsel %vm3880, %v4203, %v4204
      %v4206 = vrot.slane %v4204, 4
      %v4207 = vrot.slane %v230, 6
      %v4208 = vsel %vm3880, %v4206, %v4207
      %v4209 = vrot.slane %v4207, 4
      %v4210 = vrot.slane %v231, 6
      %v4211 = vsel %vm3880, %v4209, %v4210
      %v4212 = vrot.slane %v4210, 4
      %v4213 = vrot.slane %v232, 6
      %v4214 = vsel %vm3880, %v4212, %v4213
      %v4215 = vrot.slane %v4213, 4
      %v4216 = vrot.slane %v233, 6
      %v4217 = vsel %vm3880, %v4215, %v4216
      %v4218 = vrot.slane %v4216, 4
      %v4219 = vrot.slane %v234, 6
      %v4220 = vsel %vm3880, %v4218, %v4219
      %v4221 = vrot.slane %v4219, 4
      %v4222 = vrot.slane %v235, 6
      %v4223 = vsel %vm3880, %v4221, %v4222
      %v4224 = vrot.slane %v4222, 4
      %v4225 = vrot.slane %v236, 6
      %v4226 = vsel %vm3880, %v4224, %v4225
      %v4227 = vrot.slane %v4225, 4
      %v4228 = vrot.slane %v237, 6
      %v4229 = vsel %vm3880, %v4227, %v4228
      %v4230 = vrot.slane %v4228, 4
      %v4231 = vrot.slane %v238, 6
      %v4232 = vsel %vm3880, %v4230, %v4231
      %v4233 = vrot.slane %v4231, 4
      %v4234 = vrot.slane %v239, 6
      %v4235 = vsel %vm3880, %v4233, %v4234
      %v4236 = vrot.slane %v4234, 4
      %v4237 = vrot.slane %v240, 6
      %v4238 = vsel %vm3880, %v4236, %v4237
      %v4239 = vrot.slane %v4237, 4
      %v4240 = vrot.slane %v241, 6
      %v4241 = vsel %vm3880, %v4239, %v4240
      %v4242 = vrot.slane %v4240, 4
      %v4243 = vrot.slane %v242, 6
      %v4244 = vsel %vm3880, %v4242, %v4243
      %v4245 = vrot.slane %v4243, 4
      %v4246 = vrot.slane %v243, 6
      %v4247 = vsel %vm3880, %v4245, %v4246
      %v4248 = vrot.slane %v4246, 4
      %v4249 = vrot.slane %v244, 6
      %v4250 = vsel %vm3880, %v4248, %v4249
      %v4251 = vrot.slane %v4249, 4
      %v4252 = vrot.slane %v245, 6
      %v4253 = vsel %vm3880, %v4251, %v4252
      %v4254 = vrot.slane %v4252, 4
      %v4255 = vrot.slane %v246, 6
      %v4256 = vsel %vm3880, %v4254, %v4255
      %v4257 = vrot.slane %v4255, 4
      %v4258 = vrot.slane %v247, 6
      %v4259 = vsel %vm3880, %v4257, %v4258
      %v4260 = vrot.slane %v4258, 4
      %v4261 = vrot.slane %v248, 6
      %v4262 = vsel %vm3880, %v4260, %v4261
      %v4263 = vrot.slane %v4261, 4
      %v4264 = vrot.slane %v249, 6
      %v4265 = vsel %vm3880, %v4263, %v4264
      %v4266 = vrot.slane %v4264, 4
      %v4267 = vrot.slane %v250, 6
      %v4268 = vsel %vm3880, %v4266, %v4267
      %v4269 = vrot.slane %v4267, 4
      %v4270 = vrot.slane %v251, 6
      %v4271 = vsel %vm3880, %v4269, %v4270
      %v4272 = vrot.slane %v4270, 4
      %v4273 = vrot.slane %v252, 6
      %v4274 = vsel %vm3880, %v4272, %v4273
      %v4275 = vrot.slane %v4273, 4
      %v4276 = vrot.slane %v2716, 6
      %v4277 = vsel %vm3880, %v4275, %v4276
      %v4278 = vrot.slane %v4276, 4
      %v4279 = vrot.slane %v2717, 6
      %v4280 = vsel %vm3880, %v4278, %v4279
      %v4281 = vrot.slane %v4279, 4
      %v4282 = vrot.slane %v2718, 6
      %v4283 = vsel %vm3880, %v4281, %v4282
      %v4284 = vrot.slane %v4282, 4
      %v4285 = vrot.slane %v2719, 6
      %v4286 = vsel %vm3880, %v4284, %v4285
      %v4287 = vrot.slane %v4285, 4
      %v4288 = vrot.slane %v2886, 6
      %v4289 = vsel %vm3880, %v4287, %v4288
      %v4426 = vmax.bf16 %v3739, %v3884
      %v4427 = vmax.bf16 %v3740, %v3887
      %v4428 = vmax.bf16 %v3741, %v3890
      %v4429 = vmax.bf16 %v3742, %v3893
      %v4430 = vmax.bf16 %v3743, %v3896
      %v4431 = vmax.bf16 %v3744, %v3899
      %v4432 = vmax.bf16 %v3745, %v3902
      %v4433 = vmax.bf16 %v3746, %v3905
      %v4434 = vmax.bf16 %v3747, %v3908
      %v4435 = vmax.bf16 %v3748, %v3911
      %v4436 = vmax.bf16 %v3749, %v3914
      %v4437 = vmax.bf16 %v3750, %v3917
      %v4438 = vmax.bf16 %v3751, %v3920
      %v4439 = vmax.bf16 %v3752, %v3923
      %v4440 = vmax.bf16 %v3753, %v3926
      %v4441 = vmax.bf16 %v3754, %v3929
      %v4442 = vmax.bf16 %v3755, %v3932
      %v4443 = vmax.bf16 %v3756, %v3935
      %v4444 = vmax.bf16 %v3757, %v3938
      %v4445 = vmax.bf16 %v3758, %v3941
      %v4446 = vmax.bf16 %v3759, %v3944
      %v4447 = vmax.bf16 %v3760, %v3947
      %v4448 = vmax.bf16 %v3761, %v3950
      %v4449 = vmax.bf16 %v3762, %v3953
      %v4450 = vmax.bf16 %v3763, %v3956
      %v4451 = vmax.bf16 %v3764, %v3959
      %v4452 = vmax.bf16 %v3765, %v3962
      %v4453 = vmax.bf16 %v3766, %v3965
      %v4454 = vmax.bf16 %v3767, %v3968
      %v4455 = vmax.bf16 %v3768, %v3971
      %v4456 = vmax.bf16 %v3769, %v3974
      %v4457 = vmax.bf16 %v3770, %v3977
      %v4458 = vmax.bf16 %v3771, %v3980
      %v4459 = vmax.bf16 %v3772, %v3983
      %v4460 = vmax.bf16 %v3773, %v3986
      %v4461 = vmax.bf16 %v3774, %v3989
      %v4462 = vmax.bf16 %v3775, %v3992
      %v4463 = vmax.bf16 %v3776, %v3995
      %v4464 = vmax.bf16 %v3777, %v3998
      %v4465 = vmax.bf16 %v3778, %v4001
      %v4466 = vmax.bf16 %v3779, %v4004
      %v4467 = vmax.bf16 %v3780, %v4007
      %v4468 = vmax.bf16 %v3781, %v4010
      %v4469 = vmax.bf16 %v3782, %v4013
      %v4470 = vmax.bf16 %v3783, %v4016
      %v4471 = vmax.bf16 %v3784, %v4019
      %v4472 = vmax.bf16 %v3785, %v4022
      %v4473 = vmax.bf16 %v3786, %v4025
      %v4474 = vmax.bf16 %v3787, %v4028
      %v4475 = vmax.bf16 %v3788, %v4031
      %v4476 = vmax.bf16 %v3789, %v4034
      %v4477 = vmax.bf16 %v3790, %v4037
      %v4478 = vmax.bf16 %v3791, %v4040
      %v4479 = vmax.bf16 %v3792, %v4043
      %v4480 = vmax.bf16 %v3793, %v4046
      %v4481 = vmax.bf16 %v3794, %v4049
      %v4482 = vmax.bf16 %v3795, %v4052
      %v4483 = vmax.bf16 %v3796, %v4055
      %v4484 = vmax.bf16 %v3797, %v4058
      %v4485 = vmax.bf16 %v3798, %v4061
      %v4486 = vmax.bf16 %v3799, %v4064
      %v4487 = vmax.bf16 %v3800, %v4067
      %v4488 = vmax.bf16 %v3801, %v4070
      %v4489 = vmax.bf16 %v3802, %v4073
      %v4490 = vmax.bf16 %v3803, %v4076
      %v4491 = vmax.bf16 %v3804, %v4079
      %v4492 = vmax.bf16 %v3805, %v4082
      %v4493 = vmax.bf16 %v3806, %v4085
      %v4494 = vmax.bf16 %v3807, %v4088
      %v4495 = vmax.bf16 %v3808, %v4091
      %v4496 = vmax.bf16 %v3809, %v4094
      %v4497 = vmax.bf16 %v3810, %v4097
      %v4498 = vmax.bf16 %v3811, %v4100
      %v4499 = vmax.bf16 %v3812, %v4103
      %v4500 = vmax.bf16 %v3813, %v4106
      %v4501 = vmax.bf16 %v3814, %v4109
      %v4502 = vmax.bf16 %v3815, %v4112
      %v4503 = vmax.bf16 %v3816, %v4115
      %v4504 = vmax.bf16 %v3817, %v4118
      %v4505 = vmax.bf16 %v3818, %v4121
      %v4506 = vmax.bf16 %v3819, %v4124
      %v4507 = vmax.bf16 %v3820, %v4127
      %v4508 = vmax.bf16 %v3821, %v4130
      %v4509 = vmax.bf16 %v3822, %v4133
      %v4510 = vmax.bf16 %v3823, %v4136
      %v4511 = vmax.bf16 %v3824, %v4139
      %v4512 = vmax.bf16 %v3825, %v4142
      %v4513 = vmax.bf16 %v3826, %v4145
      %v4514 = vmax.bf16 %v3827, %v4148
      %v4515 = vmax.bf16 %v3828, %v4151
      %v4516 = vmax.bf16 %v3829, %v4154
      %v4517 = vmax.bf16 %v3830, %v4157
      %v4518 = vmax.bf16 %v3831, %v4160
      %v4519 = vmax.bf16 %v3832, %v4163
      %v4520 = vmax.bf16 %v3833, %v4166
      %v4521 = vmax.bf16 %v3834, %v4169
      %v4522 = vmax.bf16 %v3835, %v4172
      %v4523 = vmax.bf16 %v3836, %v4175
      %v4524 = vmax.bf16 %v3837, %v4178
      %v4525 = vmax.bf16 %v3838, %v4181
      %v4526 = vmax.bf16 %v3839, %v4184
      %v4527 = vmax.bf16 %v3840, %v4187
      %v4528 = vmax.bf16 %v3841, %v4190
      %v4529 = vmax.bf16 %v3842, %v4193
      %v4530 = vmax.bf16 %v3843, %v4196
      %v4531 = vmax.bf16 %v3844, %v4199
      %v4532 = vmax.bf16 %v3845, %v4202
      %v4533 = vmax.bf16 %v3846, %v4205
      %v4534 = vmax.bf16 %v3847, %v4208
      %v4535 = vmax.bf16 %v3848, %v4211
      %v4536 = vmax.bf16 %v3849, %v4214
      %v4537 = vmax.bf16 %v3850, %v4217
      %v4538 = vmax.bf16 %v3851, %v4220
      %v4539 = vmax.bf16 %v3852, %v4223
      %v4540 = vmax.bf16 %v3853, %v4226
      %v4541 = vmax.bf16 %v3854, %v4229
      %v4542 = vmax.bf16 %v3855, %v4232
      %v4543 = vmax.bf16 %v3856, %v4235
      %v4544 = vmax.bf16 %v3857, %v4238
      %v4545 = vmax.bf16 %v3858, %v4241
      %v4546 = vmax.bf16 %v3859, %v4244
      %v4547 = vmax.bf16 %v3860, %v4247
      %v4548 = vmax.bf16 %v3861, %v4250
      %v4549 = vmax.bf16 %v3862, %v4253
      %v4550 = vmax.bf16 %v3863, %v4256
      %v4551 = vmax.bf16 %v3864, %v4259
      %v4552 = vmax.bf16 %v3865, %v4262
      %v4553 = vmax.bf16 %v3866, %v4265
      %v4554 = vmax.bf16 %v3867, %v4268
      %v4555 = vmax.bf16 %v3868, %v4271
      %v4556 = vmax.bf16 %v3869, %v4274
      %v4557 = vmax.bf16 %v3870, %v4277
      %v4558 = vmax.bf16 %v3871, %v4280
      %v4559 = vmax.bf16 %v3872, %v4283
      %v4560 = vmax.bf16 %v3873, %v4286
      %v4561 = vmax.bf16 %v3874, %v4289
      %v4562 = vld [vmem:[%s111 + $0x20] sm:$0xc]
      %v4563 = vld [vmem:[%s111 + $0x230] sm:$0xf]
      %v4564 = vld [vmem:[%s111 + $0x234] sm:$0xf]
      %v4565 = vld [vmem:[%s111 + $0x238] sm:$0xf]
      %v4566 = vld [vmem:[%s111 + $0x23c] sm:$0xf]
      %v4567 = vld [vmem:[%s111 + $0x240] sm:$0x3]
      %v4574 = vrot.slane %v4562, 6
      %v4575 = vrot.slane %v4574, 4
      %v4576 = vsel %vm3880, %v4575, %v3895
      %v4577 = vrot.slane %v4563, 6
      %v4578 = vsel %vm3880, %v4287, %v4577
      %v4579 = vrot.slane %v4577, 4
      %v4580 = vrot.slane %v4564, 6
      %v4581 = vsel %vm3880, %v4579, %v4580
      %v4582 = vrot.slane %v4580, 4
      %v4583 = vrot.slane %v4565, 6
      %v4584 = vsel %vm3880, %v4582, %v4583
      %v4585 = vrot.slane %v4583, 4
      %v4586 = vrot.slane %v4566, 6
      %v4587 = vsel %vm3880, %v4585, %v4586
      %v4588 = vrot.slane %v4586, 4
      %v4589 = vrot.slane %v4567, 6
      %v4590 = vsel %vm3880, %v4588, %v4589
      %v4597 = vmax.bf16 %v4426, %v4576
      %v4598 = vmax.bf16 %v4427, %v3899
      %v4599 = vmax.bf16 %v4428, %v3902
      %v4600 = vmax.bf16 %v4429, %v3905
      %v4601 = vmax.bf16 %v4430, %v3908
      %v4602 = vmax.bf16 %v4431, %v3911
      %v4603 = vmax.bf16 %v4432, %v3914
      %v4604 = vmax.bf16 %v4433, %v3917
      %v4605 = vmax.bf16 %v4434, %v3920
      %v4606 = vmax.bf16 %v4435, %v3923
      %v4607 = vmax.bf16 %v4436, %v3926
      %v4608 = vmax.bf16 %v4437, %v3929
      %v4609 = vmax.bf16 %v4438, %v3932
      %v4610 = vmax.bf16 %v4439, %v3935
      %v4611 = vmax.bf16 %v4440, %v3938
      %v4612 = vmax.bf16 %v4441, %v3941
      %v4613 = vmax.bf16 %v4442, %v3944
      %v4614 = vmax.bf16 %v4443, %v3947
      %v4615 = vmax.bf16 %v4444, %v3950
      %v4616 = vmax.bf16 %v4445, %v3953
      %v4617 = vmax.bf16 %v4446, %v3956
      %v4618 = vmax.bf16 %v4447, %v3959
      %v4619 = vmax.bf16 %v4448, %v3962
      %v4620 = vmax.bf16 %v4449, %v3965
      %v4621 = vmax.bf16 %v4450, %v3968
      %v4622 = vmax.bf16 %v4451, %v3971
      %v4623 = vmax.bf16 %v4452, %v3974
      %v4624 = vmax.bf16 %v4453, %v3977
      %v4625 = vmax.bf16 %v4454, %v3980
      %v4626 = vmax.bf16 %v4455, %v3983
      %v4627 = vmax.bf16 %v4456, %v3986
      %v4628 = vmax.bf16 %v4457, %v3989
      %v4629 = vmax.bf16 %v4458, %v3992
      %v4630 = vmax.bf16 %v4459, %v3995
      %v4631 = vmax.bf16 %v4460, %v3998
      %v4632 = vmax.bf16 %v4461, %v4001
      %v4633 = vmax.bf16 %v4462, %v4004
      %v4634 = vmax.bf16 %v4463, %v4007
      %v4635 = vmax.bf16 %v4464, %v4010
      %v4636 = vmax.bf16 %v4465, %v4013
      %v4637 = vmax.bf16 %v4466, %v4016
      %v4638 = vmax.bf16 %v4467, %v4019
      %v4639 = vmax.bf16 %v4468, %v4022
      %v4640 = vmax.bf16 %v4469, %v4025
      %v4641 = vmax.bf16 %v4470, %v4028
      %v4642 = vmax.bf16 %v4471, %v4031
      %v4643 = vmax.bf16 %v4472, %v4034
      %v4644 = vmax.bf16 %v4473, %v4037
      %v4645 = vmax.bf16 %v4474, %v4040
      %v4646 = vmax.bf16 %v4475, %v4043
      %v4647 = vmax.bf16 %v4476, %v4046
      %v4648 = vmax.bf16 %v4477, %v4049
      %v4649 = vmax.bf16 %v4478, %v4052
      %v4650 = vmax.bf16 %v4479, %v4055
      %v4651 = vmax.bf16 %v4480, %v4058
      %v4652 = vmax.bf16 %v4481, %v4061
      %v4653 = vmax.bf16 %v4482, %v4064
      %v4654 = vmax.bf16 %v4483, %v4067
      %v4655 = vmax.bf16 %v4484, %v4070
      %v4656 = vmax.bf16 %v4485, %v4073
      %v4657 = vmax.bf16 %v4486, %v4076
      %v4658 = vmax.bf16 %v4487, %v4079
      %v4659 = vmax.bf16 %v4488, %v4082
      %v4660 = vmax.bf16 %v4489, %v4085
      %v4661 = vmax.bf16 %v4490, %v4088
      %v4662 = vmax.bf16 %v4491, %v4091
      %v4663 = vmax.bf16 %v4492, %v4094
      %v4664 = vmax.bf16 %v4493, %v4097
      %v4665 = vmax.bf16 %v4494, %v4100
      %v4666 = vmax.bf16 %v4495, %v4103
      %v4667 = vmax.bf16 %v4496, %v4106
      %v4668 = vmax.bf16 %v4497, %v4109
      %v4669 = vmax.bf16 %v4498, %v4112
      %v4670 = vmax.bf16 %v4499, %v4115
      %v4671 = vmax.bf16 %v4500, %v4118
      %v4672 = vmax.bf16 %v4501, %v4121
      %v4673 = vmax.bf16 %v4502, %v4124
      %v4674 = vmax.bf16 %v4503, %v4127
      %v4675 = vmax.bf16 %v4504, %v4130
      %v4676 = vmax.bf16 %v4505, %v4133
      %v4677 = vmax.bf16 %v4506, %v4136
      %v4678 = vmax.bf16 %v4507, %v4139
      %v4679 = vmax.bf16 %v4508, %v4142
      %v4680 = vmax.bf16 %v4509, %v4145
      %v4681 = vmax.bf16 %v4510, %v4148
      %v4682 = vmax.bf16 %v4511, %v4151
      %v4683 = vmax.bf16 %v4512, %v4154
      %v4684 = vmax.bf16 %v4513, %v4157
      %v4685 = vmax.bf16 %v4514, %v4160
      %v4686 = vmax.bf16 %v4515, %v4163
      %v4687 = vmax.bf16 %v4516, %v4166
      %v4688 = vmax.bf16 %v4517, %v4169
      %v4689 = vmax.bf16 %v4518, %v4172
      %v4690 = vmax.bf16 %v4519, %v4175
      %v4691 = vmax.bf16 %v4520, %v4178
      %v4692 = vmax.bf16 %v4521, %v4181
      %v4693 = vmax.bf16 %v4522, %v4184
      %v4694 = vmax.bf16 %v4523, %v4187
      %v4695 = vmax.bf16 %v4524, %v4190
      %v4696 = vmax.bf16 %v4525, %v4193
      %v4697 = vmax.bf16 %v4526, %v4196
      %v4698 = vmax.bf16 %v4527, %v4199
      %v4699 = vmax.bf16 %v4528, %v4202
      %v4700 = vmax.bf16 %v4529, %v4205
      %v4701 = vmax.bf16 %v4530, %v4208
      %v4702 = vmax.bf16 %v4531, %v4211
      %v4703 = vmax.bf16 %v4532, %v4214
      %v4704 = vmax.bf16 %v4533, %v4217
      %v4705 = vmax.bf16 %v4534, %v4220
      %v4706 = vmax.bf16 %v4535, %v4223
      %v4707 = vmax.bf16 %v4536, %v4226
      %v4708 = vmax.bf16 %v4537, %v4229
      %v4709 = vmax.bf16 %v4538, %v4232
      %v4710 = vmax.bf16 %v4539, %v4235
      %v4711 = vmax.bf16 %v4540, %v4238
      %v4712 = vmax.bf16 %v4541, %v4241
      %v4713 = vmax.bf16 %v4542, %v4244
      %v4714 = vmax.bf16 %v4543, %v4247
      %v4715 = vmax.bf16 %v4544, %v4250
      %v4716 = vmax.bf16 %v4545, %v4253
      %v4717 = vmax.bf16 %v4546, %v4256
      %v4718 = vmax.bf16 %v4547, %v4259
      %v4719 = vmax.bf16 %v4548, %v4262
      %v4720 = vmax.bf16 %v4549, %v4265
      %v4721 = vmax.bf16 %v4550, %v4268
      %v4722 = vmax.bf16 %v4551, %v4271
      %v4723 = vmax.bf16 %v4552, %v4274
      %v4724 = vmax.bf16 %v4553, %v4277
      %v4725 = vmax.bf16 %v4554, %v4280
      %v4726 = vmax.bf16 %v4555, %v4283
      %v4727 = vmax.bf16 %v4556, %v4286
      %v4728 = vmax.bf16 %v4557, %v4578
      %v4729 = vmax.bf16 %v4558, %v4581
      %v4730 = vmax.bf16 %v4559, %v4584
      %v4731 = vmax.bf16 %v4560, %v4587
      %v4732 = vmax.bf16 %v4561, %v4590
      %v4733 = vld [vmem:[%s111 + $0x240] sm:$0x7]
      %vm4734 = vsmask.f32 1280
      %vm4735 = vsmask.f32 5392
      %vm4736 = vmor %vm4734, %vm4735
      %v4738 = vshrl.u32 %v4562, 16
      %v4740 = vrot.slane %v4738, 6
      %v4741 = vshll.u32 %v4562, 16
      %v4743 = vrot.slane %v4741, 7
      %v4744 = vor.u32 %v4740, %v4743
      %v4745 = vrot.slane %v4744, 4
      %v4746 = vrot.slane %v351, 6
      %v4747 = vrot.slane %v347, 7
      %v4748 = vor.u32 %v4746, %v4747
      %v4749 = vsel %vm4736, %v4745, %v4748
      %v4750 = vrot.slane %v4748, 4
      %v4751 = vrot.slane %v361, 6
      %v4752 = vrot.slane %v357, 7
      %v4753 = vor.u32 %v4751, %v4752
      %v4754 = vsel %vm4736, %v4750, %v4753
      %v4755 = vrot.slane %v4753, 4
      %v4756 = vrot.slane %v371, 6
      %v4757 = vrot.slane %v367, 7
      %v4758 = vor.u32 %v4756, %v4757
      %v4759 = vsel %vm4736, %v4755, %v4758
      %v4760 = vrot.slane %v4758, 4
      %v4761 = vrot.slane %v381, 6
      %v4762 = vrot.slane %v377, 7
      %v4763 = vor.u32 %v4761, %v4762
      %v4764 = vsel %vm4736, %v4760, %v4763
      %v4765 = vrot.slane %v4763, 4
      %v4766 = vrot.slane %v391, 6
      %v4767 = vrot.slane %v387, 7
      %v4768 = vor.u32 %v4766, %v4767
      %v4769 = vsel %vm4736, %v4765, %v4768
      %v4770 = vrot.slane %v4768, 4
      %v4771 = vrot.slane %v401, 6
      %v4772 = vrot.slane %v397, 7
      %v4773 = vor.u32 %v4771, %v4772
      %v4774 = vsel %vm4736, %v4770, %v4773
      %v4775 = vrot.slane %v4773, 4
      %v4776 = vrot.slane %v411, 6
      %v4777 = vrot.slane %v407, 7
      %v4778 = vor.u32 %v4776, %v4777
      %v4779 = vsel %vm4736, %v4775, %v4778
      %v4780 = vrot.slane %v4778, 4
      %v4781 = vrot.slane %v421, 6
      %v4782 = vrot.slane %v417, 7
      %v4783 = vor.u32 %v4781, %v4782
      %v4784 = vsel %vm4736, %v4780, %v4783
      %v4785 = vrot.slane %v4783, 4
      %v4786 = vrot.slane %v431, 6
      %v4787 = vrot.slane %v427, 7
      %v4788 = vor.u32 %v4786, %v4787
      %v4789 = vsel %vm4736, %v4785, %v4788
      %v4790 = vrot.slane %v4788, 4
      %v4791 = vrot.slane %v441, 6
      %v4792 = vrot.slane %v437, 7
      %v4793 = vor.u32 %v4791, %v4792
      %v4794 = vsel %vm4736, %v4790, %v4793
      %v4795 = vrot.slane %v4793, 4
      %v4796 = vrot.slane %v451, 6
      %v4797 = vrot.slane %v447, 7
      %v4798 = vor.u32 %v4796, %v4797
      %v4799 = vsel %vm4736, %v4795, %v4798
      %v4800 = vrot.slane %v4798, 4
      %v4801 = vrot.slane %v461, 6
      %v4802 = vrot.slane %v457, 7
      %v4803 = vor.u32 %v4801, %v4802
      %v4804 = vsel %vm4736, %v4800, %v4803
      %v4805 = vrot.slane %v4803, 4
      %v4806 = vrot.slane %v471, 6
      %v4807 = vrot.slane %v467, 7
      %v4808 = vor.u32 %v4806, %v4807
      %v4809 = vsel %vm4736, %v4805, %v4808
      %v4810 = vrot.slane %v4808, 4
      %v4811 = vrot.slane %v481, 6
      %v4812 = vrot.slane %v477, 7
      %v4813 = vor.u32 %v4811, %v4812
      %v4814 = vsel %vm4736, %v4810, %v4813
      %v4815 = vrot.slane %v4813, 4
      %v4816 = vrot.slane %v491, 6
      %v4817 = vrot.slane %v487, 7
      %v4818 = vor.u32 %v4816, %v4817
      %v4819 = vsel %vm4736, %v4815, %v4818
      %v4820 = vrot.slane %v4818, 4
      %v4821 = vrot.slane %v501, 6
      %v4822 = vrot.slane %v497, 7
      %v4823 = vor.u32 %v4821, %v4822
      %v4824 = vsel %vm4736, %v4820, %v4823
      %v4825 = vrot.slane %v4823, 4
      %v4826 = vrot.slane %v511, 6
      %v4827 = vrot.slane %v507, 7
      %v4828 = vor.u32 %v4826, %v4827
      %v4829 = vsel %vm4736, %v4825, %v4828
      %v4830 = vrot.slane %v4828, 4
      %v4831 = vrot.slane %v521, 6
      %v4832 = vrot.slane %v517, 7
      %v4833 = vor.u32 %v4831, %v4832
      %v4834 = vsel %vm4736, %v4830, %v4833
      %v4835 = vrot.slane %v4833, 4
      %v4836 = vrot.slane %v531, 6
      %v4837 = vrot.slane %v527, 7
      %v4838 = vor.u32 %v4836, %v4837
      %v4839 = vsel %vm4736, %v4835, %v4838
      %v4840 = vrot.slane %v4838, 4
      %v4841 = vrot.slane %v541, 6
      %v4842 = vrot.slane %v537, 7
      %v4843 = vor.u32 %v4841, %v4842
      %v4844 = vsel %vm4736, %v4840, %v4843
      %v4845 = vrot.slane %v4843, 4
      %v4846 = vrot.slane %v551, 6
      %v4847 = vrot.slane %v547, 7
      %v4848 = vor.u32 %v4846, %v4847
      %v4849 = vsel %vm4736, %v4845, %v4848
      %v4850 = vrot.slane %v4848, 4
      %v4851 = vrot.slane %v561, 6
      %v4852 = vrot.slane %v557, 7
      %v4853 = vor.u32 %v4851, %v4852
      %v4854 = vsel %vm4736, %v4850, %v4853
      %v4855 = vrot.slane %v4853, 4
      %v4856 = vrot.slane %v571, 6
      %v4857 = vrot.slane %v567, 7
      %v4858 = vor.u32 %v4856, %v4857
      %v4859 = vsel %vm4736, %v4855, %v4858
      %v4860 = vrot.slane %v4858, 4
      %v4861 = vrot.slane %v581, 6
      %v4862 = vrot.slane %v577, 7
      %v4863 = vor.u32 %v4861, %v4862
      %v4864 = vsel %vm4736, %v4860, %v4863
      %v4865 = vrot.slane %v4863, 4
      %v4866 = vrot.slane %v591, 6
      %v4867 = vrot.slane %v587, 7
      %v4868 = vor.u32 %v4866, %v4867
      %v4869 = vsel %vm4736, %v4865, %v4868
      %v4870 = vrot.slane %v4868, 4
      %v4871 = vrot.slane %v601, 6
      %v4872 = vrot.slane %v597, 7
      %v4873 = vor.u32 %v4871, %v4872
      %v4874 = vsel %vm4736, %v4870, %v4873
      %v4875 = vrot.slane %v4873, 4
      %v4876 = vrot.slane %v611, 6
      %v4877 = vrot.slane %v607, 7
      %v4878 = vor.u32 %v4876, %v4877
      %v4879 = vsel %vm4736, %v4875, %v4878
      %v4880 = vrot.slane %v4878, 4
      %v4881 = vrot.slane %v621, 6
      %v4882 = vrot.slane %v617, 7
      %v4883 = vor.u32 %v4881, %v4882
      %v4884 = vsel %vm4736, %v4880, %v4883
      %v4885 = vrot.slane %v4883, 4
      %v4886 = vrot.slane %v631, 6
      %v4887 = vrot.slane %v627, 7
      %v4888 = vor.u32 %v4886, %v4887
      %v4889 = vsel %vm4736, %v4885, %v4888
      %v4890 = vrot.slane %v4888, 4
      %v4891 = vrot.slane %v641, 6
      %v4892 = vrot.slane %v637, 7
      %v4893 = vor.u32 %v4891, %v4892
      %v4894 = vsel %vm4736, %v4890, %v4893
      %v4895 = vrot.slane %v4893, 4
      %v4896 = vrot.slane %v651, 6
      %v4897 = vrot.slane %v647, 7
      %v4898 = vor.u32 %v4896, %v4897
      %v4899 = vsel %vm4736, %v4895, %v4898
      %v4900 = vrot.slane %v4898, 4
      %v4901 = vrot.slane %v661, 6
      %v4902 = vrot.slane %v657, 7
      %v4903 = vor.u32 %v4901, %v4902
      %v4904 = vsel %vm4736, %v4900, %v4903
      %v4905 = vrot.slane %v4903, 4
      %v4906 = vrot.slane %v671, 6
      %v4907 = vrot.slane %v667, 7
      %v4908 = vor.u32 %v4906, %v4907
      %v4909 = vsel %vm4736, %v4905, %v4908
      %v4910 = vrot.slane %v4908, 4
      %v4911 = vrot.slane %v681, 6
      %v4912 = vrot.slane %v677, 7
      %v4913 = vor.u32 %v4911, %v4912
      %v4914 = vsel %vm4736, %v4910, %v4913
      %v4915 = vrot.slane %v4913, 4
      %v4916 = vrot.slane %v691, 6
      %v4917 = vrot.slane %v687, 7
      %v4918 = vor.u32 %v4916, %v4917
      %v4919 = vsel %vm4736, %v4915, %v4918
      %v4920 = vrot.slane %v4918, 4
      %v4921 = vrot.slane %v701, 6
      %v4922 = vrot.slane %v697, 7
      %v4923 = vor.u32 %v4921, %v4922
      %v4924 = vsel %vm4736, %v4920, %v4923
      %v4925 = vrot.slane %v4923, 4
      %v4926 = vrot.slane %v711, 6
      %v4927 = vrot.slane %v707, 7
      %v4928 = vor.u32 %v4926, %v4927
      %v4929 = vsel %vm4736, %v4925, %v4928
      %v4930 = vrot.slane %v4928, 4
      %v4931 = vrot.slane %v721, 6
      %v4932 = vrot.slane %v717, 7
      %v4933 = vor.u32 %v4931, %v4932
      %v4934 = vsel %vm4736, %v4930, %v4933
      %v4935 = vrot.slane %v4933, 4
      %v4936 = vrot.slane %v731, 6
      %v4937 = vrot.slane %v727, 7
      %v4938 = vor.u32 %v4936, %v4937
      %v4939 = vsel %vm4736, %v4935, %v4938
      %v4940 = vrot.slane %v4938, 4
      %v4941 = vrot.slane %v741, 6
      %v4942 = vrot.slane %v737, 7
      %v4943 = vor.u32 %v4941, %v4942
      %v4944 = vsel %vm4736, %v4940, %v4943
      %v4945 = vrot.slane %v4943, 4
      %v4946 = vrot.slane %v751, 6
      %v4947 = vrot.slane %v747, 7
      %v4948 = vor.u32 %v4946, %v4947
      %v4949 = vsel %vm4736, %v4945, %v4948
      %v4950 = vrot.slane %v4948, 4
      %v4951 = vrot.slane %v761, 6
      %v4952 = vrot.slane %v757, 7
      %v4953 = vor.u32 %v4951, %v4952
      %v4954 = vsel %vm4736, %v4950, %v4953
      %v4955 = vrot.slane %v4953, 4
      %v4956 = vrot.slane %v771, 6
      %v4957 = vrot.slane %v767, 7
      %v4958 = vor.u32 %v4956, %v4957
      %v4959 = vsel %vm4736, %v4955, %v4958
      %v4960 = vrot.slane %v4958, 4
      %v4961 = vrot.slane %v781, 6
      %v4962 = vrot.slane %v777, 7
      %v4963 = vor.u32 %v4961, %v4962
      %v4964 = vsel %vm4736, %v4960, %v4963
      %v4965 = vrot.slane %v4963, 4
      %v4966 = vrot.slane %v791, 6
      %v4967 = vrot.slane %v787, 7
      %v4968 = vor.u32 %v4966, %v4967
      %v4969 = vsel %vm4736, %v4965, %v4968
      %v4970 = vrot.slane %v4968, 4
      %v4971 = vrot.slane %v801, 6
      %v4972 = vrot.slane %v797, 7
      %v4973 = vor.u32 %v4971, %v4972
      %v4974 = vsel %vm4736, %v4970, %v4973
      %v4975 = vrot.slane %v4973, 4
      %v4976 = vrot.slane %v811, 6
      %v4977 = vrot.slane %v807, 7
      %v4978 = vor.u32 %v4976, %v4977
      %v4979 = vsel %vm4736, %v4975, %v4978
      %v4980 = vrot.slane %v4978, 4
      %v4981 = vrot.slane %v821, 6
      %v4982 = vrot.slane %v817, 7
      %v4983 = vor.u32 %v4981, %v4982
      %v4984 = vsel %vm4736, %v4980, %v4983
      %v4985 = vrot.slane %v4983, 4
      %v4986 = vrot.slane %v831, 6
      %v4987 = vrot.slane %v827, 7
      %v4988 = vor.u32 %v4986, %v4987
      %v4989 = vsel %vm4736, %v4985, %v4988
      %v4990 = vrot.slane %v4988, 4
      %v4991 = vrot.slane %v841, 6
      %v4992 = vrot.slane %v837, 7
      %v4993 = vor.u32 %v4991, %v4992
      %v4994 = vsel %vm4736, %v4990, %v4993
      %v4995 = vrot.slane %v4993, 4
      %v4996 = vrot.slane %v851, 6
      %v4997 = vrot.slane %v847, 7
      %v4998 = vor.u32 %v4996, %v4997
      %v4999 = vsel %vm4736, %v4995, %v4998
      %v5000 = vrot.slane %v4998, 4
      %v5001 = vrot.slane %v861, 6
      %v5002 = vrot.slane %v857, 7
      %v5003 = vor.u32 %v5001, %v5002
      %v5004 = vsel %vm4736, %v5000, %v5003
      %v5005 = vrot.slane %v5003, 4
      %v5006 = vrot.slane %v871, 6
      %v5007 = vrot.slane %v867, 7
      %v5008 = vor.u32 %v5006, %v5007
      %v5009 = vsel %vm4736, %v5005, %v5008
      %v5010 = vrot.slane %v5008, 4
      %v5011 = vrot.slane %v881, 6
      %v5012 = vrot.slane %v877, 7
      %v5013 = vor.u32 %v5011, %v5012
      %v5014 = vsel %vm4736, %v5010, %v5013
      %v5015 = vrot.slane %v5013, 4
      %v5016 = vrot.slane %v891, 6
      %v5017 = vrot.slane %v887, 7
      %v5018 = vor.u32 %v5016, %v5017
      %v5019 = vsel %vm4736, %v5015, %v5018
      %v5020 = vrot.slane %v5018, 4
      %v5021 = vrot.slane %v901, 6
      %v5022 = vrot.slane %v897, 7
      %v5023 = vor.u32 %v5021, %v5022
      %v5024 = vsel %vm4736, %v5020, %v5023
      %v5025 = vrot.slane %v5023, 4
      %v5026 = vrot.slane %v911, 6
      %v5027 = vrot.slane %v907, 7
      %v5028 = vor.u32 %v5026, %v5027
      %v5029 = vsel %vm4736, %v5025, %v5028
      %v5030 = vrot.slane %v5028, 4
      %v5031 = vrot.slane %v921, 6
      %v5032 = vrot.slane %v917, 7
      %v5033 = vor.u32 %v5031, %v5032
      %v5034 = vsel %vm4736, %v5030, %v5033
      %v5035 = vrot.slane %v5033, 4
      %v5036 = vrot.slane %v931, 6
      %v5037 = vrot.slane %v927, 7
      %v5038 = vor.u32 %v5036, %v5037
      %v5039 = vsel %vm4736, %v5035, %v5038
      %v5040 = vrot.slane %v5038, 4
      %v5041 = vrot.slane %v941, 6
      %v5042 = vrot.slane %v937, 7
      %v5043 = vor.u32 %v5041, %v5042
      %v5044 = vsel %vm4736, %v5040, %v5043
      %v5045 = vrot.slane %v5043, 4
      %v5046 = vrot.slane %v951, 6
      %v5047 = vrot.slane %v947, 7
      %v5048 = vor.u32 %v5046, %v5047
      %v5049 = vsel %vm4736, %v5045, %v5048
      %v5050 = vrot.slane %v5048, 4
      %v5051 = vrot.slane %v961, 6
      %v5052 = vrot.slane %v957, 7
      %v5053 = vor.u32 %v5051, %v5052
      %v5054 = vsel %vm4736, %v5050, %v5053
      %v5055 = vrot.slane %v5053, 4
      %v5056 = vrot.slane %v971, 6
      %v5057 = vrot.slane %v967, 7
      %v5058 = vor.u32 %v5056, %v5057
      %v5059 = vsel %vm4736, %v5055, %v5058
      %v5060 = vrot.slane %v5058, 4
      %v5061 = vrot.slane %v981, 6
      %v5062 = vrot.slane %v977, 7
      %v5063 = vor.u32 %v5061, %v5062
      %v5064 = vsel %vm4736, %v5060, %v5063
      %v5065 = vrot.slane %v5063, 4
      %v5066 = vrot.slane %v991, 6
      %v5067 = vrot.slane %v987, 7
      %v5068 = vor.u32 %v5066, %v5067
      %v5069 = vsel %vm4736, %v5065, %v5068
      %v5070 = vrot.slane %v5068, 4
      %v5071 = vrot.slane %v1001, 6
      %v5072 = vrot.slane %v997, 7
      %v5073 = vor.u32 %v5071, %v5072
      %v5074 = vsel %vm4736, %v5070, %v5073
      %v5075 = vrot.slane %v5073, 4
      %v5076 = vrot.slane %v1011, 6
      %v5077 = vrot.slane %v1007, 7
      %v5078 = vor.u32 %v5076, %v5077
      %v5079 = vsel %vm4736, %v5075, %v5078
      %v5080 = vrot.slane %v5078, 4
      %v5081 = vrot.slane %v1021, 6
      %v5082 = vrot.slane %v1017, 7
      %v5083 = vor.u32 %v5081, %v5082
      %v5084 = vsel %vm4736, %v5080, %v5083
      %v5085 = vrot.slane %v5083, 4
      %v5086 = vrot.slane %v1031, 6
      %v5087 = vrot.slane %v1027, 7
      %v5088 = vor.u32 %v5086, %v5087
      %v5089 = vsel %vm4736, %v5085, %v5088
      %v5090 = vrot.slane %v5088, 4
      %v5091 = vrot.slane %v1041, 6
      %v5092 = vrot.slane %v1037, 7
      %v5093 = vor.u32 %v5091, %v5092
      %v5094 = vsel %vm4736, %v5090, %v5093
      %v5095 = vrot.slane %v5093, 4
      %v5096 = vrot.slane %v1051, 6
      %v5097 = vrot.slane %v1047, 7
      %v5098 = vor.u32 %v5096, %v5097
      %v5099 = vsel %vm4736, %v5095, %v5098
      %v5100 = vrot.slane %v5098, 4
      %v5101 = vrot.slane %v1061, 6
      %v5102 = vrot.slane %v1057, 7
      %v5103 = vor.u32 %v5101, %v5102
      %v5104 = vsel %vm4736, %v5100, %v5103
      %v5105 = vrot.slane %v5103, 4
      %v5106 = vrot.slane %v1071, 6
      %v5107 = vrot.slane %v1067, 7
      %v5108 = vor.u32 %v5106, %v5107
      %v5109 = vsel %vm4736, %v5105, %v5108
      %v5110 = vrot.slane %v5108, 4
      %v5111 = vrot.slane %v1081, 6
      %v5112 = vrot.slane %v1077, 7
      %v5113 = vor.u32 %v5111, %v5112
      %v5114 = vsel %vm4736, %v5110, %v5113
      %v5115 = vrot.slane %v5113, 4
      %v5116 = vrot.slane %v1091, 6
      %v5117 = vrot.slane %v1087, 7
      %v5118 = vor.u32 %v5116, %v5117
      %v5119 = vsel %vm4736, %v5115, %v5118
      %v5120 = vrot.slane %v5118, 4
      %v5121 = vrot.slane %v1101, 6
      %v5122 = vrot.slane %v1097, 7
      %v5123 = vor.u32 %v5121, %v5122
      %v5124 = vsel %vm4736, %v5120, %v5123
      %v5125 = vrot.slane %v5123, 4
      %v5126 = vrot.slane %v1111, 6
      %v5127 = vrot.slane %v1107, 7
      %v5128 = vor.u32 %v5126, %v5127
      %v5129 = vsel %vm4736, %v5125, %v5128
      %v5130 = vrot.slane %v5128, 4
      %v5131 = vrot.slane %v1121, 6
      %v5132 = vrot.slane %v1117, 7
      %v5133 = vor.u32 %v5131, %v5132
      %v5134 = vsel %vm4736, %v5130, %v5133
      %v5135 = vrot.slane %v5133, 4
      %v5136 = vrot.slane %v1131, 6
      %v5137 = vrot.slane %v1127, 7
      %v5138 = vor.u32 %v5136, %v5137
      %v5139 = vsel %vm4736, %v5135, %v5138
      %v5140 = vrot.slane %v5138, 4
      %v5141 = vrot.slane %v1141, 6
      %v5142 = vrot.slane %v1137, 7
      %v5143 = vor.u32 %v5141, %v5142
      %v5144 = vsel %vm4736, %v5140, %v5143
      %v5145 = vrot.slane %v5143, 4
      %v5146 = vrot.slane %v1151, 6
      %v5147 = vrot.slane %v1147, 7
      %v5148 = vor.u32 %v5146, %v5147
      %v5149 = vsel %vm4736, %v5145, %v5148
      %v5150 = vrot.slane %v5148, 4
      %v5151 = vrot.slane %v1161, 6
      %v5152 = vrot.slane %v1157, 7
      %v5153 = vor.u32 %v5151, %v5152
      %v5154 = vsel %vm4736, %v5150, %v5153
      %v5155 = vrot.slane %v5153, 4
      %v5156 = vrot.slane %v1171, 6
      %v5157 = vrot.slane %v1167, 7
      %v5158 = vor.u32 %v5156, %v5157
      %v5159 = vsel %vm4736, %v5155, %v5158
      %v5160 = vrot.slane %v5158, 4
      %v5161 = vrot.slane %v1181, 6
      %v5162 = vrot.slane %v1177, 7
      %v5163 = vor.u32 %v5161, %v5162
      %v5164 = vsel %vm4736, %v5160, %v5163
      %v5165 = vrot.slane %v5163, 4
      %v5166 = vrot.slane %v1191, 6
      %v5167 = vrot.slane %v1187, 7
      %v5168 = vor.u32 %v5166, %v5167
      %v5169 = vsel %vm4736, %v5165, %v5168
      %v5170 = vrot.slane %v5168, 4
      %v5171 = vrot.slane %v1201, 6
      %v5172 = vrot.slane %v1197, 7
      %v5173 = vor.u32 %v5171, %v5172
      %v5174 = vsel %vm4736, %v5170, %v5173
      %v5175 = vrot.slane %v5173, 4
      %v5176 = vrot.slane %v1211, 6
      %v5177 = vrot.slane %v1207, 7
      %v5178 = vor.u32 %v5176, %v5177
      %v5179 = vsel %vm4736, %v5175, %v5178
      %v5180 = vrot.slane %v5178, 4
      %v5181 = vrot.slane %v1221, 6
      %v5182 = vrot.slane %v1217, 7
      %v5183 = vor.u32 %v5181, %v5182
      %v5184 = vsel %vm4736, %v5180, %v5183
      %v5185 = vrot.slane %v5183, 4
      %v5186 = vrot.slane %v1231, 6
      %v5187 = vrot.slane %v1227, 7
      %v5188 = vor.u32 %v5186, %v5187
      %v5189 = vsel %vm4736, %v5185, %v5188
      %v5190 = vrot.slane %v5188, 4
      %v5191 = vrot.slane %v1241, 6
      %v5192 = vrot.slane %v1237, 7
      %v5193 = vor.u32 %v5191, %v5192
      %v5194 = vsel %vm4736, %v5190, %v5193
      %v5195 = vrot.slane %v5193, 4
      %v5196 = vrot.slane %v1251, 6
      %v5197 = vrot.slane %v1247, 7
      %v5198 = vor.u32 %v5196, %v5197
      %v5199 = vsel %vm4736, %v5195, %v5198
      %v5200 = vrot.slane %v5198, 4
      %v5201 = vrot.slane %v1261, 6
      %v5202 = vrot.slane %v1257, 7
      %v5203 = vor.u32 %v5201, %v5202
      %v5204 = vsel %vm4736, %v5200, %v5203
      %v5205 = vrot.slane %v5203, 4
      %v5206 = vrot.slane %v1271, 6
      %v5207 = vrot.slane %v1267, 7
      %v5208 = vor.u32 %v5206, %v5207
      %v5209 = vsel %vm4736, %v5205, %v5208
      %v5210 = vrot.slane %v5208, 4
      %v5211 = vrot.slane %v1281, 6
      %v5212 = vrot.slane %v1277, 7
      %v5213 = vor.u32 %v5211, %v5212
      %v5214 = vsel %vm4736, %v5210, %v5213
      %v5215 = vrot.slane %v5213, 4
      %v5216 = vrot.slane %v1291, 6
      %v5217 = vrot.slane %v1287, 7
      %v5218 = vor.u32 %v5216, %v5217
      %v5219 = vsel %vm4736, %v5215, %v5218
      %v5220 = vrot.slane %v5218, 4
      %v5221 = vrot.slane %v1301, 6
      %v5222 = vrot.slane %v1297, 7
      %v5223 = vor.u32 %v5221, %v5222
      %v5224 = vsel %vm4736, %v5220, %v5223
      %v5225 = vrot.slane %v5223, 4
      %v5226 = vrot.slane %v1311, 6
      %v5227 = vrot.slane %v1307, 7
      %v5228 = vor.u32 %v5226, %v5227
      %v5229 = vsel %vm4736, %v5225, %v5228
      %v5230 = vrot.slane %v5228, 4
      %v5231 = vrot.slane %v1321, 6
      %v5232 = vrot.slane %v1317, 7
      %v5233 = vor.u32 %v5231, %v5232
      %v5234 = vsel %vm4736, %v5230, %v5233
      %v5235 = vrot.slane %v5233, 4
      %v5236 = vrot.slane %v1331, 6
      %v5237 = vrot.slane %v1327, 7
      %v5238 = vor.u32 %v5236, %v5237
      %v5239 = vsel %vm4736, %v5235, %v5238
      %v5240 = vrot.slane %v5238, 4
      %v5241 = vrot.slane %v1341, 6
      %v5242 = vrot.slane %v1337, 7
      %v5243 = vor.u32 %v5241, %v5242
      %v5244 = vsel %vm4736, %v5240, %v5243
      %v5245 = vrot.slane %v5243, 4
      %v5246 = vrot.slane %v1351, 6
      %v5247 = vrot.slane %v1347, 7
      %v5248 = vor.u32 %v5246, %v5247
      %v5249 = vsel %vm4736, %v5245, %v5248
      %v5250 = vrot.slane %v5248, 4
      %v5251 = vrot.slane %v1361, 6
      %v5252 = vrot.slane %v1357, 7
      %v5253 = vor.u32 %v5251, %v5252
      %v5254 = vsel %vm4736, %v5250, %v5253
      %v5255 = vrot.slane %v5253, 4
      %v5256 = vrot.slane %v1371, 6
      %v5257 = vrot.slane %v1367, 7
      %v5258 = vor.u32 %v5256, %v5257
      %v5259 = vsel %vm4736, %v5255, %v5258
      %v5260 = vrot.slane %v5258, 4
      %v5261 = vrot.slane %v1381, 6
      %v5262 = vrot.slane %v1377, 7
      %v5263 = vor.u32 %v5261, %v5262
      %v5264 = vsel %vm4736, %v5260, %v5263
      %v5265 = vrot.slane %v5263, 4
      %v5266 = vrot.slane %v1391, 6
      %v5267 = vrot.slane %v1387, 7
      %v5268 = vor.u32 %v5266, %v5267
      %v5269 = vsel %vm4736, %v5265, %v5268
      %v5270 = vrot.slane %v5268, 4
      %v5271 = vrot.slane %v1401, 6
      %v5272 = vrot.slane %v1397, 7
      %v5273 = vor.u32 %v5271, %v5272
      %v5274 = vsel %vm4736, %v5270, %v5273
      %v5275 = vrot.slane %v5273, 4
      %v5276 = vrot.slane %v1411, 6
      %v5277 = vrot.slane %v1407, 7
      %v5278 = vor.u32 %v5276, %v5277
      %v5279 = vsel %vm4736, %v5275, %v5278
      %v5280 = vrot.slane %v5278, 4
      %v5281 = vrot.slane %v1421, 6
      %v5282 = vrot.slane %v1417, 7
      %v5283 = vor.u32 %v5281, %v5282
      %v5284 = vsel %vm4736, %v5280, %v5283
      %v5285 = vrot.slane %v5283, 4
      %v5286 = vrot.slane %v1431, 6
      %v5287 = vrot.slane %v1427, 7
      %v5288 = vor.u32 %v5286, %v5287
      %v5289 = vsel %vm4736, %v5285, %v5288
      %v5290 = vrot.slane %v5288, 4
      %v5291 = vrot.slane %v1441, 6
      %v5292 = vrot.slane %v1437, 7
      %v5293 = vor.u32 %v5291, %v5292
      %v5294 = vsel %vm4736, %v5290, %v5293
      %v5295 = vrot.slane %v5293, 4
      %v5296 = vrot.slane %v1451, 6
      %v5297 = vrot.slane %v1447, 7
      %v5298 = vor.u32 %v5296, %v5297
      %v5299 = vsel %vm4736, %v5295, %v5298
      %v5300 = vrot.slane %v5298, 4
      %v5301 = vrot.slane %v1461, 6
      %v5302 = vrot.slane %v1457, 7
      %v5303 = vor.u32 %v5301, %v5302
      %v5304 = vsel %vm4736, %v5300, %v5303
      %v5305 = vrot.slane %v5303, 4
      %v5306 = vrot.slane %v1471, 6
      %v5307 = vrot.slane %v1467, 7
      %v5308 = vor.u32 %v5306, %v5307
      %v5309 = vsel %vm4736, %v5305, %v5308
      %v5310 = vrot.slane %v5308, 4
      %v5311 = vrot.slane %v1481, 6
      %v5312 = vrot.slane %v1477, 7
      %v5313 = vor.u32 %v5311, %v5312
      %v5314 = vsel %vm4736, %v5310, %v5313
      %v5315 = vrot.slane %v5313, 4
      %v5316 = vrot.slane %v1491, 6
      %v5317 = vrot.slane %v1487, 7
      %v5318 = vor.u32 %v5316, %v5317
      %v5319 = vsel %vm4736, %v5315, %v5318
      %v5320 = vrot.slane %v5318, 4
      %v5321 = vrot.slane %v1501, 6
      %v5322 = vrot.slane %v1497, 7
      %v5323 = vor.u32 %v5321, %v5322
      %v5324 = vsel %vm4736, %v5320, %v5323
      %v5325 = vrot.slane %v5323, 4
      %v5326 = vrot.slane %v1511, 6
      %v5327 = vrot.slane %v1507, 7
      %v5328 = vor.u32 %v5326, %v5327
      %v5329 = vsel %vm4736, %v5325, %v5328
      %v5330 = vrot.slane %v5328, 4
      %v5331 = vrot.slane %v1521, 6
      %v5332 = vrot.slane %v1517, 7
      %v5333 = vor.u32 %v5331, %v5332
      %v5334 = vsel %vm4736, %v5330, %v5333
      %v5335 = vrot.slane %v5333, 4
      %v5336 = vrot.slane %v1531, 6
      %v5337 = vrot.slane %v1527, 7
      %v5338 = vor.u32 %v5336, %v5337
      %v5339 = vsel %vm4736, %v5335, %v5338
      %v5340 = vrot.slane %v5338, 4
      %v5341 = vrot.slane %v1541, 6
      %v5342 = vrot.slane %v1537, 7
      %v5343 = vor.u32 %v5341, %v5342
      %v5344 = vsel %vm4736, %v5340, %v5343
      %v5345 = vrot.slane %v5343, 4
      %v5346 = vrot.slane %v1551, 6
      %v5347 = vrot.slane %v1547, 7
      %v5348 = vor.u32 %v5346, %v5347
      %v5349 = vsel %vm4736, %v5345, %v5348
      %v5350 = vrot.slane %v5348, 4
      %v5351 = vrot.slane %v1561, 6
      %v5352 = vrot.slane %v1557, 7
      %v5353 = vor.u32 %v5351, %v5352
      %v5354 = vsel %vm4736, %v5350, %v5353
      %v5355 = vrot.slane %v5353, 4
      %v5356 = vrot.slane %v1571, 6
      %v5357 = vrot.slane %v1567, 7
      %v5358 = vor.u32 %v5356, %v5357
      %v5359 = vsel %vm4736, %v5355, %v5358
      %v5360 = vrot.slane %v5358, 4
      %v5361 = vrot.slane %v1581, 6
      %v5362 = vrot.slane %v1577, 7
      %v5363 = vor.u32 %v5361, %v5362
      %v5364 = vsel %vm4736, %v5360, %v5363
      %v5365 = vrot.slane %v5363, 4
      %v5366 = vrot.slane %v1591, 6
      %v5367 = vrot.slane %v1587, 7
      %v5368 = vor.u32 %v5366, %v5367
      %v5369 = vsel %vm4736, %v5365, %v5368
      %v5370 = vrot.slane %v5368, 4
      %v5371 = vrot.slane %v1601, 6
      %v5372 = vrot.slane %v1597, 7
      %v5373 = vor.u32 %v5371, %v5372
      %v5374 = vsel %vm4736, %v5370, %v5373
      %v5375 = vrot.slane %v5373, 4
      %v5376 = vrot.slane %v1611, 6
      %v5377 = vrot.slane %v1607, 7
      %v5378 = vor.u32 %v5376, %v5377
      %v5379 = vsel %vm4736, %v5375, %v5378
      %v5380 = vrot.slane %v5378, 4
      %v5381 = vrot.slane %v3555, 6
      %v5382 = vrot.slane %v3558, 7
      %v5383 = vor.u32 %v5381, %v5382
      %v5384 = vsel %vm4736, %v5380, %v5383
      %v5385 = vrot.slane %v5383, 4
      %v5386 = vrot.slane %v3565, 6
      %v5387 = vrot.slane %v3568, 7
      %v5388 = vor.u32 %v5386, %v5387
      %v5389 = vsel %vm4736, %v5385, %v5388
      %v5390 = vrot.slane %v5388, 4
      %v5391 = vrot.slane %v3575, 6
      %v5392 = vrot.slane %v3578, 7
      %v5393 = vor.u32 %v5391, %v5392
      %v5394 = vsel %vm4736, %v5390, %v5393
      %v5395 = vrot.slane %v5393, 4
      %v5396 = vrot.slane %v3585, 6
      %v5397 = vrot.slane %v3588, 7
      %v5398 = vor.u32 %v5396, %v5397
      %v5399 = vsel %vm4736, %v5395, %v5398
      %v5400 = vrot.slane %v5398, 4
      %v5402 = vshrl.u32 %v4563, 16
      %v5404 = vrot.slane %v5402, 6
      %v5405 = vshll.u32 %v4563, 16
      %v5407 = vrot.slane %v5405, 7
      %v5408 = vor.u32 %v5404, %v5407
      %v5409 = vsel %vm4736, %v5400, %v5408
      %v5410 = vrot.slane %v5408, 4
      %v5412 = vshrl.u32 %v4564, 16
      %v5414 = vrot.slane %v5412, 6
      %v5415 = vshll.u32 %v4564, 16
      %v5417 = vrot.slane %v5415, 7
      %v5418 = vor.u32 %v5414, %v5417
      %v5419 = vsel %vm4736, %v5410, %v5418
      %v5420 = vrot.slane %v5418, 4
      %v5422 = vshrl.u32 %v4565, 16
      %v5424 = vrot.slane %v5422, 6
      %v5425 = vshll.u32 %v4565, 16
      %v5427 = vrot.slane %v5425, 7
      %v5428 = vor.u32 %v5424, %v5427
      %v5429 = vsel %vm4736, %v5420, %v5428
      %v5430 = vrot.slane %v5428, 4
      %v5432 = vshrl.u32 %v4566, 16
      %v5434 = vrot.slane %v5432, 6
      %v5435 = vshll.u32 %v4566, 16
      %v5437 = vrot.slane %v5435, 7
      %v5438 = vor.u32 %v5434, %v5437
      %v5439 = vsel %vm4736, %v5430, %v5438
      %v5440 = vrot.slane %v5438, 4
      %v5442 = vshrl.u32 %v4733, 16
      %v5444 = vrot.slane %v5442, 6
      %v5445 = vshll.u32 %v4733, 16
      %v5447 = vrot.slane %v5445, 7
      %v5448 = vor.u32 %v5444, %v5447
      %v5449 = vsel %vm4736, %v5440, %v5448
      %v5586 = vmax.bf16 %v4597, %v4749
      %v5587 = vmax.bf16 %v4598, %v4754
      %v5588 = vmax.bf16 %v4599, %v4759
      %v5589 = vmax.bf16 %v4600, %v4764
      %v5590 = vmax.bf16 %v4601, %v4769
      %v5591 = vmax.bf16 %v4602, %v4774
      %v5592 = vmax.bf16 %v4603, %v4779
      %v5593 = vmax.bf16 %v4604, %v4784
      %v5594 = vmax.bf16 %v4605, %v4789
      %v5595 = vmax.bf16 %v4606, %v4794
      %v5596 = vmax.bf16 %v4607, %v4799
      %v5597 = vmax.bf16 %v4608, %v4804
      %v5598 = vmax.bf16 %v4609, %v4809
      %v5599 = vmax.bf16 %v4610, %v4814
      %v5600 = vmax.bf16 %v4611, %v4819
      %v5601 = vmax.bf16 %v4612, %v4824
      %v5602 = vmax.bf16 %v4613, %v4829
      %v5603 = vmax.bf16 %v4614, %v4834
      %v5604 = vmax.bf16 %v4615, %v4839
      %v5605 = vmax.bf16 %v4616, %v4844
      %v5606 = vmax.bf16 %v4617, %v4849
      %v5607 = vmax.bf16 %v4618, %v4854
      %v5608 = vmax.bf16 %v4619, %v4859
      %v5609 = vmax.bf16 %v4620, %v4864
      %v5610 = vmax.bf16 %v4621, %v4869
      %v5611 = vmax.bf16 %v4622, %v4874
      %v5612 = vmax.bf16 %v4623, %v4879
      %v5613 = vmax.bf16 %v4624, %v4884
      %v5614 = vmax.bf16 %v4625, %v4889
      %v5615 = vmax.bf16 %v4626, %v4894
      %v5616 = vmax.bf16 %v4627, %v4899
      %v5617 = vmax.bf16 %v4628, %v4904
      %v5618 = vmax.bf16 %v4629, %v4909
      %v5619 = vmax.bf16 %v4630, %v4914
      %v5620 = vmax.bf16 %v4631, %v4919
      %v5621 = vmax.bf16 %v4632, %v4924
      %v5622 = vmax.bf16 %v4633, %v4929
      %v5623 = vmax.bf16 %v4634, %v4934
      %v5624 = vmax.bf16 %v4635, %v4939
      %v5625 = vmax.bf16 %v4636, %v4944
      %v5626 = vmax.bf16 %v4637, %v4949
      %v5627 = vmax.bf16 %v4638, %v4954
      %v5628 = vmax.bf16 %v4639, %v4959
      %v5629 = vmax.bf16 %v4640, %v4964
      %v5630 = vmax.bf16 %v4641, %v4969
      %v5631 = vmax.bf16 %v4642, %v4974
      %v5632 = vmax.bf16 %v4643, %v4979
      %v5633 = vmax.bf16 %v4644, %v4984
      %v5634 = vmax.bf16 %v4645, %v4989
      %v5635 = vmax.bf16 %v4646, %v4994
      %v5636 = vmax.bf16 %v4647, %v4999
      %v5637 = vmax.bf16 %v4648, %v5004
      %v5638 = vmax.bf16 %v4649, %v5009
      %v5639 = vmax.bf16 %v4650, %v5014
      %v5640 = vmax.bf16 %v4651, %v5019
      %v5641 = vmax.bf16 %v4652, %v5024
      %v5642 = vmax.bf16 %v4653, %v5029
      %v5643 = vmax.bf16 %v4654, %v5034
      %v5644 = vmax.bf16 %v4655, %v5039
      %v5645 = vmax.bf16 %v4656, %v5044
      %v5646 = vmax.bf16 %v4657, %v5049
      %v5647 = vmax.bf16 %v4658, %v5054
      %v5648 = vmax.bf16 %v4659, %v5059
      %v5649 = vmax.bf16 %v4660, %v5064
      %v5650 = vmax.bf16 %v4661, %v5069
      %v5651 = vmax.bf16 %v4662, %v5074
      %v5652 = vmax.bf16 %v4663, %v5079
      %v5653 = vmax.bf16 %v4664, %v5084
      %v5654 = vmax.bf16 %v4665, %v5089
      %v5655 = vmax.bf16 %v4666, %v5094
      %v5656 = vmax.bf16 %v4667, %v5099
      %v5657 = vmax.bf16 %v4668, %v5104
      %v5658 = vmax.bf16 %v4669, %v5109
      %v5659 = vmax.bf16 %v4670, %v5114
      %v5660 = vmax.bf16 %v4671, %v5119
      %v5661 = vmax.bf16 %v4672, %v5124
      %v5662 = vmax.bf16 %v4673, %v5129
      %v5663 = vmax.bf16 %v4674, %v5134
      %v5664 = vmax.bf16 %v4675, %v5139
      %v5665 = vmax.bf16 %v4676, %v5144
      %v5666 = vmax.bf16 %v4677, %v5149
      %v5667 = vmax.bf16 %v4678, %v5154
      %v5668 = vmax.bf16 %v4679, %v5159
      %v5669 = vmax.bf16 %v4680, %v5164
      %v5670 = vmax.bf16 %v4681, %v5169
      %v5671 = vmax.bf16 %v4682, %v5174
      %v5672 = vmax.bf16 %v4683, %v5179
      %v5673 = vmax.bf16 %v4684, %v5184
      %v5674 = vmax.bf16 %v4685, %v5189
      %v5675 = vmax.bf16 %v4686, %v5194
      %v5676 = vmax.bf16 %v4687, %v5199
      %v5677 = vmax.bf16 %v4688, %v5204
      %v5678 = vmax.bf16 %v4689, %v5209
      %v5679 = vmax.bf16 %v4690, %v5214
      %v5680 = vmax.bf16 %v4691, %v5219
      %v5681 = vmax.bf16 %v4692, %v5224
      %v5682 = vmax.bf16 %v4693, %v5229
      %v5683 = vmax.bf16 %v4694, %v5234
      %v5684 = vmax.bf16 %v4695, %v5239
      %v5685 = vmax.bf16 %v4696, %v5244
      %v5686 = vmax.bf16 %v4697, %v5249
      %v5687 = vmax.bf16 %v4698, %v5254
      %v5688 = vmax.bf16 %v4699, %v5259
      %v5689 = vmax.bf16 %v4700, %v5264
      %v5690 = vmax.bf16 %v4701, %v5269
      %v5691 = vmax.bf16 %v4702, %v5274
      %v5692 = vmax.bf16 %v4703, %v5279
      %v5693 = vmax.bf16 %v4704, %v5284
      %v5694 = vmax.bf16 %v4705, %v5289
      %v5695 = vmax.bf16 %v4706, %v5294
      %v5696 = vmax.bf16 %v4707, %v5299
      %v5697 = vmax.bf16 %v4708, %v5304
      %v5698 = vmax.bf16 %v4709, %v5309
      %v5699 = vmax.bf16 %v4710, %v5314
      %v5700 = vmax.bf16 %v4711, %v5319
      %v5701 = vmax.bf16 %v4712, %v5324
      %v5702 = vmax.bf16 %v4713, %v5329
      %v5703 = vmax.bf16 %v4714, %v5334
      %v5704 = vmax.bf16 %v4715, %v5339
      %v5705 = vmax.bf16 %v4716, %v5344
      %v5706 = vmax.bf16 %v4717, %v5349
      %v5707 = vmax.bf16 %v4718, %v5354
      %v5708 = vmax.bf16 %v4719, %v5359
      %v5709 = vmax.bf16 %v4720, %v5364
      %v5710 = vmax.bf16 %v4721, %v5369
      %v5711 = vmax.bf16 %v4722, %v5374
      %v5712 = vmax.bf16 %v4723, %v5379
      %v5713 = vmax.bf16 %v4724, %v5384
      %v5714 = vmax.bf16 %v4725, %v5389
      %v5715 = vmax.bf16 %v4726, %v5394
      %v5716 = vmax.bf16 %v4727, %v5399
      %v5717 = vmax.bf16 %v4728, %v5409
      %v5718 = vmax.bf16 %v4729, %v5419
      %v5719 = vmax.bf16 %v4730, %v5429
      %v5720 = vmax.bf16 %v4731, %v5439
      %v5721 = vmax.bf16 %v4732, %v5449
      %v5722 = vld [vmem:[%s111 + $0x20] sm:$0x8]
      %vm5725 = vcmask 1040384
      %vm5726 = vcmask 1044484
      %vm5727 = vmor %vm5725, %vm5726
      %v5728 = vrot.slane %v5722, 7
      %v5729 = vrot.slane %v5728, 4
      %v5730 = vrot.slane %v126, 7
      %v5731 = vsel %vm5727, %v5729, %v5730
      %v5732 = vrot.slane %v5730, 4
      %v5733 = vrot.slane %v127, 7
      %v5734 = vsel %vm5727, %v5732, %v5733
      %v5735 = vrot.slane %v5733, 4
      %v5736 = vrot.slane %v128, 7
      %v5737 = vsel %vm5727, %v5735, %v5736
      %v5738 = vrot.slane %v5736, 4
      %v5739 = vrot.slane %v129, 7
      %v5740 = vsel %vm5727, %v5738, %v5739
      %v5741 = vrot.slane %v5739, 4
      %v5742 = vrot.slane %v130, 7
      %v5743 = vsel %vm5727, %v5741, %v5742
      %v5744 = vrot.slane %v5742, 4
      %v5745 = vrot.slane %v131, 7
      %v5746 = vsel %vm5727, %v5744, %v5745
      %v5747 = vrot.slane %v5745, 4
      %v5748 = vrot.slane %v132, 7
      %v5749 = vsel %vm5727, %v5747, %v5748
      %v5750 = vrot.slane %v5748, 4
      %v5751 = vrot.slane %v133, 7
      %v5752 = vsel %vm5727, %v5750, %v5751
      %v5753 = vrot.slane %v5751, 4
      %v5754 = vrot.slane %v134, 7
      %v5755 = vsel %vm5727, %v5753, %v5754
      %v5756 = vrot.slane %v5754, 4
      %v5757 = vrot.slane %v135, 7
      %v5758 = vsel %vm5727, %v5756, %v5757
      %v5759 = vrot.slane %v5757, 4
      %v5760 = vrot.slane %v136, 7
      %v5761 = vsel %vm5727, %v5759, %v5760
      %v5762 = vrot.slane %v5760, 4
      %v5763 = vrot.slane %v137, 7
      %v5764 = vsel %vm5727, %v5762, %v5763
      %v5765 = vrot.slane %v5763, 4
      %v5766 = vrot.slane %v138, 7
      %v5767 = vsel %vm5727, %v5765, %v5766
      %v5768 = vrot.slane %v5766, 4
      %v5769 = vrot.slane %v139, 7
      %v5770 = vsel %vm5727, %v5768, %v5769
      %v5771 = vrot.slane %v5769, 4
      %v5772 = vrot.slane %v140, 7
      %v5773 = vsel %vm5727, %v5771, %v5772
      %v5774 = vrot.slane %v5772, 4
      %v5775 = vrot.slane %v141, 7
      %v5776 = vsel %vm5727, %v5774, %v5775
      %v5777 = vrot.slane %v5775, 4
      %v5778 = vrot.slane %v142, 7
      %v5779 = vsel %vm5727, %v5777, %v5778
      %v5780 = vrot.slane %v5778, 4
      %v5781 = vrot.slane %v143, 7
      %v5782 = vsel %vm5727, %v5780, %v5781
      %v5783 = vrot.slane %v5781, 4
      %v5784 = vrot.slane %v144, 7
      %v5785 = vsel %vm5727, %v5783, %v5784
      %v5786 = vrot.slane %v5784, 4
      %v5787 = vrot.slane %v145, 7
      %v5788 = vsel %vm5727, %v5786, %v5787
      %v5789 = vrot.slane %v5787, 4
      %v5790 = vrot.slane %v146, 7
      %v5791 = vsel %vm5727, %v5789, %v5790
      %v5792 = vrot.slane %v5790, 4
      %v5793 = vrot.slane %v147, 7
      %v5794 = vsel %vm5727, %v5792, %v5793
      %v5795 = vrot.slane %v5793, 4
      %v5796 = vrot.slane %v148, 7
      %v5797 = vsel %vm5727, %v5795, %v5796
      %v5798 = vrot.slane %v5796, 4
      %v5799 = vrot.slane %v149, 7
      %v5800 = vsel %vm5727, %v5798, %v5799
      %v5801 = vrot.slane %v5799, 4
      %v5802 = vrot.slane %v150, 7
      %v5803 = vsel %vm5727, %v5801, %v5802
      %v5804 = vrot.slane %v5802, 4
      %v5805 = vrot.slane %v151, 7
      %v5806 = vsel %vm5727, %v5804, %v5805
      %v5807 = vrot.slane %v5805, 4
      %v5808 = vrot.slane %v152, 7
      %v5809 = vsel %vm5727, %v5807, %v5808
      %v5810 = vrot.slane %v5808, 4
      %v5811 = vrot.slane %v153, 7
      %v5812 = vsel %vm5727, %v5810, %v5811
      %v5813 = vrot.slane %v5811, 4
      %v5814 = vrot.slane %v154, 7
      %v5815 = vsel %vm5727, %v5813, %v5814
      %v5816 = vrot.slane %v5814, 4
      %v5817 = vrot.slane %v155, 7
      %v5818 = vsel %vm5727, %v5816, %v5817
      %v5819 = vrot.slane %v5817, 4
      %v5820 = vrot.slane %v156, 7
      %v5821 = vsel %vm5727, %v5819, %v5820
      %v5822 = vrot.slane %v5820, 4
      %v5823 = vrot.slane %v157, 7
      %v5824 = vsel %vm5727, %v5822, %v5823
      %v5825 = vrot.slane %v5823, 4
      %v5826 = vrot.slane %v158, 7
      %v5827 = vsel %vm5727, %v5825, %v5826
      %v5828 = vrot.slane %v5826, 4
      %v5829 = vrot.slane %v159, 7
      %v5830 = vsel %vm5727, %v5828, %v5829
      %v5831 = vrot.slane %v5829, 4
      %v5832 = vrot.slane %v160, 7
      %v5833 = vsel %vm5727, %v5831, %v5832
      %v5834 = vrot.slane %v5832, 4
      %v5835 = vrot.slane %v161, 7
      %v5836 = vsel %vm5727, %v5834, %v5835
      %v5837 = vrot.slane %v5835, 4
      %v5838 = vrot.slane %v162, 7
      %v5839 = vsel %vm5727, %v5837, %v5838
      %v5840 = vrot.slane %v5838, 4
      %v5841 = vrot.slane %v163, 7
      %v5842 = vsel %vm5727, %v5840, %v5841
      %v5843 = vrot.slane %v5841, 4
      %v5844 = vrot.slane %v164, 7
      %v5845 = vsel %vm5727, %v5843, %v5844
      %v5846 = vrot.slane %v5844, 4
      %v5847 = vrot.slane %v165, 7
      %v5848 = vsel %vm5727, %v5846, %v5847
      %v5849 = vrot.slane %v5847, 4
      %v5850 = vrot.slane %v166, 7
      %v5851 = vsel %vm5727, %v5849, %v5850
      %v5852 = vrot.slane %v5850, 4
      %v5853 = vrot.slane %v167, 7
      %v5854 = vsel %vm5727, %v5852, %v5853
      %v5855 = vrot.slane %v5853, 4
      %v5856 = vrot.slane %v168, 7
      %v5857 = vsel %vm5727, %v5855, %v5856
      %v5858 = vrot.slane %v5856, 4
      %v5859 = vrot.slane %v169, 7
      %v5860 = vsel %vm5727, %v5858, %v5859
      %v5861 = vrot.slane %v5859, 4
      %v5862 = vrot.slane %v170, 7
      %v5863 = vsel %vm5727, %v5861, %v5862
      %v5864 = vrot.slane %v5862, 4
      %v5865 = vrot.slane %v171, 7
      %v5866 = vsel %vm5727, %v5864, %v5865
      %v5867 = vrot.slane %v5865, 4
      %v5868 = vrot.slane %v172, 7
      %v5869 = vsel %vm5727, %v5867, %v5868
      %v5870 = vrot.slane %v5868, 4
      %v5871 = vrot.slane %v173, 7
      %v5872 = vsel %vm5727, %v5870, %v5871
      %v5873 = vrot.slane %v5871, 4
      %v5874 = vrot.slane %v174, 7
      %v5875 = vsel %vm5727, %v5873, %v5874
      %v5876 = vrot.slane %v5874, 4
      %v5877 = vrot.slane %v175, 7
      %v5878 = vsel %vm5727, %v5876, %v5877
      %v5879 = vrot.slane %v5877, 4
      %v5880 = vrot.slane %v176, 7
      %v5881 = vsel %vm5727, %v5879, %v5880
      %v5882 = vrot.slane %v5880, 4
      %v5883 = vrot.slane %v177, 7
      %v5884 = vsel %vm5727, %v5882, %v5883
      %v5885 = vrot.slane %v5883, 4
      %v5886 = vrot.slane %v178, 7
      %v5887 = vsel %vm5727, %v5885, %v5886
      %v5888 = vrot.slane %v5886, 4
      %v5889 = vrot.slane %v179, 7
      %v5890 = vsel %vm5727, %v5888, %v5889
      %v5891 = vrot.slane %v5889, 4
      %v5892 = vrot.slane %v180, 7
      %v5893 = vsel %vm5727, %v5891, %v5892
      %v5894 = vrot.slane %v5892, 4
      %v5895 = vrot.slane %v181, 7
      %v5896 = vsel %vm5727, %v5894, %v5895
      %v5897 = vrot.slane %v5895, 4
      %v5898 = vrot.slane %v182, 7
      %v5899 = vsel %vm5727, %v5897, %v5898
      %v5900 = vrot.slane %v5898, 4
      %v5901 = vrot.slane %v183, 7
      %v5902 = vsel %vm5727, %v5900, %v5901
      %v5903 = vrot.slane %v5901, 4
      %v5904 = vrot.slane %v184, 7
      %v5905 = vsel %vm5727, %v5903, %v5904
      %v5906 = vrot.slane %v5904, 4
      %v5907 = vrot.slane %v185, 7
      %v5908 = vsel %vm5727, %v5906, %v5907
      %v5909 = vrot.slane %v5907, 4
      %v5910 = vrot.slane %v186, 7
      %v5911 = vsel %vm5727, %v5909, %v5910
      %v5912 = vrot.slane %v5910, 4
      %v5913 = vrot.slane %v187, 7
      %v5914 = vsel %vm5727, %v5912, %v5913
      %v5915 = vrot.slane %v5913, 4
      %v5916 = vrot.slane %v188, 7
      %v5917 = vsel %vm5727, %v5915, %v5916
      %v5918 = vrot.slane %v5916, 4
      %v5919 = vrot.slane %v189, 7
      %v5920 = vsel %vm5727, %v5918, %v5919
      %v5921 = vrot.slane %v5919, 4
      %v5922 = vrot.slane %v190, 7
      %v5923 = vsel %vm5727, %v5921, %v5922
      %v5924 = vrot.slane %v5922, 4
      %v5925 = vrot.slane %v191, 7
      %v5926 = vsel %vm5727, %v5924, %v5925
      %v5927 = vrot.slane %v5925, 4
      %v5928 = vrot.slane %v192, 7
      %v5929 = vsel %vm5727, %v5927, %v5928
      %v5930 = vrot.slane %v5928, 4
      %v5931 = vrot.slane %v193, 7
      %v5932 = vsel %vm5727, %v5930, %v5931
      %v5933 = vrot.slane %v5931, 4
      %v5934 = vrot.slane %v194, 7
      %v5935 = vsel %vm5727, %v5933, %v5934
      %v5936 = vrot.slane %v5934, 4
      %v5937 = vrot.slane %v195, 7
      %v5938 = vsel %vm5727, %v5936, %v5937
      %v5939 = vrot.slane %v5937, 4
      %v5940 = vrot.slane %v196, 7
      %v5941 = vsel %vm5727, %v5939, %v5940
      %v5942 = vrot.slane %v5940, 4
      %v5943 = vrot.slane %v197, 7
      %v5944 = vsel %vm5727, %v5942, %v5943
      %v5945 = vrot.slane %v5943, 4
      %v5946 = vrot.slane %v198, 7
      %v5947 = vsel %vm5727, %v5945, %v5946
      %v5948 = vrot.slane %v5946, 4
      %v5949 = vrot.slane %v199, 7
      %v5950 = vsel %vm5727, %v5948, %v5949
      %v5951 = vrot.slane %v5949, 4
      %v5952 = vrot.slane %v200, 7
      %v5953 = vsel %vm5727, %v5951, %v5952
      %v5954 = vrot.slane %v5952, 4
      %v5955 = vrot.slane %v201, 7
      %v5956 = vsel %vm5727, %v5954, %v5955
      %v5957 = vrot.slane %v5955, 4
      %v5958 = vrot.slane %v202, 7
      %v5959 = vsel %vm5727, %v5957, %v5958
      %v5960 = vrot.slane %v5958, 4
      %v5961 = vrot.slane %v203, 7
      %v5962 = vsel %vm5727, %v5960, %v5961
      %v5963 = vrot.slane %v5961, 4
      %v5964 = vrot.slane %v204, 7
      %v5965 = vsel %vm5727, %v5963, %v5964
      %v5966 = vrot.slane %v5964, 4
      %v5967 = vrot.slane %v205, 7
      %v5968 = vsel %vm5727, %v5966, %v5967
      %v5969 = vrot.slane %v5967, 4
      %v5970 = vrot.slane %v206, 7
      %v5971 = vsel %vm5727, %v5969, %v5970
      %v5972 = vrot.slane %v5970, 4
      %v5973 = vrot.slane %v207, 7
      %v5974 = vsel %vm5727, %v5972, %v5973
      %v5975 = vrot.slane %v5973, 4
      %v5976 = vrot.slane %v208, 7
      %v5977 = vsel %vm5727, %v5975, %v5976
      %v5978 = vrot.slane %v5976, 4
      %v5979 = vrot.slane %v209, 7
      %v5980 = vsel %vm5727, %v5978, %v5979
      %v5981 = vrot.slane %v5979, 4
      %v5982 = vrot.slane %v210, 7
      %v5983 = vsel %vm5727, %v5981, %v5982
      %v5984 = vrot.slane %v5982, 4
      %v5985 = vrot.slane %v211, 7
      %v5986 = vsel %vm5727, %v5984, %v5985
      %v5987 = vrot.slane %v5985, 4
      %v5988 = vrot.slane %v212, 7
      %v5989 = vsel %vm5727, %v5987, %v5988
      %v5990 = vrot.slane %v5988, 4
      %v5991 = vrot.slane %v213, 7
      %v5992 = vsel %vm5727, %v5990, %v5991
      %v5993 = vrot.slane %v5991, 4
      %v5994 = vrot.slane %v214, 7
      %v5995 = vsel %vm5727, %v5993, %v5994
      %v5996 = vrot.slane %v5994, 4
      %v5997 = vrot.slane %v215, 7
      %v5998 = vsel %vm5727, %v5996, %v5997
      %v5999 = vrot.slane %v5997, 4
      %v6000 = vrot.slane %v216, 7
      %v6001 = vsel %vm5727, %v5999, %v6000
      %v6002 = vrot.slane %v6000, 4
      %v6003 = vrot.slane %v217, 7
      %v6004 = vsel %vm5727, %v6002, %v6003
      %v6005 = vrot.slane %v6003, 4
      %v6006 = vrot.slane %v218, 7
      %v6007 = vsel %vm5727, %v6005, %v6006
      %v6008 = vrot.slane %v6006, 4
      %v6009 = vrot.slane %v219, 7
      %v6010 = vsel %vm5727, %v6008, %v6009
      %v6011 = vrot.slane %v6009, 4
      %v6012 = vrot.slane %v220, 7
      %v6013 = vsel %vm5727, %v6011, %v6012
      %v6014 = vrot.slane %v6012, 4
      %v6015 = vrot.slane %v221, 7
      %v6016 = vsel %vm5727, %v6014, %v6015
      %v6017 = vrot.slane %v6015, 4
      %v6018 = vrot.slane %v222, 7
      %v6019 = vsel %vm5727, %v6017, %v6018
      %v6020 = vrot.slane %v6018, 4
      %v6021 = vrot.slane %v223, 7
      %v6022 = vsel %vm5727, %v6020, %v6021
      %v6023 = vrot.slane %v6021, 4
      %v6024 = vrot.slane %v224, 7
      %v6025 = vsel %vm5727, %v6023, %v6024
      %v6026 = vrot.slane %v6024, 4
      %v6027 = vrot.slane %v225, 7
      %v6028 = vsel %vm5727, %v6026, %v6027
      %v6029 = vrot.slane %v6027, 4
      %v6030 = vrot.slane %v226, 7
      %v6031 = vsel %vm5727, %v6029, %v6030
      %v6032 = vrot.slane %v6030, 4
      %v6033 = vrot.slane %v227, 7
      %v6034 = vsel %vm5727, %v6032, %v6033
      %v6035 = vrot.slane %v6033, 4
      %v6036 = vrot.slane %v228, 7
      %v6037 = vsel %vm5727, %v6035, %v6036
      %v6038 = vrot.slane %v6036, 4
      %v6039 = vrot.slane %v229, 7
      %v6040 = vsel %vm5727, %v6038, %v6039
      %v6041 = vrot.slane %v6039, 4
      %v6042 = vrot.slane %v230, 7
      %v6043 = vsel %vm5727, %v6041, %v6042
      %v6044 = vrot.slane %v6042, 4
      %v6045 = vrot.slane %v231, 7
      %v6046 = vsel %vm5727, %v6044, %v6045
      %v6047 = vrot.slane %v6045, 4
      %v6048 = vrot.slane %v232, 7
      %v6049 = vsel %vm5727, %v6047, %v6048
      %v6050 = vrot.slane %v6048, 4
      %v6051 = vrot.slane %v233, 7
      %v6052 = vsel %vm5727, %v6050, %v6051
      %v6053 = vrot.slane %v6051, 4
      %v6054 = vrot.slane %v234, 7
      %v6055 = vsel %vm5727, %v6053, %v6054
      %v6056 = vrot.slane %v6054, 4
      %v6057 = vrot.slane %v235, 7
      %v6058 = vsel %vm5727, %v6056, %v6057
      %v6059 = vrot.slane %v6057, 4
      %v6060 = vrot.slane %v236, 7
      %v6061 = vsel %vm5727, %v6059, %v6060
      %v6062 = vrot.slane %v6060, 4
      %v6063 = vrot.slane %v237, 7
      %v6064 = vsel %vm5727, %v6062, %v6063
      %v6065 = vrot.slane %v6063, 4
      %v6066 = vrot.slane %v238, 7
      %v6067 = vsel %vm5727, %v6065, %v6066
      %v6068 = vrot.slane %v6066, 4
      %v6069 = vrot.slane %v239, 7
      %v6070 = vsel %vm5727, %v6068, %v6069
      %v6071 = vrot.slane %v6069, 4
      %v6072 = vrot.slane %v240, 7
      %v6073 = vsel %vm5727, %v6071, %v6072
      %v6074 = vrot.slane %v6072, 4
      %v6075 = vrot.slane %v241, 7
      %v6076 = vsel %vm5727, %v6074, %v6075
      %v6077 = vrot.slane %v6075, 4
      %v6078 = vrot.slane %v242, 7
      %v6079 = vsel %vm5727, %v6077, %v6078
      %v6080 = vrot.slane %v6078, 4
      %v6081 = vrot.slane %v243, 7
      %v6082 = vsel %vm5727, %v6080, %v6081
      %v6083 = vrot.slane %v6081, 4
      %v6084 = vrot.slane %v244, 7
      %v6085 = vsel %vm5727, %v6083, %v6084
      %v6086 = vrot.slane %v6084, 4
      %v6087 = vrot.slane %v245, 7
      %v6088 = vsel %vm5727, %v6086, %v6087
      %v6089 = vrot.slane %v6087, 4
      %v6090 = vrot.slane %v246, 7
      %v6091 = vsel %vm5727, %v6089, %v6090
      %v6092 = vrot.slane %v6090, 4
      %v6093 = vrot.slane %v247, 7
      %v6094 = vsel %vm5727, %v6092, %v6093
      %v6095 = vrot.slane %v6093, 4
      %v6096 = vrot.slane %v248, 7
      %v6097 = vsel %vm5727, %v6095, %v6096
      %v6098 = vrot.slane %v6096, 4
      %v6099 = vrot.slane %v249, 7
      %v6100 = vsel %vm5727, %v6098, %v6099
      %v6101 = vrot.slane %v6099, 4
      %v6102 = vrot.slane %v250, 7
      %v6103 = vsel %vm5727, %v6101, %v6102
      %v6104 = vrot.slane %v6102, 4
      %v6105 = vrot.slane %v251, 7
      %v6106 = vsel %vm5727, %v6104, %v6105
      %v6107 = vrot.slane %v6105, 4
      %v6108 = vrot.slane %v252, 7
      %v6109 = vsel %vm5727, %v6107, %v6108
      %v6110 = vrot.slane %v6108, 4
      %v6111 = vrot.slane %v2716, 7
      %v6112 = vsel %vm5727, %v6110, %v6111
      %v6113 = vrot.slane %v6111, 4
      %v6114 = vrot.slane %v2717, 7
      %v6115 = vsel %vm5727, %v6113, %v6114
      %v6116 = vrot.slane %v6114, 4
      %v6117 = vrot.slane %v2718, 7
      %v6118 = vsel %vm5727, %v6116, %v6117
      %v6119 = vrot.slane %v6117, 4
      %v6120 = vrot.slane %v2719, 7
      %v6121 = vsel %vm5727, %v6119, %v6120
      %v6122 = vrot.slane %v6120, 4
      %v6123 = vrot.slane %v4563, 7
      %v6124 = vsel %vm5727, %v6122, %v6123
      %v6125 = vrot.slane %v6123, 4
      %v6126 = vrot.slane %v4564, 7
      %v6127 = vsel %vm5727, %v6125, %v6126
      %v6128 = vrot.slane %v6126, 4
      %v6129 = vrot.slane %v4565, 7
      %v6130 = vsel %vm5727, %v6128, %v6129
      %v6131 = vrot.slane %v6129, 4
      %v6132 = vrot.slane %v4566, 7
      %v6133 = vsel %vm5727, %v6131, %v6132
      %v6134 = vrot.slane %v6132, 4
      %v6135 = vrot.slane %v4733, 7
      %v6136 = vsel %vm5727, %v6134, %v6135
      %v6273 = vmax.bf16 %v5586, %v5731
      %v6274 = vmax.bf16 %v5587, %v5734
      %v6275 = vmax.bf16 %v5588, %v5737
      %v6276 = vmax.bf16 %v5589, %v5740
      %v6277 = vmax.bf16 %v5590, %v5743
      %v6278 = vmax.bf16 %v5591, %v5746
      %v6279 = vmax.bf16 %v5592, %v5749
      %v6280 = vmax.bf16 %v5593, %v5752
      %v6281 = vmax.bf16 %v5594, %v5755
      %v6282 = vmax.bf16 %v5595, %v5758
      %v6283 = vmax.bf16 %v5596, %v5761
      %v6284 = vmax.bf16 %v5597, %v5764
      %v6285 = vmax.bf16 %v5598, %v5767
      %v6286 = vmax.bf16 %v5599, %v5770
      %v6287 = vmax.bf16 %v5600, %v5773
      %v6288 = vmax.bf16 %v5601, %v5776
      %v6289 = vmax.bf16 %v5602, %v5779
      %v6290 = vmax.bf16 %v5603, %v5782
      %v6291 = vmax.bf16 %v5604, %v5785
      %v6292 = vmax.bf16 %v5605, %v5788
      %v6293 = vmax.bf16 %v5606, %v5791
      %v6294 = vmax.bf16 %v5607, %v5794
      %v6295 = vmax.bf16 %v5608, %v5797
      %v6296 = vmax.bf16 %v5609, %v5800
      %v6297 = vmax.bf16 %v5610, %v5803
      %v6298 = vmax.bf16 %v5611, %v5806
      %v6299 = vmax.bf16 %v5612, %v5809
      %v6300 = vmax.bf16 %v5613, %v5812
      %v6301 = vmax.bf16 %v5614, %v5815
      %v6302 = vmax.bf16 %v5615, %v5818
      %v6303 = vmax.bf16 %v5616, %v5821
      %v6304 = vmax.bf16 %v5617, %v5824
      %v6305 = vmax.bf16 %v5618, %v5827
      %v6306 = vmax.bf16 %v5619, %v5830
      %v6307 = vmax.bf16 %v5620, %v5833
      %v6308 = vmax.bf16 %v5621, %v5836
      %v6309 = vmax.bf16 %v5622, %v5839
      %v6310 = vmax.bf16 %v5623, %v5842
      %v6311 = vmax.bf16 %v5624, %v5845
      %v6312 = vmax.bf16 %v5625, %v5848
      %v6313 = vmax.bf16 %v5626, %v5851
      %v6314 = vmax.bf16 %v5627, %v5854
      %v6315 = vmax.bf16 %v5628, %v5857
      %v6316 = vmax.bf16 %v5629, %v5860
      %v6317 = vmax.bf16 %v5630, %v5863
      %v6318 = vmax.bf16 %v5631, %v5866
      %v6319 = vmax.bf16 %v5632, %v5869
      %v6320 = vmax.bf16 %v5633, %v5872
      %v6321 = vmax.bf16 %v5634, %v5875
      %v6322 = vmax.bf16 %v5635, %v5878
      %v6323 = vmax.bf16 %v5636, %v5881
      %v6324 = vmax.bf16 %v5637, %v5884
      %v6325 = vmax.bf16 %v5638, %v5887
      %v6326 = vmax.bf16 %v5639, %v5890
      %v6327 = vmax.bf16 %v5640, %v5893
      %v6328 = vmax.bf16 %v5641, %v5896
      %v6329 = vmax.bf16 %v5642, %v5899
      %v6330 = vmax.bf16 %v5643, %v5902
      %v6331 = vmax.bf16 %v5644, %v5905
      %v6332 = vmax.bf16 %v5645, %v5908
      %v6333 = vmax.bf16 %v5646, %v5911
      %v6334 = vmax.bf16 %v5647, %v5914
      %v6335 = vmax.bf16 %v5648, %v5917
      %v6336 = vmax.bf16 %v5649, %v5920
      %v6337 = vmax.bf16 %v5650, %v5923
      %v6338 = vmax.bf16 %v5651, %v5926
      %v6339 = vmax.bf16 %v5652, %v5929
      %v6340 = vmax.bf16 %v5653, %v5932
      %v6341 = vmax.bf16 %v5654, %v5935
      %v6342 = vmax.bf16 %v5655, %v5938
      %v6343 = vmax.bf16 %v5656, %v5941
      %v6344 = vmax.bf16 %v5657, %v5944
      %v6345 = vmax.bf16 %v5658, %v5947
      %v6346 = vmax.bf16 %v5659, %v5950
      %v6347 = vmax.bf16 %v5660, %v5953
      %v6348 = vmax.bf16 %v5661, %v5956
      %v6349 = vmax.bf16 %v5662, %v5959
      %v6350 = vmax.bf16 %v5663, %v5962
      %v6351 = vmax.bf16 %v5664, %v5965
      %v6352 = vmax.bf16 %v5665, %v5968
      %v6353 = vmax.bf16 %v5666, %v5971
      %v6354 = vmax.bf16 %v5667, %v5974
      %v6355 = vmax.bf16 %v5668, %v5977
      %v6356 = vmax.bf16 %v5669, %v5980
      %v6357 = vmax.bf16 %v5670, %v5983
      %v6358 = vmax.bf16 %v5671, %v5986
      %v6359 = vmax.bf16 %v5672, %v5989
      %v6360 = vmax.bf16 %v5673, %v5992
      %v6361 = vmax.bf16 %v5674, %v5995
      %v6362 = vmax.bf16 %v5675, %v5998
      %v6363 = vmax.bf16 %v5676, %v6001
      %v6364 = vmax.bf16 %v5677, %v6004
      %v6365 = vmax.bf16 %v5678, %v6007
      %v6366 = vmax.bf16 %v5679, %v6010
      %v6367 = vmax.bf16 %v5680, %v6013
      %v6368 = vmax.bf16 %v5681, %v6016
      %v6369 = vmax.bf16 %v5682, %v6019
      %v6370 = vmax.bf16 %v5683, %v6022
      %v6371 = vmax.bf16 %v5684, %v6025
      %v6372 = vmax.bf16 %v5685, %v6028
      %v6373 = vmax.bf16 %v5686, %v6031
      %v6374 = vmax.bf16 %v5687, %v6034
      %v6375 = vmax.bf16 %v5688, %v6037
      %v6376 = vmax.bf16 %v5689, %v6040
      %v6377 = vmax.bf16 %v5690, %v6043
      %v6378 = vmax.bf16 %v5691, %v6046
      %v6379 = vmax.bf16 %v5692, %v6049
      %v6380 = vmax.bf16 %v5693, %v6052
      %v6381 = vmax.bf16 %v5694, %v6055
      %v6382 = vmax.bf16 %v5695, %v6058
      %v6383 = vmax.bf16 %v5696, %v6061
      %v6384 = vmax.bf16 %v5697, %v6064
      %v6385 = vmax.bf16 %v5698, %v6067
      %v6386 = vmax.bf16 %v5699, %v6070
      %v6387 = vmax.bf16 %v5700, %v6073
      %v6388 = vmax.bf16 %v5701, %v6076
      %v6389 = vmax.bf16 %v5702, %v6079
      %v6390 = vmax.bf16 %v5703, %v6082
      %v6391 = vmax.bf16 %v5704, %v6085
      %v6392 = vmax.bf16 %v5705, %v6088
      %v6393 = vmax.bf16 %v5706, %v6091
      %v6394 = vmax.bf16 %v5707, %v6094
      %v6395 = vmax.bf16 %v5708, %v6097
      %v6396 = vmax.bf16 %v5709, %v6100
      %v6397 = vmax.bf16 %v5710, %v6103
      %v6398 = vmax.bf16 %v5711, %v6106
      %v6399 = vmax.bf16 %v5712, %v6109
      %v6400 = vmax.bf16 %v5713, %v6112
      %v6401 = vmax.bf16 %v5714, %v6115
      %v6402 = vmax.bf16 %v5715, %v6118
      %v6403 = vmax.bf16 %v5716, %v6121
      %v6404 = vmax.bf16 %v5717, %v6124
      %v6405 = vmax.bf16 %v5718, %v6127
      %v6406 = vmax.bf16 %v5719, %v6130
      %v6407 = vmax.bf16 %v5720, %v6133
      %v6408 = vmax.bf16 %v5721, %v6136
      %6409 = vst [vmem:[%s116] sm:$0xf] %v6273
      %6410 = vst [vmem:[%s116 + $0x4] sm:$0xf] %v6274
      %6411 = vst [vmem:[%s116 + $0x8] sm:$0xf] %v6275
      %6412 = vst [vmem:[%s116 + $0xc] sm:$0xf] %v6276
      %6413 = vst [vmem:[%s116 + $0x10] sm:$0xf] %v6277
      %6414 = vst [vmem:[%s116 + $0x14] sm:$0xf] %v6278
      %6415 = vst [vmem:[%s116 + $0x18] sm:$0xf] %v6279
      %6416 = vst [vmem:[%s116 + $0x1c] sm:$0xf] %v6280
      %6417 = vst [vmem:[%s116 + $0x20] sm:$0xf] %v6281
      %6418 = vst [vmem:[%s116 + $0x24] sm:$0xf] %v6282
      %6419 = vst [vmem:[%s116 + $0x28] sm:$0xf] %v6283
      %6420 = vst [vmem:[%s116 + $0x2c] sm:$0xf] %v6284
      %6421 = vst [vmem:[%s116 + $0x30] sm:$0xf] %v6285
      %6422 = vst [vmem:[%s116 + $0x34] sm:$0xf] %v6286
      %6423 = vst [vmem:[%s116 + $0x38] sm:$0xf] %v6287
      %6424 = vst [vmem:[%s116 + $0x3c] sm:$0xf] %v6288
      %6425 = vst [vmem:[%s116 + $0x40] sm:$0xf] %v6289
      %6426 = vst [vmem:[%s116 + $0x44] sm:$0xf] %v6290
      %6427 = vst [vmem:[%s116 + $0x48] sm:$0xf] %v6291
      %6428 = vst [vmem:[%s116 + $0x4c] sm:$0xf] %v6292
      %6429 = vst [vmem:[%s116 + $0x50] sm:$0xf] %v6293
      %6430 = vst [vmem:[%s116 + $0x54] sm:$0xf] %v6294
      %6431 = vst [vmem:[%s116 + $0x58] sm:$0xf] %v6295
      %6432 = vst [vmem:[%s116 + $0x5c] sm:$0xf] %v6296
      %6433 = vst [vmem:[%s116 + $0x60] sm:$0xf] %v6297
      %6434 = vst [vmem:[%s116 + $0x64] sm:$0xf] %v6298
      %6435 = vst [vmem:[%s116 + $0x68] sm:$0xf] %v6299
      %6436 = vst [vmem:[%s116 + $0x6c] sm:$0xf] %v6300
      %6437 = vst [vmem:[%s116 + $0x70] sm:$0xf] %v6301
      %6438 = vst [vmem:[%s116 + $0x74] sm:$0xf] %v6302
      %6439 = vst [vmem:[%s116 + $0x78] sm:$0xf] %v6303
      %6440 = vst [vmem:[%s116 + $0x7c] sm:$0xf] %v6304
      %6441 = vst [vmem:[%s116 + $0x80] sm:$0xf] %v6305
      %6442 = vst [vmem:[%s116 + $0x84] sm:$0xf] %v6306
      %6443 = vst [vmem:[%s116 + $0x88] sm:$0xf] %v6307
      %6444 = vst [vmem:[%s116 + $0x8c] sm:$0xf] %v6308
      %6445 = vst [vmem:[%s116 + $0x90] sm:$0xf] %v6309
      %6446 = vst [vmem:[%s116 + $0x94] sm:$0xf] %v6310
      %6447 = vst [vmem:[%s116 + $0x98] sm:$0xf] %v6311
      %6448 = vst [vmem:[%s116 + $0x9c] sm:$0xf] %v6312
      %6449 = vst [vmem:[%s116 + $0xa0] sm:$0xf] %v6313
      %6450 = vst [vmem:[%s116 + $0xa4] sm:$0xf] %v6314
      %6451 = vst [vmem:[%s116 + $0xa8] sm:$0xf] %v6315
      %6452 = vst [vmem:[%s116 + $0xac] sm:$0xf] %v6316
      %6453 = vst [vmem:[%s116 + $0xb0] sm:$0xf] %v6317
      %6454 = vst [vmem:[%s116 + $0xb4] sm:$0xf] %v6318
      %6455 = vst [vmem:[%s116 + $0xb8] sm:$0xf] %v6319
      %6456 = vst [vmem:[%s116 + $0xbc] sm:$0xf] %v6320
      %6457 = vst [vmem:[%s116 + $0xc0] sm:$0xf] %v6321
      %6458 = vst [vmem:[%s116 + $0xc4] sm:$0xf] %v6322
      %6459 = vst [vmem:[%s116 + $0xc8] sm:$0xf] %v6323
      %6460 = vst [vmem:[%s116 + $0xcc] sm:$0xf] %v6324
      %6461 = vst [vmem:[%s116 + $0xd0] sm:$0xf] %v6325
      %6462 = vst [vmem:[%s116 + $0xd4] sm:$0xf] %v6326
      %6463 = vst [vmem:[%s116 + $0xd8] sm:$0xf] %v6327
      %6464 = vst [vmem:[%s116 + $0xdc] sm:$0xf] %v6328
      %6465 = vst [vmem:[%s116 + $0xe0] sm:$0xf] %v6329
      %6466 = vst [vmem:[%s116 + $0xe4] sm:$0xf] %v6330
      %6467 = vst [vmem:[%s116 + $0xe8] sm:$0xf] %v6331
      %6468 = vst [vmem:[%s116 + $0xec] sm:$0xf] %v6332
      %6469 = vst [vmem:[%s116 + $0xf0] sm:$0xf] %v6333
      %6470 = vst [vmem:[%s116 + $0xf4] sm:$0xf] %v6334
      %6471 = vst [vmem:[%s116 + $0xf8] sm:$0xf] %v6335
      %6472 = vst [vmem:[%s116 + $0xfc] sm:$0xf] %v6336
      %6473 = vst [vmem:[%s116 + $0x100] sm:$0xf] %v6337
      %6474 = vst [vmem:[%s116 + $0x104] sm:$0xf] %v6338
      %6475 = vst [vmem:[%s116 + $0x108] sm:$0xf] %v6339
      %6476 = vst [vmem:[%s116 + $0x10c] sm:$0xf] %v6340
      %6477 = vst [vmem:[%s116 + $0x110] sm:$0xf] %v6341
      %6478 = vst [vmem:[%s116 + $0x114] sm:$0xf] %v6342
      %6479 = vst [vmem:[%s116 + $0x118] sm:$0xf] %v6343
      %6480 = vst [vmem:[%s116 + $0x11c] sm:$0xf] %v6344
      %6481 = vst [vmem:[%s116 + $0x120] sm:$0xf] %v6345
      %6482 = vst [vmem:[%s116 + $0x124] sm:$0xf] %v6346
      %6483 = vst [vmem:[%s116 + $0x128] sm:$0xf] %v6347
      %6484 = vst [vmem:[%s116 + $0x12c] sm:$0xf] %v6348
      %6485 = vst [vmem:[%s116 + $0x130] sm:$0xf] %v6349
      %6486 = vst [vmem:[%s116 + $0x134] sm:$0xf] %v6350
      %6487 = vst [vmem:[%s116 + $0x138] sm:$0xf] %v6351
      %6488 = vst [vmem:[%s116 + $0x13c] sm:$0xf] %v6352
      %6489 = vst [vmem:[%s116 + $0x140] sm:$0xf] %v6353
      %6490 = vst [vmem:[%s116 + $0x144] sm:$0xf] %v6354
      %6491 = vst [vmem:[%s116 + $0x148] sm:$0xf] %v6355
      %6492 = vst [vmem:[%s116 + $0x14c] sm:$0xf] %v6356
      %6493 = vst [vmem:[%s116 + $0x150] sm:$0xf] %v6357
      %6494 = vst [vmem:[%s116 + $0x154] sm:$0xf] %v6358
      %6495 = vst [vmem:[%s116 + $0x158] sm:$0xf] %v6359
      %6496 = vst [vmem:[%s116 + $0x15c] sm:$0xf] %v6360
      %6497 = vst [vmem:[%s116 + $0x160] sm:$0xf] %v6361
      %6498 = vst [vmem:[%s116 + $0x164] sm:$0xf] %v6362
      %6499 = vst [vmem:[%s116 + $0x168] sm:$0xf] %v6363
      %6500 = vst [vmem:[%s116 + $0x16c] sm:$0xf] %v6364
      %6501 = vst [vmem:[%s116 + $0x170] sm:$0xf] %v6365
      %6502 = vst [vmem:[%s116 + $0x174] sm:$0xf] %v6366
      %6503 = vst [vmem:[%s116 + $0x178] sm:$0xf] %v6367
      %6504 = vst [vmem:[%s116 + $0x17c] sm:$0xf] %v6368
      %6505 = vst [vmem:[%s116 + $0x180] sm:$0xf] %v6369
      %6506 = vst [vmem:[%s116 + $0x184] sm:$0xf] %v6370
      %6507 = vst [vmem:[%s116 + $0x188] sm:$0xf] %v6371
      %6508 = vst [vmem:[%s116 + $0x18c] sm:$0xf] %v6372
      %6509 = vst [vmem:[%s116 + $0x190] sm:$0xf] %v6373
      %6510 = vst [vmem:[%s116 + $0x194] sm:$0xf] %v6374
      %6511 = vst [vmem:[%s116 + $0x198] sm:$0xf] %v6375
      %6512 = vst [vmem:[%s116 + $0x19c] sm:$0xf] %v6376
      %6513 = vst [vmem:[%s116 + $0x1a0] sm:$0xf] %v6377
      %6514 = vst [vmem:[%s116 + $0x1a4] sm:$0xf] %v6378
      %6515 = vst [vmem:[%s116 + $0x1a8] sm:$0xf] %v6379
      %6516 = vst [vmem:[%s116 + $0x1ac] sm:$0xf] %v6380
      %6517 = vst [vmem:[%s116 + $0x1b0] sm:$0xf] %v6381
      %6518 = vst [vmem:[%s116 + $0x1b4] sm:$0xf] %v6382
      %6519 = vst [vmem:[%s116 + $0x1b8] sm:$0xf] %v6383
      %6520 = vst [vmem:[%s116 + $0x1bc] sm:$0xf] %v6384
      %6521 = vst [vmem:[%s116 + $0x1c0] sm:$0xf] %v6385
      %6522 = vst [vmem:[%s116 + $0x1c4] sm:$0xf] %v6386
      %6523 = vst [vmem:[%s116 + $0x1c8] sm:$0xf] %v6387
      %6524 = vst [vmem:[%s116 + $0x1cc] sm:$0xf] %v6388
      %6525 = vst [vmem:[%s116 + $0x1d0] sm:$0xf] %v6389
      %6526 = vst [vmem:[%s116 + $0x1d4] sm:$0xf] %v6390
      %6527 = vst [vmem:[%s116 + $0x1d8] sm:$0xf] %v6391
      %6528 = vst [vmem:[%s116 + $0x1dc] sm:$0xf] %v6392
      %6529 = vst [vmem:[%s116 + $0x1e0] sm:$0xf] %v6393
      %6530 = vst [vmem:[%s116 + $0x1e4] sm:$0xf] %v6394
      %6531 = vst [vmem:[%s116 + $0x1e8] sm:$0xf] %v6395
      %6532 = vst [vmem:[%s116 + $0x1ec] sm:$0xf] %v6396
      %6533 = vst [vmem:[%s116 + $0x1f0] sm:$0xf] %v6397
      %6534 = vst [vmem:[%s116 + $0x1f4] sm:$0xf] %v6398
      %6535 = vst [vmem:[%s116 + $0x1f8] sm:$0xf] %v6399
      %6536 = vst [vmem:[%s116 + $0x1fc] sm:$0xf] %v6400
      %6537 = vst [vmem:[%s116 + $0x200] sm:$0xf] %v6401
      %6538 = vst [vmem:[%s116 + $0x204] sm:$0xf] %v6402
      %6539 = vst [vmem:[%s116 + $0x208] sm:$0xf] %v6403
      %6540 = vst [vmem:[%s116 + $0x20c] sm:$0xf] %v6404
      %6541 = vst [vmem:[%s116 + $0x210] sm:$0xf] %v6405
      %6542 = vst [vmem:[%s116 + $0x214] sm:$0xf] %v6406
      %6543 = vst [vmem:[%s116 + $0x218] sm:$0xf] %v6407
      %6544 = vst [vmem:[%s116 + $0x21c] sm:$0xf] %v6408
      %p6545 = scmp.lt.s32.totalorder %s12, 1
      %s6546 = scalar_select %p6545, %s12, 1
      %s6547 = smul.addr %s6546, 136
      %s6548 = smul.addr %s6547, 4
      %s6549 = scalar_lea.vmem %s1, %s6548
      // Predicated region
      $region25: #{stem_forward.3} parent=23 // pred_check
        %p6550 = pneg %p56
      $region26: #{stem_forward.3} parent=23 // pred_check_branch
        %6552 = sbr.rel (%p6550) target = $region28
      $region27: #{stem_forward.3} parent=23 // pred_region
        _
      $region28: #{stem_forward.3} parent=23 // pred_fallthru
        _
    $region24: #{stem_forward.3} parent=5 // pred_fallthru
      _
    %p6553 = scmp.le.s32.totalorder 2, %s7
    // Predicated region
    $region29: #{stem_forward.3} parent=5 // pred_check
      %p6554 = pneg %p6553
    $region30: #{stem_forward.3} parent=5 // pred_check_branch
      %6556 = sbr.rel (%p6554) target = $region32
    $region31: #{stem_forward.3} parent=5 // pred_region
      %s6557 = ssub.s32 %s7, 2
      // Predicated region
      $region33: #{stem_forward.3} parent=31 // pred_check
        %p6558 = pneg %p62
      $region34: #{stem_forward.3} parent=31 // pred_check_branch
        %6560 = sbr.rel (%p6558) target = $region36
      $region35: #{stem_forward.3} parent=31 // pred_region
        %p6561 = scmp.lt.s32.totalorder %s13, 1
        %s6562 = scalar_select %p6561, %s13, 1
        %s6563 = smul.addr %s6562, 136
        %s6564 = smul.addr %s6563, 4
        %s6565 = scalar_lea.vmem %s1, %s6564
      $region36: #{stem_forward.3} parent=31 // pred_fallthru
        _
    $region32: #{stem_forward.3} parent=5 // pred_fallthru
      _
  $region6: #{stem_forward.3} parent=0 // loop_footer
    %s11 = sadd.s32 1, %s7
  $region7: #{stem_forward.3} parent=0 // loop_footer_branch
    %6 = sbr.rel target = $region3
  $region8: #{stem_forward.3} parent=0 // loop_exit
    _

</llo_original>
